<compile_context>
chip_gen: v7x
topology: tpu7x:2x2x1
jax: 0.10.0
libtpu: 0.0.40
codegen_flags: <defaults>
</compile_context>

<pallas_src>
import functools

import jax
import jax.numpy as jnp
from jax import lax
from jax.experimental import pallas as pl
from jax.experimental.pallas import tpu as pltpu

CH = 32            # GroupNorm in the module is hard-coded to 32 channels
GROUPS = 8
GROUP_SIZE = CH // GROUPS
EPS = 1e-5
NEG_SLOPE = 0.2


def _residual_block_kernel(x_ref, w_ref, p_ref, g_ref, gt_ref, o_ref,
                           *, B, H, W, F, matmul_dtype):
    # x_ref  : (B, H, W, C)     unpadded NHWC input block (B samples)
    # w_ref  : (F*9*C, F*C)     block-diagonal im2col conv weight (matmul_dtype)
    # p_ref  : (3, F*C)         rows = conv bias / GN gamma / GN beta, F-tiled
    # g_ref  : (F*C, GROUPS)    one-hot lane -> group matrix (f32)
    # gt_ref : (GROUPS, F*C)    its transpose (group -> lane broadcast)
    # o_ref  : (B, Q, F*C)      lane-dense output block, Q = (H // F) * W
    C = CH
    Hc = H // F
    Q = Hc * W
    FC = F * C

    # ---- zero padding (padding=1) fused into the kernel, all in VMEM -------
    x = x_ref[...]                                            # (B, H, W, C)
    zr = jnp.zeros((B, 1, W, C), jnp.float32)
    x = jnp.concatenate([zr, x, zr], axis=1)                  # (B, H+2, W, C)
    zc = jnp.zeros((B, H + 2, 1, C), jnp.float32)
    x_pad = jnp.concatenate([zc, x, zc], axis=2)              # (B, H+2, W+2, C)

    # ---- lane-dense im2col: row-chunk r (rows [r*Hc, (r+1)*Hc)) contributes
    # its nine taps to lanes [r*9C, (r+1)*9C); one MXU matmul against the
    # block-diagonal weight emits the packed (B*Q, F*C) conv output directly.
    taps = [x_pad[:, r * Hc + dy: r * Hc + dy + Hc, dx:dx + W, :]
            for r in range(F) for dy in range(3) for dx in range(3)]
    patch = jnp.concatenate(taps, axis=-1).reshape(B * Q, F * 9 * C)
    # TODO(synk): for very large H*W, split into 3 accumulating matmuls over dy
    # (K = F*3*C) or H-halo spatial tiles to cut the patch's VMEM footprint.

    acc = jnp.dot(patch.astype(matmul_dtype), w_ref[...],
                  preferred_element_type=jnp.float32).reshape(B, Q, FC)

    # Residual input = the centre taps (kept in f32), packed the same way.
    res = jnp.concatenate(taps[4::9], axis=-1).reshape(B, Q, FC)

    # ---- batched GroupNorm(8, C) + affine + residual + LeakyReLU(0.2) ------
    bias = p_ref[0:1, :]                                      # (1, FC)
    gamma = p_ref[1:2, :]
    beta = p_ref[2:3, :]
    gmat = g_ref[...]                                         # (FC, G)
    gmat_t = gt_ref[...]                                      # (G, FC)
    inv_n = 1.0 / float(H * W * GROUP_SIZE)

    xc = acc + bias                                           # (B, Q, FC)
    mean_g = jnp.dot(jnp.sum(xc, axis=1), gmat,
                     preferred_element_type=jnp.float32) * inv_n      # (B, G)
    mean_c = jnp.dot(mean_g, gmat_t,
                     preferred_element_type=jnp.float32)              # (B, FC)
    diff = xc - mean_c[:, None, :]
    var_g = jnp.dot(jnp.sum(diff * diff, axis=1), gmat,
                    preferred_element_type=jnp.float32) * inv_n       # (B, G)
    inv_c = jnp.dot(lax.rsqrt(var_g + EPS), gmat_t,
                    preferred_element_type=jnp.float32)               # (B, FC)

    y = diff * (inv_c[:, None, :] * gamma) + beta + res
    o_ref[...] = jnp.where(y >= 0, y, NEG_SLOPE * y)          # one lane-dense store


def _round_up(x, m):
    return (x + m - 1) // m * m


def _tpu_info():
    """(VMEM budget for block picking, vmem_limit cap, TensorCores per chip)."""
    try:
        kind = jax.devices()[0].device_kind.lower()
    except Exception:
        kind = ""
    if "v7" in kind:                          # 64 MiB VMEM per TC, 2 TCs
        return 20 << 20, 48 << 20, 2
    if "v6" in kind:                          # 128 MiB VMEM, 1 TC
        return 40 << 20, 100 << 20, 1
    if "v5 lite" in kind or "v5e" in kind:    # 16 MiB default scope, 128 MiB phys
        return 8 << 20, 64 << 20, 1
    return 16 << 20, 64 << 20, 1


def _pick_batch_block(N, H, W, C, F, matmul_dtype):
    """Batch block B (divides N) + explicit vmem_limit_bytes from a footprint
    estimate that includes double-buffered I/O blocks, the lane-padded im2col
    patch, the in-kernel padded copies and the f32 temps."""
    budget, cap, n_cores = _tpu_info()
    HW = H * W
    Q = (H // F) * W
    FC = F * C
    mm_bytes = 2 if matmul_dtype == jnp.bfloat16 else 4
    k_pad = _round_up(F * 9 * C, 128)
    per_sample = (
        2 * HW * C * 4                                   # input block (double-buffered)
        + 2 * HW * C * 4                                 # output block (double-buffered)
        + 2 * (H + 2) * _round_up(W + 2, 8) * C * 4      # in-kernel padded copies
        + Q * k_pad * (4 + mm_bytes)                     # im2col patch (f32 build + cast)
        + 5 * HW * C * 4                                 # acc / residual / diff / y temps
    )
    fixed = k_pad * FC * mm_bytes + (3 + 2 * GROUPS) * FC * 4 + (1 << 20)
    b = int(max(1, min(N, 16, (budget - fixed) // max(per_sample, 1))))
    while N % b:
        b -= 1
    if n_cores >= 2 and N >= 2:
        # Keep >= 2 grid steps so "parallel" semantics can shard across both TCs.
        b = min(b, max(1, N // 2))
        while N % b:
            b -= 1
    vmem_limit = int(min(cap, max(32 << 20, 2 * (b * per_sample + fixed))))
    return b, vmem_limit


def residual_block(x_nchw, conv_w, conv_b, gn_gamma, gn_beta,
                   *, matmul_dtype=jnp.bfloat16):
    """x_nchw: (N, 32, H, W) f32. conv_w: (32, 32, 3, 3) PyTorch OIHW layout.
    matmul_dtype=jnp.float32 reproduces the f32 PyTorch conv to <= 2e-4."""
    N, C, H, W = x_nchw.shape
    assert C == CH, "GroupNorm in the module is hard-coded to 32 channels"
    F = 4 if H % 4 == 0 else (2 if H % 2 == 0 else 1)    # lane fold along H
    Hc = H // F
    Q = Hc * W
    FC = F * C
    B, vmem_limit = _pick_batch_block(N, H, W, C, F, matmul_dtype)

    # NCHW -> NHWC (channels on lanes).
    # TODO(synk): if the surrounding network keeps activations in NHWC, this
    # transpose and the output transpose below disappear entirely.
    x_nhwc = jnp.transpose(x_nchw, (0, 2, 3, 1)).astype(jnp.float32)

    # (Cout, Cin, 3, 3) -> im2col (9C, C), then F-way block-diagonal (F*9C, F*C)
    # so the conv matmul emits the lane-packed output directly.
    w_mat = jnp.transpose(conv_w, (2, 3, 1, 0)).reshape(9 * C, C).astype(jnp.float32)
    w_bd = jnp.kron(jnp.eye(F, dtype=jnp.float32), w_mat).astype(matmul_dtype)

    def tile_f(v):
        return jnp.tile(v.reshape(1, C).astype(jnp.float32), (1, F))
    params = jnp.concatenate([tile_f(conv_b), tile_f(gn_gamma), tile_f(gn_beta)],
                             axis=0)                                    # (3, FC)

    # One-hot lane<->group matrices, built once outside the kernel.
    lane_group = (jnp.arange(FC) % C) // GROUP_SIZE
    gmat = (lane_group[:, None] == jnp.arange(GROUPS)[None, :]).astype(jnp.float32)
    gmat_t = jnp.transpose(gmat)

    kernel = functools.partial(_residual_block_kernel, B=B, H=H, W=W, F=F,
                               matmul_dtype=matmul_dtype)

    out = pl.pallas_call(
        kernel,
        out_shape=jax.ShapeDtypeStruct((N, Q, FC), jnp.float32),
        grid_spec=pltpu.PrefetchScalarGridSpec(
            num_scalar_prefetch=0,
            grid=(N // B,),
            in_specs=[
                pl.BlockSpec((B, H, W, C), lambda n: (n, 0, 0, 0)),
                pl.BlockSpec((F * 9 * C, FC), lambda n: (0, 0)),
                pl.BlockSpec((3, FC), lambda n: (0, 0)),
                pl.BlockSpec((FC, GROUPS), lambda n: (0, 0)),
                pl.BlockSpec((GROUPS, FC), lambda n: (0, 0)),
            ],
            out_specs=pl.BlockSpec((B, Q, FC), lambda n: (n, 0, 0)),
        ),
        compiler_params=pltpu.CompilerParams(
            dimension_semantics=("parallel",),
            vmem_limit_bytes=vmem_limit),
    )(x_nhwc, w_bd, params, gmat, gmat_t)

    # Un-scramble lanes + NHWC->NCHW in one fused transpose:
    # out[b, hc*W + w, r*C + c] -> y[b, c, r*Hc + hc, w].
    out = out.reshape(N, Hc, W, F, C)
    return out.transpose(0, 4, 3, 1, 2).reshape(N, C, H, W)


def _reference(x_nchw, conv_w, conv_b, gn_gamma, gn_beta):
    """Pure-JAX reference matching the PyTorch module semantics (NCHW)."""
    y = lax.conv_general_dilated(
        x_nchw, conv_w, window_strides=(1, 1), padding=((1, 1), (1, 1)),
        dimension_numbers=("NCHW", "OIHW", "NCHW"))
    y = y + conv_b.reshape(1, -1, 1, 1)
    N, C, H, W = y.shape
    yg = y.reshape(N, GROUPS, C // GROUPS, H, W)
    mean = yg.mean(axis=(2, 3, 4), keepdims=True)
    var = ((yg - mean) ** 2).mean(axis=(2, 3, 4), keepdims=True)
    yn = ((yg - mean) * lax.rsqrt(var + EPS)).reshape(N, C, H, W)
    yn = yn * gn_gamma.reshape(1, -1, 1, 1) + gn_beta.reshape(1, -1, 1, 1)
    z = yn + x_nchw
    return jnp.where(z >= 0, z, NEG_SLOPE * z)


if __name__ == "__main__":
    key = jax.random.PRNGKey(0)
    k_x, k_w, k_b, k_g, k_be = jax.random.split(key, 5)

    N, C, H, W = 2, CH, 16, 16
    x = jax.random.normal(k_x, (N, C, H, W), dtype=jnp.float32)

    # Deterministic synthetic parameters (shapes match the PyTorch module).
    conv_w = 0.1 * jax.random.normal(k_w, (C, C, 3, 3), dtype=jnp.float32)
    conv_b = 0.1 * jax.random.normal(k_b, (C,), dtype=jnp.float32)
    gn_gamma = 1.0 + 0.1 * jax.random.normal(k_g, (C,), dtype=jnp.float32)
    gn_beta = 0.1 * jax.random.normal(k_be, (C,), dtype=jnp.float32)

    ref = jax.block_until_ready(_reference(x, conv_w, conv_b, gn_gamma, gn_beta))

    # Exact-precision path (f32 MXU operands): matches PyTorch to <= 2e-4.
    out_f32 = jax.block_until_ready(
        residual_block(x, conv_w, conv_b, gn_gamma, gn_beta,
                       matmul_dtype=jnp.float32))
    assert out_f32.shape == (N, C, H, W)
    assert jnp.allclose(out_f32, ref, atol=2e-4, rtol=2e-4), "f32 path mismatch"

    # Default fast path (per perf review): bf16 MXU operands, f32 accumulation.
    out_bf16 = jax.block_until_ready(
        residual_block(x, conv_w, conv_b, gn_gamma, gn_beta))
    assert out_bf16.shape == (N, C, H, W)
    assert jnp.allclose(out_bf16, ref, atol=2e-2, rtol=2e-2), "bf16 path mismatch"

    print("KERNEL_OK")
</pallas_src>

<mosaic_0001>
module attributes {stable_mosaic.version = 11 : i64} {
  func.func @_residual_block_kernel(%arg0: i32, %arg1: memref<2x16x16x32xf32, #tpu.memory_space<vmem>>, %arg2: memref<1152x128xf32, #tpu.memory_space<vmem>>, %arg3: memref<3x128xf32, #tpu.memory_space<vmem>>, %arg4: memref<128x8xf32, #tpu.memory_space<vmem>>, %arg5: memref<8x128xf32, #tpu.memory_space<vmem>>, %arg6: memref<2x64x128xf32, #tpu.memory_space<vmem>>) attributes {dimension_semantics = [#tpu.dimension_semantics<parallel>], iteration_bounds = array<i64: 1>, scalar_prefetch = 0 : i64, scratch_operands = 0 : i64, tpu.core_type = #tpu.core_type<tc>, window_params = [{transform_indices = @transform_0, window_bounds = array<i64: 2, 16, 16, 32>}, {pipeline_mode = #tpu.pipeline_mode<synchronous>, transform_indices = @transform_1, window_bounds = array<i64: 1152, 128>}, {pipeline_mode = #tpu.pipeline_mode<synchronous>, transform_indices = @transform_2, window_bounds = array<i64: 3, 128>}, {pipeline_mode = #tpu.pipeline_mode<synchronous>, transform_indices = @transform_3, window_bounds = array<i64: 128, 8>}, {pipeline_mode = #tpu.pipeline_mode<synchronous>, transform_indices = @transform_4, window_bounds = array<i64: 8, 128>}, {transform_indices = @transform_5, window_bounds = array<i64: 2, 64, 128>}]} {
    %c0 = arith.constant 0 : index
    %c0_0 = arith.constant 0 : index
    %c0_1 = arith.constant 0 : index
    %c0_2 = arith.constant 0 : index
    %0 = vector.load %arg1[%c0, %c0_0, %c0_1, %c0_2] : memref<2x16x16x32xf32, #tpu.memory_space<vmem>>, vector<2x16x16x32xf32>
    %cst = arith.constant 0.000000e+00 : f32
    %1 = vector.broadcast %cst : f32 to vector<2x1x16x32xf32>
    %2 = tpu.concatenate %1, %0, %1 in 1 : vector<2x1x16x32xf32>, vector<2x16x16x32xf32>, vector<2x1x16x32xf32> -> vector<2x18x16x32xf32>
    %cst_3 = arith.constant 0.000000e+00 : f32
    %3 = vector.broadcast %cst_3 : f32 to vector<2x18x1x32xf32>
    %4 = tpu.concatenate %3, %2, %3 in 2 : vector<2x18x1x32xf32>, vector<2x18x16x32xf32>, vector<2x18x1x32xf32> -> vector<2x18x18x32xf32>
    %5 = vector.extract_strided_slice %4 {offsets = [0, 0, 0, 0], sizes = [2, 4, 16, 32], strides = [1, 1, 1, 1]} : vector<2x18x18x32xf32> to vector<2x4x16x32xf32>
    %6 = vector.extract_strided_slice %4 {offsets = [0, 0, 1, 0], sizes = [2, 4, 16, 32], strides = [1, 1, 1, 1]} : vector<2x18x18x32xf32> to vector<2x4x16x32xf32>
    %7 = vector.extract_strided_slice %4 {offsets = [0, 0, 2, 0], sizes = [2, 4, 16, 32], strides = [1, 1, 1, 1]} : vector<2x18x18x32xf32> to vector<2x4x16x32xf32>
    %8 = vector.extract_strided_slice %4 {offsets = [0, 1, 0, 0], sizes = [2, 4, 16, 32], strides = [1, 1, 1, 1]} : vector<2x18x18x32xf32> to vector<2x4x16x32xf32>
    %9 = vector.extract_strided_slice %4 {offsets = [0, 1, 1, 0], sizes = [2, 4, 16, 32], strides = [1, 1, 1, 1]} : vector<2x18x18x32xf32> to vector<2x4x16x32xf32>
    %10 = vector.extract_strided_slice %4 {offsets = [0, 1, 2, 0], sizes = [2, 4, 16, 32], strides = [1, 1, 1, 1]} : vector<2x18x18x32xf32> to vector<2x4x16x32xf32>
    %11 = vector.extract_strided_slice %4 {offsets = [0, 2, 0, 0], sizes = [2, 4, 16, 32], strides = [1, 1, 1, 1]} : vector<2x18x18x32xf32> to vector<2x4x16x32xf32>
    %12 = vector.extract_strided_slice %4 {offsets = [0, 2, 1, 0], sizes = [2, 4, 16, 32], strides = [1, 1, 1, 1]} : vector<2x18x18x32xf32> to vector<2x4x16x32xf32>
    %13 = vector.extract_strided_slice %4 {offsets = [0, 2, 2, 0], sizes = [2, 4, 16, 32], strides = [1, 1, 1, 1]} : vector<2x18x18x32xf32> to vector<2x4x16x32xf32>
    %14 = vector.extract_strided_slice %4 {offsets = [0, 4, 0, 0], sizes = [2, 4, 16, 32], strides = [1, 1, 1, 1]} : vector<2x18x18x32xf32> to vector<2x4x16x32xf32>
    %15 = vector.extract_strided_slice %4 {offsets = [0, 4, 1, 0], sizes = [2, 4, 16, 32], strides = [1, 1, 1, 1]} : vector<2x18x18x32xf32> to vector<2x4x16x32xf32>
    %16 = vector.extract_strided_slice %4 {offsets = [0, 4, 2, 0], sizes = [2, 4, 16, 32], strides = [1, 1, 1, 1]} : vector<2x18x18x32xf32> to vector<2x4x16x32xf32>
    %17 = vector.extract_strided_slice %4 {offsets = [0, 5, 0, 0], sizes = [2, 4, 16, 32], strides = [1, 1, 1, 1]} : vector<2x18x18x32xf32> to vector<2x4x16x32xf32>
    %18 = vector.extract_strided_slice %4 {offsets = [0, 5, 1, 0], sizes = [2, 4, 16, 32], strides = [1, 1, 1, 1]} : vector<2x18x18x32xf32> to vector<2x4x16x32xf32>
    %19 = vector.extract_strided_slice %4 {offsets = [0, 5, 2, 0], sizes = [2, 4, 16, 32], strides = [1, 1, 1, 1]} : vector<2x18x18x32xf32> to vector<2x4x16x32xf32>
    %20 = vector.extract_strided_slice %4 {offsets = [0, 6, 0, 0], sizes = [2, 4, 16, 32], strides = [1, 1, 1, 1]} : vector<2x18x18x32xf32> to vector<2x4x16x32xf32>
    %21 = vector.extract_strided_slice %4 {offsets = [0, 6, 1, 0], sizes = [2, 4, 16, 32], strides = [1, 1, 1, 1]} : vector<2x18x18x32xf32> to vector<2x4x16x32xf32>
    %22 = vector.extract_strided_slice %4 {offsets = [0, 6, 2, 0], sizes = [2, 4, 16, 32], strides = [1, 1, 1, 1]} : vector<2x18x18x32xf32> to vector<2x4x16x32xf32>
    %23 = vector.extract_strided_slice %4 {offsets = [0, 8, 0, 0], sizes = [2, 4, 16, 32], strides = [1, 1, 1, 1]} : vector<2x18x18x32xf32> to vector<2x4x16x32xf32>
    %24 = vector.extract_strided_slice %4 {offsets = [0, 8, 1, 0], sizes = [2, 4, 16, 32], strides = [1, 1, 1, 1]} : vector<2x18x18x32xf32> to vector<2x4x16x32xf32>
    %25 = vector.extract_strided_slice %4 {offsets = [0, 8, 2, 0], sizes = [2, 4, 16, 32], strides = [1, 1, 1, 1]} : vector<2x18x18x32xf32> to vector<2x4x16x32xf32>
    %26 = vector.extract_strided_slice %4 {offsets = [0, 9, 0, 0], sizes = [2, 4, 16, 32], strides = [1, 1, 1, 1]} : vector<2x18x18x32xf32> to vector<2x4x16x32xf32>
    %27 = vector.extract_strided_slice %4 {offsets = [0, 9, 1, 0], sizes = [2, 4, 16, 32], strides = [1, 1, 1, 1]} : vector<2x18x18x32xf32> to vector<2x4x16x32xf32>
    %28 = vector.extract_strided_slice %4 {offsets = [0, 9, 2, 0], sizes = [2, 4, 16, 32], strides = [1, 1, 1, 1]} : vector<2x18x18x32xf32> to vector<2x4x16x32xf32>
    %29 = vector.extract_strided_slice %4 {offsets = [0, 10, 0, 0], sizes = [2, 4, 16, 32], strides = [1, 1, 1, 1]} : vector<2x18x18x32xf32> to vector<2x4x16x32xf32>
    %30 = vector.extract_strided_slice %4 {offsets = [0, 10, 1, 0], sizes = [2, 4, 16, 32], strides = [1, 1, 1, 1]} : vector<2x18x18x32xf32> to vector<2x4x16x32xf32>
    %31 = vector.extract_strided_slice %4 {offsets = [0, 10, 2, 0], sizes = [2, 4, 16, 32], strides = [1, 1, 1, 1]} : vector<2x18x18x32xf32> to vector<2x4x16x32xf32>
    %32 = vector.extract_strided_slice %4 {offsets = [0, 12, 0, 0], sizes = [2, 4, 16, 32], strides = [1, 1, 1, 1]} : vector<2x18x18x32xf32> to vector<2x4x16x32xf32>
    %33 = vector.extract_strided_slice %4 {offsets = [0, 12, 1, 0], sizes = [2, 4, 16, 32], strides = [1, 1, 1, 1]} : vector<2x18x18x32xf32> to vector<2x4x16x32xf32>
    %34 = vector.extract_strided_slice %4 {offsets = [0, 12, 2, 0], sizes = [2, 4, 16, 32], strides = [1, 1, 1, 1]} : vector<2x18x18x32xf32> to vector<2x4x16x32xf32>
    %35 = vector.extract_strided_slice %4 {offsets = [0, 13, 0, 0], sizes = [2, 4, 16, 32], strides = [1, 1, 1, 1]} : vector<2x18x18x32xf32> to vector<2x4x16x32xf32>
    %36 = vector.extract_strided_slice %4 {offsets = [0, 13, 1, 0], sizes = [2, 4, 16, 32], strides = [1, 1, 1, 1]} : vector<2x18x18x32xf32> to vector<2x4x16x32xf32>
    %37 = vector.extract_strided_slice %4 {offsets = [0, 13, 2, 0], sizes = [2, 4, 16, 32], strides = [1, 1, 1, 1]} : vector<2x18x18x32xf32> to vector<2x4x16x32xf32>
    %38 = vector.extract_strided_slice %4 {offsets = [0, 14, 0, 0], sizes = [2, 4, 16, 32], strides = [1, 1, 1, 1]} : vector<2x18x18x32xf32> to vector<2x4x16x32xf32>
    %39 = vector.extract_strided_slice %4 {offsets = [0, 14, 1, 0], sizes = [2, 4, 16, 32], strides = [1, 1, 1, 1]} : vector<2x18x18x32xf32> to vector<2x4x16x32xf32>
    %40 = vector.extract_strided_slice %4 {offsets = [0, 14, 2, 0], sizes = [2, 4, 16, 32], strides = [1, 1, 1, 1]} : vector<2x18x18x32xf32> to vector<2x4x16x32xf32>
    %41 = tpu.concatenate %5, %6, %7, %8, %9, %10, %11, %12, %13, %14, %15, %16, %17, %18, %19, %20 in 3 : vector<2x4x16x32xf32>, vector<2x4x16x32xf32>, vector<2x4x16x32xf32>, vector<2x4x16x32xf32>, vector<2x4x16x32xf32>, vector<2x4x16x32xf32>, vector<2x4x16x32xf32>, vector<2x4x16x32xf32>, vector<2x4x16x32xf32>, vector<2x4x16x32xf32>, vector<2x4x16x32xf32>, vector<2x4x16x32xf32>, vector<2x4x16x32xf32>, vector<2x4x16x32xf32>, vector<2x4x16x32xf32>, vector<2x4x16x32xf32> -> vector<2x4x16x512xf32>
    %42 = tpu.concatenate %21, %22, %23, %24, %25, %26, %27, %28, %29, %30, %31, %32, %33, %34, %35, %36 in 3 : vector<2x4x16x32xf32>, vector<2x4x16x32xf32>, vector<2x4x16x32xf32>, vector<2x4x16x32xf32>, vector<2x4x16x32xf32>, vector<2x4x16x32xf32>, vector<2x4x16x32xf32>, vector<2x4x16x32xf32>, vector<2x4x16x32xf32>, vector<2x4x16x32xf32>, vector<2x4x16x32xf32>, vector<2x4x16x32xf32>, vector<2x4x16x32xf32>, vector<2x4x16x32xf32>, vector<2x4x16x32xf32>, vector<2x4x16x32xf32> -> vector<2x4x16x512xf32>
    %43 = tpu.concatenate %37, %38, %39, %40 in 3 : vector<2x4x16x32xf32>, vector<2x4x16x32xf32>, vector<2x4x16x32xf32>, vector<2x4x16x32xf32> -> vector<2x4x16x128xf32>
    %44 = tpu.concatenate %41, %42, %43 in 3 : vector<2x4x16x512xf32>, vector<2x4x16x512xf32>, vector<2x4x16x128xf32> -> vector<2x4x16x1152xf32>
    %45 = vector.shape_cast %44 : vector<2x4x16x1152xf32> to vector<128x1152xf32>
    %c0_4 = arith.constant 0 : index
    %c0_5 = arith.constant 0 : index
    %46 = vector.load %arg2[%c0_4, %c0_5] : memref<1152x128xf32, #tpu.memory_space<vmem>>, vector<1152x128xf32>
    %cst_6 = arith.constant dense<0.000000e+00> : vector<128x128xf32>
    %47 = tpu.matmul %45, %46, %cst_6 {dimension_numbers = #tpu.dot_dimension_numbers<[1], [0], [0], [1], [0, 0, 1, 1], [], []>} : vector<128x1152xf32>, vector<1152x128xf32>, vector<128x128xf32> -> vector<128x128xf32>
    %48 = vector.shape_cast %47 : vector<128x128xf32> to vector<2x64x128xf32>
    %49 = tpu.concatenate %9, %18, %27, %36 in 3 : vector<2x4x16x32xf32>, vector<2x4x16x32xf32>, vector<2x4x16x32xf32>, vector<2x4x16x32xf32> -> vector<2x4x16x128xf32>
    %50 = vector.shape_cast %49 : vector<2x4x16x128xf32> to vector<2x64x128xf32>
    %c0_7 = arith.constant 0 : index
    %c0_8 = arith.constant 0 : index
    %51 = vector.load %arg3[%c0_7, %c0_8] : memref<3x128xf32, #tpu.memory_space<vmem>>, vector<1x128xf32>
    %c1 = arith.constant 1 : index
    %c0_9 = arith.constant 0 : index
    %52 = vector.load %arg3[%c1, %c0_9] : memref<3x128xf32, #tpu.memory_space<vmem>>, vector<1x128xf32>
    %c2 = arith.constant 2 : index
    %c0_10 = arith.constant 0 : index
    %53 = vector.load %arg3[%c2, %c0_10] : memref<3x128xf32, #tpu.memory_space<vmem>>, vector<1x128xf32>
    %c0_11 = arith.constant 0 : index
    %c0_12 = arith.constant 0 : index
    %54 = vector.load %arg4[%c0_11, %c0_12] : memref<128x8xf32, #tpu.memory_space<vmem>>, vector<128x8xf32>
    %c0_13 = arith.constant 0 : index
    %c0_14 = arith.constant 0 : index
    %55 = vector.load %arg5[%c0_13, %c0_14] : memref<8x128xf32, #tpu.memory_space<vmem>>, vector<8x128xf32>
    %56 = vector.shape_cast %51 : vector<1x128xf32> to vector<1x1x128xf32>
    %57 = vector.broadcast %56 : vector<1x1x128xf32> to vector<2x64x128xf32>
    %58 = arith.addf %48, %57 : vector<2x64x128xf32>
    %cst_15 = arith.constant dense<0.000000e+00> : vector<2x128xf32>
    %59 = vector.multi_reduction <add>, %58, %cst_15 [1] : vector<2x64x128xf32> to vector<2x128xf32>
    %cst_16 = arith.constant dense<0.000000e+00> : vector<2x8xf32>
    %60 = tpu.matmul %59, %54, %cst_16 {dimension_numbers = #tpu.dot_dimension_numbers<[1], [0], [0], [1], [0, 0, 1, 1], [], []>} : vector<2x128xf32>, vector<128x8xf32>, vector<2x8xf32> -> vector<2x8xf32>
    %cst_17 = arith.constant 9.765625E-4 : f32
    %61 = vector.broadcast %cst_17 : f32 to vector<2x8xf32>
    %62 = arith.mulf %60, %61 : vector<2x8xf32>
    %cst_18 = arith.constant dense<0.000000e+00> : vector<2x128xf32>
    %63 = tpu.matmul %62, %55, %cst_18 {dimension_numbers = #tpu.dot_dimension_numbers<[1], [0], [0], [1], [0, 0, 1, 1], [], []>} : vector<2x8xf32>, vector<8x128xf32>, vector<2x128xf32> -> vector<2x128xf32>
    %64 = vector.shape_cast %63 : vector<2x128xf32> to vector<2x1x128xf32>
    %65 = vector.broadcast %64 : vector<2x1x128xf32> to vector<2x64x128xf32>
    %66 = arith.subf %58, %65 : vector<2x64x128xf32>
    %67 = arith.mulf %66, %66 : vector<2x64x128xf32>
    %cst_19 = arith.constant dense<0.000000e+00> : vector<2x128xf32>
    %68 = vector.multi_reduction <add>, %67, %cst_19 [1] : vector<2x64x128xf32> to vector<2x128xf32>
    %cst_20 = arith.constant dense<0.000000e+00> : vector<2x8xf32>
    %69 = tpu.matmul %68, %54, %cst_20 {dimension_numbers = #tpu.dot_dimension_numbers<[1], [0], [0], [1], [0, 0, 1, 1], [], []>} : vector<2x128xf32>, vector<128x8xf32>, vector<2x8xf32> -> vector<2x8xf32>
    %cst_21 = arith.constant 9.765625E-4 : f32
    %70 = vector.broadcast %cst_21 : f32 to vector<2x8xf32>
    %71 = arith.mulf %69, %70 : vector<2x8xf32>
    %cst_22 = arith.constant 9.99999974E-6 : f32
    %72 = vector.broadcast %cst_22 : f32 to vector<2x8xf32>
    %73 = arith.addf %71, %72 : vector<2x8xf32>
    %74 = math.rsqrt %73 : vector<2x8xf32>
    %cst_23 = arith.constant dense<0.000000e+00> : vector<2x128xf32>
    %75 = tpu.matmul %74, %55, %cst_23 {dimension_numbers = #tpu.dot_dimension_numbers<[1], [0], [0], [1], [0, 0, 1, 1], [], []>} : vector<2x8xf32>, vector<8x128xf32>, vector<2x128xf32> -> vector<2x128xf32>
    %76 = vector.shape_cast %75 : vector<2x128xf32> to vector<2x1x128xf32>
    %77 = vector.shape_cast %52 : vector<1x128xf32> to vector<1x1x128xf32>
    %78 = vector.broadcast %77 : vector<1x1x128xf32> to vector<2x1x128xf32>
    %79 = arith.mulf %76, %78 : vector<2x1x128xf32>
    %80 = vector.broadcast %79 : vector<2x1x128xf32> to vector<2x64x128xf32>
    %81 = arith.mulf %66, %80 : vector<2x64x128xf32>
    %82 = vector.shape_cast %53 : vector<1x128xf32> to vector<1x1x128xf32>
    %83 = vector.broadcast %82 : vector<1x1x128xf32> to vector<2x64x128xf32>
    %84 = arith.addf %81, %83 : vector<2x64x128xf32>
    %85 = arith.addf %84, %50 : vector<2x64x128xf32>
    %cst_24 = arith.constant 0.000000e+00 : f32
    %86 = vector.broadcast %cst_24 : f32 to vector<2x64x128xf32>
    %87 = arith.cmpf oge, %85, %86 : vector<2x64x128xf32>
    %cst_25 = arith.constant 2.000000e-01 : f32
    %88 = vector.broadcast %cst_25 : f32 to vector<2x64x128xf32>
    %89 = arith.mulf %88, %85 : vector<2x64x128xf32>
    %90 = arith.select %87, %85, %89 : vector<2x64x128xi1>, vector<2x64x128xf32>
    %c0_26 = arith.constant 0 : index
    %c0_27 = arith.constant 0 : index
    %c0_28 = arith.constant 0 : index
    %91 = vector.load %arg6[%c0_26, %c0_27, %c0_28] : memref<2x64x128xf32, #tpu.memory_space<vmem>>, vector<2x64x128xf32>
    tpu.vector_store %arg6[%c0_26, %c0_27, %c0_28], %90 {strides = array<i32>} : memref<2x64x128xf32, #tpu.memory_space<vmem>>, vector<2x64x128xf32>,
    return
  }
  func.func @transform_0(%arg0: i32) -> (i32, i32, i32, i32) {
    %c0_i32 = arith.constant 0 : i32
    %c0_i32_0 = arith.constant 0 : i32
    %c0_i32_1 = arith.constant 0 : i32
    %c0_i32_2 = arith.constant 0 : i32
    return %arg0, %c0_i32, %c0_i32_0, %c0_i32_1 : i32, i32, i32, i32
  }
  func.func @transform_1(%arg0: i32) -> (i32, i32) {
    %c0_i32 = arith.constant 0 : i32
    %c0_i32_0 = arith.constant 0 : i32
    %c0_i32_1 = arith.constant 0 : i32
    return %c0_i32, %c0_i32_0 : i32, i32
  }
  func.func @transform_2(%arg0: i32) -> (i32, i32) {
    %c0_i32 = arith.constant 0 : i32
    %c0_i32_0 = arith.constant 0 : i32
    %c0_i32_1 = arith.constant 0 : i32
    return %c0_i32, %c0_i32_0 : i32, i32
  }
  func.func @transform_3(%arg0: i32) -> (i32, i32) {
    %c0_i32 = arith.constant 0 : i32
    %c0_i32_0 = arith.constant 0 : i32
    %c0_i32_1 = arith.constant 0 : i32
    return %c0_i32, %c0_i32_0 : i32, i32
  }
  func.func @transform_4(%arg0: i32) -> (i32, i32) {
    %c0_i32 = arith.constant 0 : i32
    %c0_i32_0 = arith.constant 0 : i32
    %c0_i32_1 = arith.constant 0 : i32
    return %c0_i32, %c0_i32_0 : i32, i32
  }
  func.func @transform_5(%arg0: i32) -> (i32, i32, i32) {
    %c0_i32 = arith.constant 0 : i32
    %c0_i32_0 = arith.constant 0 : i32
    %c0_i32_1 = arith.constant 0 : i32
    return %arg0, %c0_i32, %c0_i32_0 : i32, i32, i32
  }
}

</mosaic_0001>

<llo_original>
// kernel: tpu_custom_call.1
$region0: #{tpu_custom_call.1}
  #allocation0 [shape = 'u32[]', space=smem, size = 0x4, offset = 0x4, fixed_abs, tag = 'smem constant byte address 0x4 - core index']
  #allocation1 [shape = 'u32[144,128]{1,0:T(1,128)}', space=vmem, size = 0x12000, scoped, tag = 'internal scratch']
  %s0 = inlined_call_operand.hbm [shape: f32[2,16,16,32], index: 0, kind: input, shape index: {}]
  %s1 = inlined_call_operand.hbm [shape: f32[1152,128], index: 1, kind: input, shape index: {}]
  %s2 = inlined_call_operand.vmem [shape: f32[3,128], index: 2, kind: input, shape index: {}]
  %s3 = inlined_call_operand.vmem [shape: f32[128,8], index: 3, kind: input, shape index: {}]
  %s4 = inlined_call_operand.vmem [shape: f32[8,128], index: 4, kind: input, shape index: {}]
  %s5 = inlined_call_operand.hbm [shape: f32[2,64,128], index: 5, kind: output, shape index: {}]
  %s6 = sld [smem:[#allocation0]]
  $region38: #{tpu_custom_call.1} parent=0
    _
  %s8 = ssub.s32 1, %s6
  %s9 = scalar_select 0, %s8, %s6
  $region1: #{tpu_custom_call.1} parent=0
    #allocation2 [shape = 'u8[262144]{0}', space=vmem, size = 0x40000, scoped, tag = 'input window, operand 0, single buffered']
    #allocation3 [shape = 's32[1]{0}', space=sflag, size = 0x4, scoped, tag = 'scoped memory for tpu_custom_call.1']
    #allocation4 [shape = 's32[1]{0}', space=sflag, size = 0x4, scoped, tag = 'scoped memory for tpu_custom_call.1']
    #allocation5 [shape = 'u8[589824]{0}', space=vmem, size = 0x90000, scoped, tag = 'input window, operand 1, single buffered']
    #allocation6 [shape = 's32[1]{0}', space=sflag, size = 0x4, scoped, tag = 'scoped memory for tpu_custom_call.1']
    #allocation7 [shape = 'u8[65536]{0}', space=vmem, size = 0x10000, scoped, tag = 'output window, operand 0, single buffered']
    %10 = vsyncpa [#allocation3], 0
    %11 = vsyncpa [#allocation6], 0
    %12 = vsyncpa [#allocation4], 0
    // Predicated region
    $region2: #{tpu_custom_call.1} parent=1 // pred_check
      _
    $region3: #{tpu_custom_call.1} parent=1 // pred_check_branch
      %14 = sbr.rel (0) target = $region5
    $region4: #{tpu_custom_call.1} parent=1 // pred_region
      %s16 = ssub.s32 8192, 8192
      %17 = vsyncadd [#allocation3], %s16
      %s18 = sshll.u32 [#allocation2], 4
      %s19 = int_to_ptr.vmem [resolvable:$true] %s18
      %24 = dma.hbm_to_vmem [thread:$0]  %s0, 8192, %s19, [#allocation3], 128, 128, 8
    $region5: #{tpu_custom_call.1} parent=1 // pred_fallthru
      _
    // Predicated region
    $region6: #{tpu_custom_call.1} parent=1 // pred_check
      _
    $region7: #{tpu_custom_call.1} parent=1 // pred_check_branch
      %26 = sbr.rel (0) target = $region9
    $region8: #{tpu_custom_call.1} parent=1 // pred_region
      %s28 = ssub.s32 18432, 18432
      %29 = vsyncadd [#allocation6], %s28
      %s30 = sshll.u32 [#allocation5], 4
      %s31 = int_to_ptr.vmem [resolvable:$true] %s30
      %36 = dma.hbm_to_vmem [thread:$0]  %s1, 18432, %s31, [#allocation6], 128, 128, 8
    $region9: #{tpu_custom_call.1} parent=1 // pred_fallthru
      _
    // Predicated region
    $region10: #{tpu_custom_call.1} parent=1 // pred_check
      _
    $region11: #{tpu_custom_call.1} parent=1 // pred_check_branch
      %38 = sbr.rel (0) target = $region13
    $region12: #{tpu_custom_call.1} parent=1 // pred_region
      _
    $region13: #{tpu_custom_call.1} parent=1 // pred_fallthru
      _
    // Predicated region
    $region14: #{tpu_custom_call.1} parent=1 // pred_check
      _
    $region15: #{tpu_custom_call.1} parent=1 // pred_check_branch
      %40 = sbr.rel (0) target = $region17
    $region16: #{tpu_custom_call.1} parent=1 // pred_region
      _
    $region17: #{tpu_custom_call.1} parent=1 // pred_fallthru
      _
    // Predicated region
    $region18: #{tpu_custom_call.1} parent=1 // pred_check
      _
    $region19: #{tpu_custom_call.1} parent=1 // pred_check_branch
      %42 = sbr.rel (0) target = $region21
    $region20: #{tpu_custom_call.1} parent=1 // pred_region
      _
    $region21: #{tpu_custom_call.1} parent=1 // pred_fallthru
      _
    // Predicated region
    $region22: #{tpu_custom_call.1} parent=1 // pred_check
      _
    $region23: #{tpu_custom_call.1} parent=1 // pred_check_branch
      %44 = sbr.rel (0) target = $region25
    $region24: #{tpu_custom_call.1} parent=1 // pred_region
      %45 = dma.done [#allocation3], 8192
    $region25: #{tpu_custom_call.1} parent=1 // pred_fallthru
      _
    // Predicated region
    $region26: #{tpu_custom_call.1} parent=1 // pred_check
      _
    $region27: #{tpu_custom_call.1} parent=1 // pred_check_branch
      %47 = sbr.rel (0) target = $region29
    $region28: #{tpu_custom_call.1} parent=1 // pred_region
      %48 = dma.done [#allocation6], 18432
    $region29: #{tpu_custom_call.1} parent=1 // pred_fallthru
      _
    %v49 = vld [vmem:[#allocation2] sm:$0xff]
    %v50 = vld [vmem:[#allocation2 + $0x8] sm:$0xff]
    %v51 = vld [vmem:[#allocation2 + $0x10] sm:$0xff]
    %v52 = vld [vmem:[#allocation2 + $0x18] sm:$0xff]
    %v53 = vld [vmem:[#allocation2 + $0x20] sm:$0xff]
    %v54 = vld [vmem:[#allocation2 + $0x28] sm:$0xff]
    %v55 = vld [vmem:[#allocation2 + $0x30] sm:$0xff]
    %v56 = vld [vmem:[#allocation2 + $0x38] sm:$0xff]
    %v57 = vld [vmem:[#allocation2 + $0x40] sm:$0xff]
    %v58 = vld [vmem:[#allocation2 + $0x48] sm:$0xff]
    %v59 = vld [vmem:[#allocation2 + $0x50] sm:$0xff]
    %v60 = vld [vmem:[#allocation2 + $0x58] sm:$0xff]
    %v61 = vld [vmem:[#allocation2 + $0x60] sm:$0xff]
    %v62 = vld [vmem:[#allocation2 + $0x68] sm:$0xff]
    %v63 = vld [vmem:[#allocation2 + $0x70] sm:$0xff]
    %v64 = vld [vmem:[#allocation2 + $0x78] sm:$0xff]
    %v65 = vld [vmem:[#allocation2 + $0x80] sm:$0xff]
    %v66 = vld [vmem:[#allocation2 + $0x88] sm:$0xff]
    %v67 = vld [vmem:[#allocation2 + $0x90] sm:$0xff]
    %v68 = vld [vmem:[#allocation2 + $0x98] sm:$0xff]
    %v69 = vld [vmem:[#allocation2 + $0xa0] sm:$0xff]
    %v70 = vld [vmem:[#allocation2 + $0xa8] sm:$0xff]
    %v71 = vld [vmem:[#allocation2 + $0xb0] sm:$0xff]
    %v72 = vld [vmem:[#allocation2 + $0xb8] sm:$0xff]
    %v73 = vld [vmem:[#allocation2 + $0xc0] sm:$0xff]
    %v74 = vld [vmem:[#allocation2 + $0xc8] sm:$0xff]
    %v75 = vld [vmem:[#allocation2 + $0xd0] sm:$0xff]
    %v76 = vld [vmem:[#allocation2 + $0xd8] sm:$0xff]
    %v77 = vld [vmem:[#allocation2 + $0xe0] sm:$0xff]
    %v78 = vld [vmem:[#allocation2 + $0xe8] sm:$0xff]
    %v79 = vld [vmem:[#allocation2 + $0xf0] sm:$0xff]
    %v80 = vld [vmem:[#allocation2 + $0xf8] sm:$0xff]
    %v81 = vld [vmem:[#allocation2 + $0x100] sm:$0xff]
    %v82 = vld [vmem:[#allocation2 + $0x108] sm:$0xff]
    %v83 = vld [vmem:[#allocation2 + $0x110] sm:$0xff]
    %v84 = vld [vmem:[#allocation2 + $0x118] sm:$0xff]
    %v85 = vld [vmem:[#allocation2 + $0x120] sm:$0xff]
    %v86 = vld [vmem:[#allocation2 + $0x128] sm:$0xff]
    %v87 = vld [vmem:[#allocation2 + $0x130] sm:$0xff]
    %v88 = vld [vmem:[#allocation2 + $0x138] sm:$0xff]
    %v89 = vld [vmem:[#allocation2 + $0x140] sm:$0xff]
    %v90 = vld [vmem:[#allocation2 + $0x148] sm:$0xff]
    %v91 = vld [vmem:[#allocation2 + $0x150] sm:$0xff]
    %v92 = vld [vmem:[#allocation2 + $0x158] sm:$0xff]
    %v93 = vld [vmem:[#allocation2 + $0x160] sm:$0xff]
    %v94 = vld [vmem:[#allocation2 + $0x168] sm:$0xff]
    %v95 = vld [vmem:[#allocation2 + $0x170] sm:$0xff]
    %v96 = vld [vmem:[#allocation2 + $0x178] sm:$0xff]
    %v97 = vld [vmem:[#allocation2 + $0x180] sm:$0xff]
    %v98 = vld [vmem:[#allocation2 + $0x188] sm:$0xff]
    %v99 = vld [vmem:[#allocation2 + $0x190] sm:$0xff]
    %v100 = vld [vmem:[#allocation2 + $0x198] sm:$0xff]
    %v101 = vld [vmem:[#allocation2 + $0x1a0] sm:$0xff]
    %v102 = vld [vmem:[#allocation2 + $0x1a8] sm:$0xff]
    %v103 = vld [vmem:[#allocation2 + $0x1b0] sm:$0xff]
    %v104 = vld [vmem:[#allocation2 + $0x1b8] sm:$0xff]
    %v105 = vld [vmem:[#allocation2 + $0x1c0] sm:$0xff]
    %v106 = vld [vmem:[#allocation2 + $0x1c8] sm:$0xff]
    %v107 = vld [vmem:[#allocation2 + $0x1d0] sm:$0xff]
    %v108 = vld [vmem:[#allocation2 + $0x1d8] sm:$0xff]
    %v109 = vld [vmem:[#allocation2 + $0x1e0] sm:$0xff]
    %v110 = vld [vmem:[#allocation2 + $0x1e8] sm:$0xff]
    %v111 = vld [vmem:[#allocation2 + $0x1f0] sm:$0xff]
    %v112 = vld [vmem:[#allocation2 + $0x1f8] sm:$0xff]
    %vm178 = vcmask 1040384
    %v179 = vrot.slane 0.0, 7
    %v180 = vsel %vm178, %v179, %v179
    %v181 = vrot.slane %v49, 7
    %v182 = vrot.slane %v50, 7
    %v183 = vsel %vm178, %v181, %v182
    %v184 = vrot.slane %v51, 7
    %v185 = vrot.slane %v52, 7
    %v186 = vsel %vm178, %v184, %v185
    %v187 = vrot.slane %v53, 7
    %v188 = vrot.slane %v54, 7
    %v189 = vsel %vm178, %v187, %v188
    %v190 = vrot.slane %v55, 7
    %v191 = vrot.slane %v56, 7
    %v192 = vsel %vm178, %v190, %v191
    %v193 = vrot.slane %v57, 7
    %v194 = vrot.slane %v58, 7
    %v195 = vsel %vm178, %v193, %v194
    %v196 = vrot.slane %v59, 7
    %v197 = vrot.slane %v60, 7
    %v198 = vsel %vm178, %v196, %v197
    %v199 = vrot.slane %v61, 7
    %v200 = vrot.slane %v62, 7
    %v201 = vsel %vm178, %v199, %v200
    %v202 = vrot.slane %v63, 7
    %v203 = vrot.slane %v64, 7
    %v204 = vsel %vm178, %v202, %v203
    %v205 = vrot.slane %v65, 7
    %v206 = vrot.slane %v66, 7
    %v207 = vsel %vm178, %v205, %v206
    %v208 = vrot.slane %v67, 7
    %v209 = vrot.slane %v68, 7
    %v210 = vsel %vm178, %v208, %v209
    %v211 = vrot.slane %v69, 7
    %v212 = vrot.slane %v70, 7
    %v213 = vsel %vm178, %v211, %v212
    %v214 = vrot.slane %v71, 7
    %v215 = vrot.slane %v72, 7
    %v216 = vsel %vm178, %v214, %v215
    %v217 = vrot.slane %v73, 7
    %v218 = vrot.slane %v74, 7
    %v219 = vsel %vm178, %v217, %v218
    %v220 = vrot.slane %v75, 7
    %v221 = vrot.slane %v76, 7
    %v222 = vsel %vm178, %v220, %v221
    %v223 = vrot.slane %v77, 7
    %v224 = vrot.slane %v78, 7
    %v225 = vsel %vm178, %v223, %v224
    %v226 = vrot.slane %v79, 7
    %v227 = vrot.slane %v80, 7
    %v228 = vsel %vm178, %v226, %v227
    %v229 = vrot.slane %v81, 7
    %v230 = vrot.slane %v82, 7
    %v231 = vsel %vm178, %v229, %v230
    %v232 = vrot.slane %v83, 7
    %v233 = vrot.slane %v84, 7
    %v234 = vsel %vm178, %v232, %v233
    %v235 = vrot.slane %v85, 7
    %v236 = vrot.slane %v86, 7
    %v237 = vsel %vm178, %v235, %v236
    %v238 = vrot.slane %v87, 7
    %v239 = vrot.slane %v88, 7
    %v240 = vsel %vm178, %v238, %v239
    %v241 = vrot.slane %v89, 7
    %v242 = vrot.slane %v90, 7
    %v243 = vsel %vm178, %v241, %v242
    %v244 = vrot.slane %v91, 7
    %v245 = vrot.slane %v92, 7
    %v246 = vsel %vm178, %v244, %v245
    %v247 = vrot.slane %v93, 7
    %v248 = vrot.slane %v94, 7
    %v249 = vsel %vm178, %v247, %v248
    %v250 = vrot.slane %v95, 7
    %v251 = vrot.slane %v96, 7
    %v252 = vsel %vm178, %v250, %v251
    %v253 = vrot.slane %v97, 7
    %v254 = vrot.slane %v98, 7
    %v255 = vsel %vm178, %v253, %v254
    %v256 = vrot.slane %v99, 7
    %v257 = vrot.slane %v100, 7
    %v258 = vsel %vm178, %v256, %v257
    %v259 = vrot.slane %v101, 7
    %v260 = vrot.slane %v102, 7
    %v261 = vsel %vm178, %v259, %v260
    %v262 = vrot.slane %v103, 7
    %v263 = vrot.slane %v104, 7
    %v264 = vsel %vm178, %v262, %v263
    %v265 = vrot.slane %v105, 7
    %v266 = vrot.slane %v106, 7
    %v267 = vsel %vm178, %v265, %v266
    %v268 = vrot.slane %v107, 7
    %v269 = vrot.slane %v108, 7
    %v270 = vsel %vm178, %v268, %v269
    %v271 = vrot.slane %v109, 7
    %v272 = vrot.slane %v110, 7
    %v273 = vsel %vm178, %v271, %v272
    %v274 = vrot.slane %v111, 7
    %v275 = vrot.slane %v112, 7
    %v276 = vsel %vm178, %v274, %v275
    %v371 = vsel %vm178, 0.0, %v179
    %v372 = vsel %vm178, 0.0, %v181
    %v373 = vsel %vm178, 0.0, %v184
    %v374 = vsel %vm178, 0.0, %v187
    %v375 = vsel %vm178, 0.0, %v190
    %v376 = vsel %vm178, 0.0, %v193
    %v377 = vsel %vm178, 0.0, %v196
    %v378 = vsel %vm178, 0.0, %v199
    %v379 = vsel %vm178, 0.0, %v202
    %v380 = vsel %vm178, 0.0, %v205
    %v381 = vsel %vm178, 0.0, %v208
    %v382 = vsel %vm178, 0.0, %v211
    %v383 = vsel %vm178, 0.0, %v214
    %v384 = vsel %vm178, 0.0, %v217
    %v385 = vsel %vm178, 0.0, %v220
    %v386 = vsel %vm178, 0.0, %v223
    %v387 = vsel %vm178, 0.0, %v226
    %v388 = vsel %vm178, 0.0, %v229
    %v389 = vsel %vm178, 0.0, %v232
    %v390 = vsel %vm178, 0.0, %v235
    %v391 = vsel %vm178, 0.0, %v238
    %v392 = vsel %vm178, 0.0, %v241
    %v393 = vsel %vm178, 0.0, %v244
    %v394 = vsel %vm178, 0.0, %v247
    %v395 = vsel %vm178, 0.0, %v250
    %v396 = vsel %vm178, 0.0, %v253
    %v397 = vsel %vm178, 0.0, %v256
    %v398 = vsel %vm178, 0.0, %v259
    %v399 = vsel %vm178, 0.0, %v262
    %v400 = vsel %vm178, 0.0, %v265
    %v401 = vsel %vm178, 0.0, %v268
    %v402 = vsel %vm178, 0.0, %v271
    %v403 = vsel %vm178, 0.0, %v274
    %v404 = vsel %vm178, %v179, 0.0
    %v405 = vsel %vm178, %v182, 0.0
    %v406 = vsel %vm178, %v185, 0.0
    %v407 = vsel %vm178, %v188, 0.0
    %v408 = vsel %vm178, %v191, 0.0
    %v409 = vsel %vm178, %v194, 0.0
    %v410 = vsel %vm178, %v197, 0.0
    %v411 = vsel %vm178, %v200, 0.0
    %v412 = vsel %vm178, %v203, 0.0
    %v413 = vsel %vm178, %v206, 0.0
    %v414 = vsel %vm178, %v209, 0.0
    %v415 = vsel %vm178, %v212, 0.0
    %v416 = vsel %vm178, %v215, 0.0
    %v417 = vsel %vm178, %v218, 0.0
    %v418 = vsel %vm178, %v221, 0.0
    %v419 = vsel %vm178, %v224, 0.0
    %v420 = vsel %vm178, %v227, 0.0
    %v421 = vsel %vm178, %v230, 0.0
    %v422 = vsel %vm178, %v233, 0.0
    %v423 = vsel %vm178, %v236, 0.0
    %v424 = vsel %vm178, %v239, 0.0
    %v425 = vsel %vm178, %v242, 0.0
    %v426 = vsel %vm178, %v245, 0.0
    %v427 = vsel %vm178, %v248, 0.0
    %v428 = vsel %vm178, %v251, 0.0
    %v429 = vsel %vm178, %v254, 0.0
    %v430 = vsel %vm178, %v257, 0.0
    %v431 = vsel %vm178, %v260, 0.0
    %v432 = vsel %vm178, %v263, 0.0
    %v433 = vsel %vm178, %v266, 0.0
    %v434 = vsel %vm178, %v269, 0.0
    %v435 = vsel %vm178, %v272, 0.0
    %v436 = vsel %vm178, %v275, 0.0
    %vm451 = vcmask 1046528
    %v452 = vrot.slane %v371, 1
    %v453 = vrot.slane %v180, 1
    %v454 = vsel %vm451, %v452, %v453
    %v455 = vrot.slane %v404, 1
    %v456 = vsel %vm451, %v453, %v455
    %v457 = vrot.slane %v372, 1
    %v458 = vrot.slane %v183, 1
    %v459 = vsel %vm451, %v457, %v458
    %v460 = vrot.slane %v405, 1
    %v461 = vsel %vm451, %v458, %v460
    %v462 = vrot.slane %v373, 1
    %v463 = vrot.slane %v186, 1
    %v464 = vsel %vm451, %v462, %v463
    %v465 = vrot.slane %v406, 1
    %v466 = vsel %vm451, %v463, %v465
    %v467 = vrot.slane %v374, 1
    %v468 = vrot.slane %v189, 1
    %v469 = vsel %vm451, %v467, %v468
    %v470 = vrot.slane %v407, 1
    %v471 = vsel %vm451, %v468, %v470
    %v472 = vrot.slane %v388, 1
    %v473 = vrot.slane %v231, 1
    %v474 = vsel %vm451, %v472, %v473
    %v475 = vrot.slane %v421, 1
    %v476 = vsel %vm451, %v473, %v475
    %v477 = vrot.slane %v389, 1
    %v478 = vrot.slane %v234, 1
    %v479 = vsel %vm451, %v477, %v478
    %v480 = vrot.slane %v422, 1
    %v481 = vsel %vm451, %v478, %v480
    %v482 = vrot.slane %v390, 1
    %v483 = vrot.slane %v237, 1
    %v484 = vsel %vm451, %v482, %v483
    %v485 = vrot.slane %v423, 1
    %v486 = vsel %vm451, %v483, %v485
    %487 = vrot.lane.b32.xlu0 %v454, 32
    %v488 = vpop.permute.xlu0 %487
    %489 = vrot.lane.b32.xlu0 %v456, 32
    %v490 = vpop.permute.xlu0 %489
    %491 = vrot.lane.b32.xlu0 %v459, 32
    %v492 = vpop.permute.xlu0 %491
    %493 = vrot.lane.b32.xlu0 %v461, 32
    %v494 = vpop.permute.xlu0 %493
    %495 = vrot.lane.b32.xlu0 %v464, 32
    %v496 = vpop.permute.xlu0 %495
    %497 = vrot.lane.b32.xlu0 %v466, 32
    %v498 = vpop.permute.xlu0 %497
    %499 = vrot.lane.b32.xlu0 %v469, 32
    %v500 = vpop.permute.xlu0 %499
    %501 = vrot.lane.b32.xlu0 %v471, 32
    %v502 = vpop.permute.xlu0 %501
    %503 = vrot.lane.b32.xlu0 %v474, 32
    %v504 = vpop.permute.xlu0 %503
    %505 = vrot.lane.b32.xlu0 %v476, 32
    %v506 = vpop.permute.xlu0 %505
    %507 = vrot.lane.b32.xlu0 %v479, 32
    %v508 = vpop.permute.xlu0 %507
    %509 = vrot.lane.b32.xlu0 %v481, 32
    %v510 = vpop.permute.xlu0 %509
    %511 = vrot.lane.b32.xlu0 %v484, 32
    %v512 = vpop.permute.xlu0 %511
    %513 = vrot.lane.b32.xlu0 %v486, 32
    %v514 = vpop.permute.xlu0 %513
    %vm529 = vcmask 1045504
    %v530 = vrot.slane %v371, 2
    %v531 = vrot.slane %v180, 2
    %v532 = vsel %vm529, %v530, %v531
    %v533 = vrot.slane %v404, 2
    %v534 = vsel %vm529, %v531, %v533
    %v535 = vrot.slane %v372, 2
    %v536 = vrot.slane %v183, 2
    %v537 = vsel %vm529, %v535, %v536
    %v538 = vrot.slane %v405, 2
    %v539 = vsel %vm529, %v536, %v538
    %v540 = vrot.slane %v373, 2
    %v541 = vrot.slane %v186, 2
    %v542 = vsel %vm529, %v540, %v541
    %v543 = vrot.slane %v406, 2
    %v544 = vsel %vm529, %v541, %v543
    %v545 = vrot.slane %v374, 2
    %v546 = vrot.slane %v189, 2
    %v547 = vsel %vm529, %v545, %v546
    %v548 = vrot.slane %v407, 2
    %v549 = vsel %vm529, %v546, %v548
    %v550 = vrot.slane %v388, 2
    %v551 = vrot.slane %v231, 2
    %v552 = vsel %vm529, %v550, %v551
    %v553 = vrot.slane %v421, 2
    %v554 = vsel %vm529, %v551, %v553
    %v555 = vrot.slane %v389, 2
    %v556 = vrot.slane %v234, 2
    %v557 = vsel %vm529, %v555, %v556
    %v558 = vrot.slane %v422, 2
    %v559 = vsel %vm529, %v556, %v558
    %v560 = vrot.slane %v390, 2
    %v561 = vrot.slane %v237, 2
    %v562 = vsel %vm529, %v560, %v561
    %v563 = vrot.slane %v423, 2
    %v564 = vsel %vm529, %v561, %v563
    %565 = vrot.lane.b32.xlu0 %v532, 64
    %v566 = vpop.permute.xlu0 %565
    %567 = vrot.lane.b32.xlu0 %v534, 64
    %v568 = vpop.permute.xlu0 %567
    %569 = vrot.lane.b32.xlu0 %v537, 64
    %v570 = vpop.permute.xlu0 %569
    %571 = vrot.lane.b32.xlu0 %v539, 64
    %v572 = vpop.permute.xlu0 %571
    %573 = vrot.lane.b32.xlu0 %v542, 64
    %v574 = vpop.permute.xlu0 %573
    %575 = vrot.lane.b32.xlu0 %v544, 64
    %v576 = vpop.permute.xlu0 %575
    %577 = vrot.lane.b32.xlu0 %v547, 64
    %v578 = vpop.permute.xlu0 %577
    %579 = vrot.lane.b32.xlu0 %v549, 64
    %v580 = vpop.permute.xlu0 %579
    %581 = vrot.lane.b32.xlu0 %v552, 64
    %v582 = vpop.permute.xlu0 %581
    %583 = vrot.lane.b32.xlu0 %v554, 64
    %v584 = vpop.permute.xlu0 %583
    %585 = vrot.lane.b32.xlu0 %v557, 64
    %v586 = vpop.permute.xlu0 %585
    %587 = vrot.lane.b32.xlu0 %v559, 64
    %v588 = vpop.permute.xlu0 %587
    %589 = vrot.lane.b32.xlu0 %v562, 64
    %v590 = vpop.permute.xlu0 %589
    %591 = vrot.lane.b32.xlu0 %v564, 64
    %v592 = vpop.permute.xlu0 %591
    %609 = vrot.lane.b32.xlu0 %v372, 96
    %v610 = vpop.permute.xlu0 %609
    %611 = vrot.lane.b32.xlu0 %v183, 96
    %v612 = vpop.permute.xlu0 %611
    %613 = vrot.lane.b32.xlu0 %v373, 96
    %v614 = vpop.permute.xlu0 %613
    %615 = vrot.lane.b32.xlu0 %v186, 96
    %v616 = vpop.permute.xlu0 %615
    %617 = vrot.lane.b32.xlu0 %v374, 96
    %v618 = vpop.permute.xlu0 %617
    %619 = vrot.lane.b32.xlu0 %v189, 96
    %v620 = vpop.permute.xlu0 %619
    %621 = vrot.lane.b32.xlu0 %v375, 96
    %v622 = vpop.permute.xlu0 %621
    %623 = vrot.lane.b32.xlu0 %v192, 96
    %v624 = vpop.permute.xlu0 %623
    %625 = vrot.lane.b32.xlu0 %v388, 96
    %v626 = vpop.permute.xlu0 %625
    %627 = vrot.lane.b32.xlu0 %v231, 96
    %v628 = vpop.permute.xlu0 %627
    %629 = vrot.lane.b32.xlu0 %v389, 96
    %v630 = vpop.permute.xlu0 %629
    %631 = vrot.lane.b32.xlu0 %v234, 96
    %v632 = vpop.permute.xlu0 %631
    %633 = vrot.lane.b32.xlu0 %v390, 96
    %v634 = vpop.permute.xlu0 %633
    %635 = vrot.lane.b32.xlu0 %v237, 96
    %v636 = vpop.permute.xlu0 %635
    %637 = vrot.lane.b32.xlu0 %v391, 96
    %v638 = vpop.permute.xlu0 %637
    %639 = vrot.lane.b32.xlu0 %v240, 96
    %v640 = vpop.permute.xlu0 %639
    %v659 = vrot.slane %v375, 1
    %v660 = vrot.slane %v192, 1
    %v661 = vsel %vm451, %v659, %v660
    %v662 = vrot.slane %v408, 1
    %v663 = vsel %vm451, %v660, %v662
    %v664 = vrot.slane %v391, 1
    %v665 = vrot.slane %v240, 1
    %v666 = vsel %vm451, %v664, %v665
    %v667 = vrot.slane %v424, 1
    %v668 = vsel %vm451, %v665, %v667
    %v685 = vrot.slane %v375, 2
    %v686 = vrot.slane %v192, 2
    %v687 = vsel %vm529, %v685, %v686
    %v688 = vrot.slane %v408, 2
    %v689 = vsel %vm529, %v686, %v688
    %v690 = vrot.slane %v391, 2
    %v691 = vrot.slane %v240, 2
    %v692 = vsel %vm529, %v690, %v691
    %v693 = vrot.slane %v424, 2
    %v694 = vsel %vm529, %v691, %v693
    %695 = vrot.lane.b32.xlu0 %v537, 32
    %v696 = vpop.permute.xlu0 %695
    %697 = vrot.lane.b32.xlu0 %v539, 32
    %v698 = vpop.permute.xlu0 %697
    %699 = vrot.lane.b32.xlu0 %v542, 32
    %v700 = vpop.permute.xlu0 %699
    %701 = vrot.lane.b32.xlu0 %v544, 32
    %v702 = vpop.permute.xlu0 %701
    %703 = vrot.lane.b32.xlu0 %v547, 32
    %v704 = vpop.permute.xlu0 %703
    %705 = vrot.lane.b32.xlu0 %v549, 32
    %v706 = vpop.permute.xlu0 %705
    %707 = vrot.lane.b32.xlu0 %v687, 32
    %v708 = vpop.permute.xlu0 %707
    %709 = vrot.lane.b32.xlu0 %v689, 32
    %v710 = vpop.permute.xlu0 %709
    %711 = vrot.lane.b32.xlu0 %v552, 32
    %v712 = vpop.permute.xlu0 %711
    %713 = vrot.lane.b32.xlu0 %v554, 32
    %v714 = vpop.permute.xlu0 %713
    %715 = vrot.lane.b32.xlu0 %v557, 32
    %v716 = vpop.permute.xlu0 %715
    %717 = vrot.lane.b32.xlu0 %v559, 32
    %v718 = vpop.permute.xlu0 %717
    %719 = vrot.lane.b32.xlu0 %v562, 32
    %v720 = vpop.permute.xlu0 %719
    %721 = vrot.lane.b32.xlu0 %v564, 32
    %v722 = vpop.permute.xlu0 %721
    %723 = vrot.lane.b32.xlu0 %v692, 32
    %v724 = vpop.permute.xlu0 %723
    %725 = vrot.lane.b32.xlu0 %v694, 32
    %v726 = vpop.permute.xlu0 %725
    %745 = vrot.lane.b32.xlu0 %v373, 64
    %v746 = vpop.permute.xlu0 %745
    %747 = vrot.lane.b32.xlu0 %v186, 64
    %v748 = vpop.permute.xlu0 %747
    %749 = vrot.lane.b32.xlu0 %v374, 64
    %v750 = vpop.permute.xlu0 %749
    %751 = vrot.lane.b32.xlu0 %v189, 64
    %v752 = vpop.permute.xlu0 %751
    %753 = vrot.lane.b32.xlu0 %v375, 64
    %v754 = vpop.permute.xlu0 %753
    %755 = vrot.lane.b32.xlu0 %v192, 64
    %v756 = vpop.permute.xlu0 %755
    %757 = vrot.lane.b32.xlu0 %v376, 64
    %v758 = vpop.permute.xlu0 %757
    %759 = vrot.lane.b32.xlu0 %v195, 64
    %v760 = vpop.permute.xlu0 %759
    %761 = vrot.lane.b32.xlu0 %v389, 64
    %v762 = vpop.permute.xlu0 %761
    %763 = vrot.lane.b32.xlu0 %v234, 64
    %v764 = vpop.permute.xlu0 %763
    %765 = vrot.lane.b32.xlu0 %v390, 64
    %v766 = vpop.permute.xlu0 %765
    %767 = vrot.lane.b32.xlu0 %v237, 64
    %v768 = vpop.permute.xlu0 %767
    %769 = vrot.lane.b32.xlu0 %v391, 64
    %v770 = vpop.permute.xlu0 %769
    %771 = vrot.lane.b32.xlu0 %v240, 64
    %v772 = vpop.permute.xlu0 %771
    %773 = vrot.lane.b32.xlu0 %v392, 64
    %v774 = vpop.permute.xlu0 %773
    %775 = vrot.lane.b32.xlu0 %v243, 64
    %v776 = vpop.permute.xlu0 %775
    %v795 = vrot.slane %v376, 1
    %v796 = vrot.slane %v195, 1
    %v797 = vsel %vm451, %v795, %v796
    %v798 = vrot.slane %v409, 1
    %v799 = vsel %vm451, %v796, %v798
    %v800 = vrot.slane %v392, 1
    %v801 = vrot.slane %v243, 1
    %v802 = vsel %vm451, %v800, %v801
    %v803 = vrot.slane %v425, 1
    %v804 = vsel %vm451, %v801, %v803
    %805 = vrot.lane.b32.xlu0 %v464, 96
    %v806 = vpop.permute.xlu0 %805
    %807 = vrot.lane.b32.xlu0 %v466, 96
    %v808 = vpop.permute.xlu0 %807
    %809 = vrot.lane.b32.xlu0 %v469, 96
    %v810 = vpop.permute.xlu0 %809
    %811 = vrot.lane.b32.xlu0 %v471, 96
    %v812 = vpop.permute.xlu0 %811
    %813 = vrot.lane.b32.xlu0 %v661, 96
    %v814 = vpop.permute.xlu0 %813
    %815 = vrot.lane.b32.xlu0 %v663, 96
    %v816 = vpop.permute.xlu0 %815
    %817 = vrot.lane.b32.xlu0 %v797, 96
    %v818 = vpop.permute.xlu0 %817
    %819 = vrot.lane.b32.xlu0 %v799, 96
    %v820 = vpop.permute.xlu0 %819
    %821 = vrot.lane.b32.xlu0 %v479, 96
    %v822 = vpop.permute.xlu0 %821
    %823 = vrot.lane.b32.xlu0 %v481, 96
    %v824 = vpop.permute.xlu0 %823
    %825 = vrot.lane.b32.xlu0 %v484, 96
    %v826 = vpop.permute.xlu0 %825
    %827 = vrot.lane.b32.xlu0 %v486, 96
    %v828 = vpop.permute.xlu0 %827
    %829 = vrot.lane.b32.xlu0 %v666, 96
    %v830 = vpop.permute.xlu0 %829
    %831 = vrot.lane.b32.xlu0 %v668, 96
    %v832 = vpop.permute.xlu0 %831
    %833 = vrot.lane.b32.xlu0 %v802, 96
    %v834 = vpop.permute.xlu0 %833
    %835 = vrot.lane.b32.xlu0 %v804, 96
    %v836 = vpop.permute.xlu0 %835
    %v853 = vrot.slane %v376, 2
    %v854 = vrot.slane %v195, 2
    %v855 = vsel %vm529, %v853, %v854
    %v856 = vrot.slane %v409, 2
    %v857 = vsel %vm529, %v854, %v856
    %v858 = vrot.slane %v392, 2
    %v859 = vrot.slane %v243, 2
    %v860 = vsel %vm529, %v858, %v859
    %v861 = vrot.slane %v425, 2
    %v862 = vsel %vm529, %v859, %v861
    %883 = vrot.lane.b32.xlu0 %v375, 32
    %v884 = vpop.permute.xlu0 %883
    %885 = vrot.lane.b32.xlu0 %v192, 32
    %v886 = vpop.permute.xlu0 %885
    %887 = vrot.lane.b32.xlu0 %v376, 32
    %v888 = vpop.permute.xlu0 %887
    %889 = vrot.lane.b32.xlu0 %v195, 32
    %v890 = vpop.permute.xlu0 %889
    %891 = vrot.lane.b32.xlu0 %v377, 32
    %v892 = vpop.permute.xlu0 %891
    %893 = vrot.lane.b32.xlu0 %v198, 32
    %v894 = vpop.permute.xlu0 %893
    %895 = vrot.lane.b32.xlu0 %v378, 32
    %v896 = vpop.permute.xlu0 %895
    %897 = vrot.lane.b32.xlu0 %v201, 32
    %v898 = vpop.permute.xlu0 %897
    %899 = vrot.lane.b32.xlu0 %v391, 32
    %v900 = vpop.permute.xlu0 %899
    %901 = vrot.lane.b32.xlu0 %v240, 32
    %v902 = vpop.permute.xlu0 %901
    %903 = vrot.lane.b32.xlu0 %v392, 32
    %v904 = vpop.permute.xlu0 %903
    %905 = vrot.lane.b32.xlu0 %v243, 32
    %v906 = vpop.permute.xlu0 %905
    %907 = vrot.lane.b32.xlu0 %v393, 32
    %v908 = vpop.permute.xlu0 %907
    %909 = vrot.lane.b32.xlu0 %v246, 32
    %v910 = vpop.permute.xlu0 %909
    %911 = vrot.lane.b32.xlu0 %v394, 32
    %v912 = vpop.permute.xlu0 %911
    %913 = vrot.lane.b32.xlu0 %v249, 32
    %v914 = vpop.permute.xlu0 %913
    %v935 = vrot.slane %v377, 1
    %v936 = vrot.slane %v198, 1
    %v937 = vsel %vm451, %v935, %v936
    %v938 = vrot.slane %v410, 1
    %v939 = vsel %vm451, %v936, %v938
    %v940 = vrot.slane %v378, 1
    %v941 = vrot.slane %v201, 1
    %v942 = vsel %vm451, %v940, %v941
    %v943 = vrot.slane %v411, 1
    %v944 = vsel %vm451, %v941, %v943
    %v945 = vrot.slane %v393, 1
    %v946 = vrot.slane %v246, 1
    %v947 = vsel %vm451, %v945, %v946
    %v948 = vrot.slane %v426, 1
    %v949 = vsel %vm451, %v946, %v948
    %v950 = vrot.slane %v394, 1
    %v951 = vrot.slane %v249, 1
    %v952 = vsel %vm451, %v950, %v951
    %v953 = vrot.slane %v427, 1
    %v954 = vsel %vm451, %v951, %v953
    %955 = vrot.lane.b32.xlu0 %v661, 64
    %v956 = vpop.permute.xlu0 %955
    %957 = vrot.lane.b32.xlu0 %v663, 64
    %v958 = vpop.permute.xlu0 %957
    %959 = vrot.lane.b32.xlu0 %v797, 64
    %v960 = vpop.permute.xlu0 %959
    %961 = vrot.lane.b32.xlu0 %v799, 64
    %v962 = vpop.permute.xlu0 %961
    %963 = vrot.lane.b32.xlu0 %v937, 64
    %v964 = vpop.permute.xlu0 %963
    %965 = vrot.lane.b32.xlu0 %v939, 64
    %v966 = vpop.permute.xlu0 %965
    %967 = vrot.lane.b32.xlu0 %v942, 64
    %v968 = vpop.permute.xlu0 %967
    %969 = vrot.lane.b32.xlu0 %v944, 64
    %v970 = vpop.permute.xlu0 %969
    %971 = vrot.lane.b32.xlu0 %v666, 64
    %v972 = vpop.permute.xlu0 %971
    %973 = vrot.lane.b32.xlu0 %v668, 64
    %v974 = vpop.permute.xlu0 %973
    %975 = vrot.lane.b32.xlu0 %v802, 64
    %v976 = vpop.permute.xlu0 %975
    %977 = vrot.lane.b32.xlu0 %v804, 64
    %v978 = vpop.permute.xlu0 %977
    %979 = vrot.lane.b32.xlu0 %v947, 64
    %v980 = vpop.permute.xlu0 %979
    %981 = vrot.lane.b32.xlu0 %v949, 64
    %v982 = vpop.permute.xlu0 %981
    %983 = vrot.lane.b32.xlu0 %v952, 64
    %v984 = vpop.permute.xlu0 %983
    %985 = vrot.lane.b32.xlu0 %v954, 64
    %v986 = vpop.permute.xlu0 %985
    %v1003 = vrot.slane %v377, 2
    %v1004 = vrot.slane %v198, 2
    %v1005 = vsel %vm529, %v1003, %v1004
    %v1006 = vrot.slane %v410, 2
    %v1007 = vsel %vm529, %v1004, %v1006
    %v1008 = vrot.slane %v378, 2
    %v1009 = vrot.slane %v201, 2
    %v1010 = vsel %vm529, %v1008, %v1009
    %v1011 = vrot.slane %v411, 2
    %v1012 = vsel %vm529, %v1009, %v1011
    %v1013 = vrot.slane %v393, 2
    %v1014 = vrot.slane %v246, 2
    %v1015 = vsel %vm529, %v1013, %v1014
    %v1016 = vrot.slane %v426, 2
    %v1017 = vsel %vm529, %v1014, %v1016
    %v1018 = vrot.slane %v394, 2
    %v1019 = vrot.slane %v249, 2
    %v1020 = vsel %vm529, %v1018, %v1019
    %v1021 = vrot.slane %v427, 2
    %v1022 = vsel %vm529, %v1019, %v1021
    %1023 = vrot.lane.b32.xlu0 %v687, 96
    %v1024 = vpop.permute.xlu0 %1023
    %1025 = vrot.lane.b32.xlu0 %v689, 96
    %v1026 = vpop.permute.xlu0 %1025
    %1027 = vrot.lane.b32.xlu0 %v855, 96
    %v1028 = vpop.permute.xlu0 %1027
    %1029 = vrot.lane.b32.xlu0 %v857, 96
    %v1030 = vpop.permute.xlu0 %1029
    %1031 = vrot.lane.b32.xlu0 %v1005, 96
    %v1032 = vpop.permute.xlu0 %1031
    %1033 = vrot.lane.b32.xlu0 %v1007, 96
    %v1034 = vpop.permute.xlu0 %1033
    %1035 = vrot.lane.b32.xlu0 %v1010, 96
    %v1036 = vpop.permute.xlu0 %1035
    %1037 = vrot.lane.b32.xlu0 %v1012, 96
    %v1038 = vpop.permute.xlu0 %1037
    %1039 = vrot.lane.b32.xlu0 %v692, 96
    %v1040 = vpop.permute.xlu0 %1039
    %1041 = vrot.lane.b32.xlu0 %v694, 96
    %v1042 = vpop.permute.xlu0 %1041
    %1043 = vrot.lane.b32.xlu0 %v860, 96
    %v1044 = vpop.permute.xlu0 %1043
    %1045 = vrot.lane.b32.xlu0 %v862, 96
    %v1046 = vpop.permute.xlu0 %1045
    %1047 = vrot.lane.b32.xlu0 %v1015, 96
    %v1048 = vpop.permute.xlu0 %1047
    %1049 = vrot.lane.b32.xlu0 %v1017, 96
    %v1050 = vpop.permute.xlu0 %1049
    %1051 = vrot.lane.b32.xlu0 %v1020, 96
    %v1052 = vpop.permute.xlu0 %1051
    %1053 = vrot.lane.b32.xlu0 %v1022, 96
    %v1054 = vpop.permute.xlu0 %1053
    %v1075 = vrot.slane %v379, 1
    %v1076 = vrot.slane %v204, 1
    %v1077 = vsel %vm451, %v1075, %v1076
    %v1078 = vrot.slane %v412, 1
    %v1079 = vsel %vm451, %v1076, %v1078
    %v1080 = vrot.slane %v395, 1
    %v1081 = vrot.slane %v252, 1
    %v1082 = vsel %vm451, %v1080, %v1081
    %v1083 = vrot.slane %v428, 1
    %v1084 = vsel %vm451, %v1081, %v1083
    %1085 = vrot.lane.b32.xlu0 %v797, 32
    %v1086 = vpop.permute.xlu0 %1085
    %1087 = vrot.lane.b32.xlu0 %v799, 32
    %v1088 = vpop.permute.xlu0 %1087
    %1089 = vrot.lane.b32.xlu0 %v937, 32
    %v1090 = vpop.permute.xlu0 %1089
    %1091 = vrot.lane.b32.xlu0 %v939, 32
    %v1092 = vpop.permute.xlu0 %1091
    %1093 = vrot.lane.b32.xlu0 %v942, 32
    %v1094 = vpop.permute.xlu0 %1093
    %1095 = vrot.lane.b32.xlu0 %v944, 32
    %v1096 = vpop.permute.xlu0 %1095
    %1097 = vrot.lane.b32.xlu0 %v1077, 32
    %v1098 = vpop.permute.xlu0 %1097
    %1099 = vrot.lane.b32.xlu0 %v1079, 32
    %v1100 = vpop.permute.xlu0 %1099
    %1101 = vrot.lane.b32.xlu0 %v802, 32
    %v1102 = vpop.permute.xlu0 %1101
    %1103 = vrot.lane.b32.xlu0 %v804, 32
    %v1104 = vpop.permute.xlu0 %1103
    %1105 = vrot.lane.b32.xlu0 %v947, 32
    %v1106 = vpop.permute.xlu0 %1105
    %1107 = vrot.lane.b32.xlu0 %v949, 32
    %v1108 = vpop.permute.xlu0 %1107
    %1109 = vrot.lane.b32.xlu0 %v952, 32
    %v1110 = vpop.permute.xlu0 %1109
    %1111 = vrot.lane.b32.xlu0 %v954, 32
    %v1112 = vpop.permute.xlu0 %1111
    %1113 = vrot.lane.b32.xlu0 %v1082, 32
    %v1114 = vpop.permute.xlu0 %1113
    %1115 = vrot.lane.b32.xlu0 %v1084, 32
    %v1116 = vpop.permute.xlu0 %1115
    %v1133 = vrot.slane %v379, 2
    %v1134 = vrot.slane %v204, 2
    %v1135 = vsel %vm529, %v1133, %v1134
    %v1136 = vrot.slane %v412, 2
    %v1137 = vsel %vm529, %v1134, %v1136
    %v1138 = vrot.slane %v395, 2
    %v1139 = vrot.slane %v252, 2
    %v1140 = vsel %vm529, %v1138, %v1139
    %v1141 = vrot.slane %v428, 2
    %v1142 = vsel %vm529, %v1139, %v1141
    %1143 = vrot.lane.b32.xlu0 %v855, 64
    %v1144 = vpop.permute.xlu0 %1143
    %1145 = vrot.lane.b32.xlu0 %v857, 64
    %v1146 = vpop.permute.xlu0 %1145
    %1147 = vrot.lane.b32.xlu0 %v1005, 64
    %v1148 = vpop.permute.xlu0 %1147
    %1149 = vrot.lane.b32.xlu0 %v1007, 64
    %v1150 = vpop.permute.xlu0 %1149
    %1151 = vrot.lane.b32.xlu0 %v1010, 64
    %v1152 = vpop.permute.xlu0 %1151
    %1153 = vrot.lane.b32.xlu0 %v1012, 64
    %v1154 = vpop.permute.xlu0 %1153
    %1155 = vrot.lane.b32.xlu0 %v1135, 64
    %v1156 = vpop.permute.xlu0 %1155
    %1157 = vrot.lane.b32.xlu0 %v1137, 64
    %v1158 = vpop.permute.xlu0 %1157
    %1159 = vrot.lane.b32.xlu0 %v860, 64
    %v1160 = vpop.permute.xlu0 %1159
    %1161 = vrot.lane.b32.xlu0 %v862, 64
    %v1162 = vpop.permute.xlu0 %1161
    %1163 = vrot.lane.b32.xlu0 %v1015, 64
    %v1164 = vpop.permute.xlu0 %1163
    %1165 = vrot.lane.b32.xlu0 %v1017, 64
    %v1166 = vpop.permute.xlu0 %1165
    %1167 = vrot.lane.b32.xlu0 %v1020, 64
    %v1168 = vpop.permute.xlu0 %1167
    %1169 = vrot.lane.b32.xlu0 %v1022, 64
    %v1170 = vpop.permute.xlu0 %1169
    %1171 = vrot.lane.b32.xlu0 %v1140, 64
    %v1172 = vpop.permute.xlu0 %1171
    %1173 = vrot.lane.b32.xlu0 %v1142, 64
    %v1174 = vpop.permute.xlu0 %1173
    %1193 = vrot.lane.b32.xlu0 %v377, 96
    %v1194 = vpop.permute.xlu0 %1193
    %1195 = vrot.lane.b32.xlu0 %v198, 96
    %v1196 = vpop.permute.xlu0 %1195
    %1197 = vrot.lane.b32.xlu0 %v378, 96
    %v1198 = vpop.permute.xlu0 %1197
    %1199 = vrot.lane.b32.xlu0 %v201, 96
    %v1200 = vpop.permute.xlu0 %1199
    %1201 = vrot.lane.b32.xlu0 %v379, 96
    %v1202 = vpop.permute.xlu0 %1201
    %1203 = vrot.lane.b32.xlu0 %v204, 96
    %v1204 = vpop.permute.xlu0 %1203
    %1205 = vrot.lane.b32.xlu0 %v380, 96
    %v1206 = vpop.permute.xlu0 %1205
    %1207 = vrot.lane.b32.xlu0 %v207, 96
    %v1208 = vpop.permute.xlu0 %1207
    %1209 = vrot.lane.b32.xlu0 %v393, 96
    %v1210 = vpop.permute.xlu0 %1209
    %1211 = vrot.lane.b32.xlu0 %v246, 96
    %v1212 = vpop.permute.xlu0 %1211
    %1213 = vrot.lane.b32.xlu0 %v394, 96
    %v1214 = vpop.permute.xlu0 %1213
    %1215 = vrot.lane.b32.xlu0 %v249, 96
    %v1216 = vpop.permute.xlu0 %1215
    %1217 = vrot.lane.b32.xlu0 %v395, 96
    %v1218 = vpop.permute.xlu0 %1217
    %1219 = vrot.lane.b32.xlu0 %v252, 96
    %v1220 = vpop.permute.xlu0 %1219
    %1221 = vrot.lane.b32.xlu0 %v396, 96
    %v1222 = vpop.permute.xlu0 %1221
    %1223 = vrot.lane.b32.xlu0 %v255, 96
    %v1224 = vpop.permute.xlu0 %1223
    %vm1241 = vcmask 261120
    %v1242 = vsel %vm1241, %v371, %v488
    %v1243 = vsel %vm1241, %v180, %v490
    %v1244 = vsel %vm1241, %v372, %v492
    %v1245 = vsel %vm1241, %v183, %v494
    %v1246 = vsel %vm1241, %v373, %v496
    %v1247 = vsel %vm1241, %v186, %v498
    %v1248 = vsel %vm1241, %v374, %v500
    %v1249 = vsel %vm1241, %v189, %v502
    %v1250 = vsel %vm1241, %v388, %v504
    %v1251 = vsel %vm1241, %v231, %v506
    %v1252 = vsel %vm1241, %v389, %v508
    %v1253 = vsel %vm1241, %v234, %v510
    %v1254 = vsel %vm1241, %v390, %v512
    %v1255 = vsel %vm1241, %v237, %v514
    %vm1256 = vcmask 523264
    %v1257 = vsel %vm1256, %v1242, %v566
    %v1258 = vsel %vm1256, %v1243, %v568
    %v1259 = vsel %vm1256, %v1244, %v570
    %v1260 = vsel %vm1256, %v1245, %v572
    %v1261 = vsel %vm1256, %v1246, %v574
    %v1262 = vsel %vm1256, %v1247, %v576
    %v1263 = vsel %vm1256, %v1248, %v578
    %v1264 = vsel %vm1256, %v1249, %v580
    %v1265 = vsel %vm1256, %v1250, %v582
    %v1266 = vsel %vm1256, %v1251, %v584
    %v1267 = vsel %vm1256, %v1252, %v586
    %v1268 = vsel %vm1256, %v1253, %v588
    %v1269 = vsel %vm1256, %v1254, %v590
    %v1270 = vsel %vm1256, %v1255, %v592
    %vm1271 = vcmask 785408
    %v1272 = vsel %vm1271, %v1257, %v610
    %v1273 = vsel %vm1271, %v1258, %v612
    %v1274 = vsel %vm1271, %v1259, %v614
    %v1275 = vsel %vm1271, %v1260, %v616
    %v1276 = vsel %vm1271, %v1261, %v618
    %v1277 = vsel %vm1271, %v1262, %v620
    %v1278 = vsel %vm1271, %v1263, %v622
    %v1279 = vsel %vm1271, %v1264, %v624
    %v1280 = vsel %vm1271, %v1257, %v626
    %v1281 = vsel %vm1271, %v1258, %v628
    %v1282 = vsel %vm1271, %v1265, %v630
    %v1283 = vsel %vm1271, %v1266, %v632
    %v1284 = vsel %vm1271, %v1267, %v634
    %v1285 = vsel %vm1271, %v1268, %v636
    %v1286 = vsel %vm1271, %v1269, %v638
    %v1287 = vsel %vm1271, %v1270, %v640
    %v1288 = vsel %vm1241, %v459, %v696
    %v1289 = vsel %vm1241, %v461, %v698
    %v1290 = vsel %vm1241, %v464, %v700
    %v1291 = vsel %vm1241, %v466, %v702
    %v1292 = vsel %vm1241, %v469, %v704
    %v1293 = vsel %vm1241, %v471, %v706
    %v1294 = vsel %vm1241, %v661, %v708
    %v1295 = vsel %vm1241, %v663, %v710
    %v1296 = vsel %vm1241, %v474, %v712
    %v1297 = vsel %vm1241, %v476, %v714
    %v1298 = vsel %vm1241, %v479, %v716
    %v1299 = vsel %vm1241, %v481, %v718
    %v1300 = vsel %vm1241, %v484, %v720
    %v1301 = vsel %vm1241, %v486, %v722
    %v1302 = vsel %vm1241, %v666, %v724
    %v1303 = vsel %vm1241, %v668, %v726
    %v1304 = vsel %vm1256, %v1288, %v746
    %v1305 = vsel %vm1256, %v1289, %v748
    %v1306 = vsel %vm1256, %v1290, %v750
    %v1307 = vsel %vm1256, %v1291, %v752
    %v1308 = vsel %vm1256, %v1292, %v754
    %v1309 = vsel %vm1256, %v1293, %v756
    %v1310 = vsel %vm1256, %v1294, %v758
    %v1311 = vsel %vm1256, %v1295, %v760
    %v1312 = vsel %vm1256, %v1296, %v762
    %v1313 = vsel %vm1256, %v1297, %v764
    %v1314 = vsel %vm1256, %v1298, %v766
    %v1315 = vsel %vm1256, %v1299, %v768
    %v1316 = vsel %vm1256, %v1300, %v770
    %v1317 = vsel %vm1256, %v1301, %v772
    %v1318 = vsel %vm1256, %v1302, %v774
    %v1319 = vsel %vm1256, %v1303, %v776
    %v1320 = vsel %vm1271, %v1304, %v806
    %v1321 = vsel %vm1271, %v1305, %v808
    %v1322 = vsel %vm1271, %v1306, %v810
    %v1323 = vsel %vm1271, %v1307, %v812
    %v1324 = vsel %vm1271, %v1308, %v814
    %v1325 = vsel %vm1271, %v1309, %v816
    %v1326 = vsel %vm1271, %v1310, %v818
    %v1327 = vsel %vm1271, %v1311, %v820
    %v1328 = vsel %vm1271, %v1312, %v822
    %v1329 = vsel %vm1271, %v1313, %v824
    %v1330 = vsel %vm1271, %v1314, %v826
    %v1331 = vsel %vm1271, %v1315, %v828
    %v1332 = vsel %vm1271, %v1316, %v830
    %v1333 = vsel %vm1271, %v1317, %v832
    %v1334 = vsel %vm1271, %v1318, %v834
    %v1335 = vsel %vm1271, %v1319, %v836
    %v1336 = vsel %vm1241, %v542, %v884
    %v1337 = vsel %vm1241, %v544, %v886
    %v1338 = vsel %vm1241, %v547, %v888
    %v1339 = vsel %vm1241, %v549, %v890
    %v1340 = vsel %vm1241, %v687, %v892
    %v1341 = vsel %vm1241, %v689, %v894
    %v1342 = vsel %vm1241, %v855, %v896
    %v1343 = vsel %vm1241, %v857, %v898
    %v1344 = vsel %vm1241, %v557, %v900
    %v1345 = vsel %vm1241, %v559, %v902
    %v1346 = vsel %vm1241, %v562, %v904
    %v1347 = vsel %vm1241, %v564, %v906
    %v1348 = vsel %vm1241, %v692, %v908
    %v1349 = vsel %vm1241, %v694, %v910
    %v1350 = vsel %vm1241, %v860, %v912
    %v1351 = vsel %vm1241, %v862, %v914
    %v1352 = vsel %vm1256, %v1336, %v956
    %v1353 = vsel %vm1256, %v1337, %v958
    %v1354 = vsel %vm1256, %v1338, %v960
    %v1355 = vsel %vm1256, %v1339, %v962
    %v1356 = vsel %vm1256, %v1340, %v964
    %v1357 = vsel %vm1256, %v1341, %v966
    %v1358 = vsel %vm1256, %v1342, %v968
    %v1359 = vsel %vm1256, %v1343, %v970
    %v1360 = vsel %vm1256, %v1344, %v972
    %v1361 = vsel %vm1256, %v1345, %v974
    %v1362 = vsel %vm1256, %v1346, %v976
    %v1363 = vsel %vm1256, %v1347, %v978
    %v1364 = vsel %vm1256, %v1348, %v980
    %v1365 = vsel %vm1256, %v1349, %v982
    %v1366 = vsel %vm1256, %v1350, %v984
    %v1367 = vsel %vm1256, %v1351, %v986
    %v1368 = vsel %vm1271, %v1352, %v1024
    %v1369 = vsel %vm1271, %v1353, %v1026
    %v1370 = vsel %vm1271, %v1354, %v1028
    %v1371 = vsel %vm1271, %v1355, %v1030
    %v1372 = vsel %vm1271, %v1356, %v1032
    %v1373 = vsel %vm1271, %v1357, %v1034
    %v1374 = vsel %vm1271, %v1358, %v1036
    %v1375 = vsel %vm1271, %v1359, %v1038
    %v1376 = vsel %vm1271, %v1360, %v1040
    %v1377 = vsel %vm1271, %v1361, %v1042
    %v1378 = vsel %vm1271, %v1362, %v1044
    %v1379 = vsel %vm1271, %v1363, %v1046
    %v1380 = vsel %vm1271, %v1364, %v1048
    %v1381 = vsel %vm1271, %v1365, %v1050
    %v1382 = vsel %vm1271, %v1366, %v1052
    %v1383 = vsel %vm1271, %v1367, %v1054
    %v1384 = vsel %vm1241, %v376, %v1086
    %v1385 = vsel %vm1241, %v195, %v1088
    %v1386 = vsel %vm1241, %v377, %v1090
    %v1387 = vsel %vm1241, %v198, %v1092
    %v1388 = vsel %vm1241, %v378, %v1094
    %v1389 = vsel %vm1241, %v201, %v1096
    %v1390 = vsel %vm1241, %v379, %v1098
    %v1391 = vsel %vm1241, %v204, %v1100
    %v1392 = vsel %vm1241, %v392, %v1102
    %v1393 = vsel %vm1241, %v243, %v1104
    %v1394 = vsel %vm1241, %v393, %v1106
    %v1395 = vsel %vm1241, %v246, %v1108
    %v1396 = vsel %vm1241, %v394, %v1110
    %v1397 = vsel %vm1241, %v249, %v1112
    %v1398 = vsel %vm1241, %v395, %v1114
    %v1399 = vsel %vm1241, %v252, %v1116
    %v1400 = vsel %vm1256, %v1384, %v1144
    %v1401 = vsel %vm1256, %v1385, %v1146
    %v1402 = vsel %vm1256, %v1386, %v1148
    %v1403 = vsel %vm1256, %v1387, %v1150
    %v1404 = vsel %vm1256, %v1388, %v1152
    %v1405 = vsel %vm1256, %v1389, %v1154
    %v1406 = vsel %vm1256, %v1390, %v1156
    %v1407 = vsel %vm1256, %v1391, %v1158
    %v1408 = vsel %vm1256, %v1392, %v1160
    %v1409 = vsel %vm1256, %v1393, %v1162
    %v1410 = vsel %vm1256, %v1394, %v1164
    %v1411 = vsel %vm1256, %v1395, %v1166
    %v1412 = vsel %vm1256, %v1396, %v1168
    %v1413 = vsel %vm1256, %v1397, %v1170
    %v1414 = vsel %vm1256, %v1398, %v1172
    %v1415 = vsel %vm1256, %v1399, %v1174
    %v1416 = vsel %vm1271, %v1400, %v1194
    %v1417 = vsel %vm1271, %v1401, %v1196
    %v1418 = vsel %vm1271, %v1402, %v1198
    %v1419 = vsel %vm1271, %v1403, %v1200
    %v1420 = vsel %vm1271, %v1404, %v1202
    %v1421 = vsel %vm1271, %v1405, %v1204
    %v1422 = vsel %vm1271, %v1406, %v1206
    %v1423 = vsel %vm1271, %v1407, %v1208
    %v1424 = vsel %vm1271, %v1408, %v1210
    %v1425 = vsel %vm1271, %v1409, %v1212
    %v1426 = vsel %vm1271, %v1410, %v1214
    %v1427 = vsel %vm1271, %v1411, %v1216
    %v1428 = vsel %vm1271, %v1412, %v1218
    %v1429 = vsel %vm1271, %v1413, %v1220
    %v1430 = vsel %vm1271, %v1414, %v1222
    %v1431 = vsel %vm1271, %v1415, %v1224
    %v1434 = vrot.slane %v380, 1
    %v1435 = vrot.slane %v207, 1
    %v1436 = vsel %vm451, %v1434, %v1435
    %v1437 = vrot.slane %v413, 1
    %v1438 = vsel %vm451, %v1435, %v1437
    %v1439 = vrot.slane %v396, 1
    %v1440 = vrot.slane %v255, 1
    %v1441 = vsel %vm451, %v1439, %v1440
    %v1442 = vrot.slane %v429, 1
    %v1443 = vsel %vm451, %v1440, %v1442
    %1444 = vrot.lane.b32.xlu0 %v938, 32
    %v1445 = vpop.permute.xlu0 %1444
    %1446 = vrot.lane.b32.xlu0 %v943, 32
    %v1447 = vpop.permute.xlu0 %1446
    %1448 = vrot.lane.b32.xlu0 %v1078, 32
    %v1449 = vpop.permute.xlu0 %1448
    %1450 = vrot.lane.b32.xlu0 %v1436, 32
    %v1451 = vpop.permute.xlu0 %1450
    %1452 = vrot.lane.b32.xlu0 %v1438, 32
    %v1453 = vpop.permute.xlu0 %1452
    %1454 = vrot.lane.b32.xlu0 %v1437, 32
    %v1455 = vpop.permute.xlu0 %1454
    %1456 = vrot.lane.b32.xlu0 %v948, 32
    %v1457 = vpop.permute.xlu0 %1456
    %1458 = vrot.lane.b32.xlu0 %v953, 32
    %v1459 = vpop.permute.xlu0 %1458
    %1460 = vrot.lane.b32.xlu0 %v1083, 32
    %v1461 = vpop.permute.xlu0 %1460
    %1462 = vrot.lane.b32.xlu0 %v1441, 32
    %v1463 = vpop.permute.xlu0 %1462
    %1464 = vrot.lane.b32.xlu0 %v1443, 32
    %v1465 = vpop.permute.xlu0 %1464
    %1466 = vrot.lane.b32.xlu0 %v1442, 32
    %v1467 = vpop.permute.xlu0 %1466
    %v1484 = vrot.slane %v379, 7
    %v1485 = vrot.slane %v204, 7
    %v1486 = vsel %vm178, %v1484, %v1485
    %v1487 = vrot.slane %v380, 7
    %v1488 = vrot.slane %v207, 7
    %v1489 = vsel %vm178, %v1487, %v1488
    %v1490 = vrot.slane %v381, 7
    %v1491 = vrot.slane %v210, 7
    %v1492 = vsel %vm178, %v1490, %v1491
    %v1493 = vrot.slane %v382, 7
    %v1494 = vrot.slane %v213, 7
    %v1495 = vsel %vm178, %v1493, %v1494
    %v1496 = vrot.slane %v395, 7
    %v1497 = vrot.slane %v252, 7
    %v1498 = vsel %vm178, %v1496, %v1497
    %v1499 = vrot.slane %v396, 7
    %v1500 = vrot.slane %v255, 7
    %v1501 = vsel %vm178, %v1499, %v1500
    %v1502 = vrot.slane %v397, 7
    %v1503 = vrot.slane %v258, 7
    %v1504 = vsel %vm178, %v1502, %v1503
    %v1505 = vrot.slane %v398, 7
    %v1506 = vrot.slane %v261, 7
    %v1507 = vsel %vm178, %v1505, %v1506
    %1508 = vrot.lane.b32.xlu0 %v1484, 64
    %v1509 = vpop.permute.xlu0 %1508
    %1510 = vrot.lane.b32.xlu0 %v1486, 64
    %v1511 = vpop.permute.xlu0 %1510
    %1512 = vrot.lane.b32.xlu0 %v1485, 64
    %v1513 = vpop.permute.xlu0 %1512
    %1514 = vrot.lane.b32.xlu0 %v1487, 64
    %v1515 = vpop.permute.xlu0 %1514
    %1516 = vrot.lane.b32.xlu0 %v1489, 64
    %v1517 = vpop.permute.xlu0 %1516
    %1518 = vrot.lane.b32.xlu0 %v1488, 64
    %v1519 = vpop.permute.xlu0 %1518
    %1520 = vrot.lane.b32.xlu0 %v1490, 64
    %v1521 = vpop.permute.xlu0 %1520
    %1522 = vrot.lane.b32.xlu0 %v1492, 64
    %v1523 = vpop.permute.xlu0 %1522
    %1524 = vrot.lane.b32.xlu0 %v1491, 64
    %v1525 = vpop.permute.xlu0 %1524
    %1526 = vrot.lane.b32.xlu0 %v1493, 64
    %v1527 = vpop.permute.xlu0 %1526
    %1528 = vrot.lane.b32.xlu0 %v1495, 64
    %v1529 = vpop.permute.xlu0 %1528
    %1530 = vrot.lane.b32.xlu0 %v1494, 64
    %v1531 = vpop.permute.xlu0 %1530
    %1532 = vrot.lane.b32.xlu0 %v1496, 64
    %v1533 = vpop.permute.xlu0 %1532
    %1534 = vrot.lane.b32.xlu0 %v1498, 64
    %v1535 = vpop.permute.xlu0 %1534
    %1536 = vrot.lane.b32.xlu0 %v1497, 64
    %v1537 = vpop.permute.xlu0 %1536
    %1538 = vrot.lane.b32.xlu0 %v1499, 64
    %v1539 = vpop.permute.xlu0 %1538
    %1540 = vrot.lane.b32.xlu0 %v1501, 64
    %v1541 = vpop.permute.xlu0 %1540
    %1542 = vrot.lane.b32.xlu0 %v1500, 64
    %v1543 = vpop.permute.xlu0 %1542
    %1544 = vrot.lane.b32.xlu0 %v1502, 64
    %v1545 = vpop.permute.xlu0 %1544
    %1546 = vrot.lane.b32.xlu0 %v1504, 64
    %v1547 = vpop.permute.xlu0 %1546
    %1548 = vrot.lane.b32.xlu0 %v1503, 64
    %v1549 = vpop.permute.xlu0 %1548
    %1550 = vrot.lane.b32.xlu0 %v1505, 64
    %v1551 = vpop.permute.xlu0 %1550
    %1552 = vrot.lane.b32.xlu0 %v1507, 64
    %v1553 = vpop.permute.xlu0 %1552
    %1554 = vrot.lane.b32.xlu0 %v1506, 64
    %v1555 = vpop.permute.xlu0 %1554
    %1584 = vrot.lane.b32.xlu0 %v412, 96
    %v1585 = vpop.permute.xlu0 %1584
    %1586 = vrot.lane.b32.xlu0 %v413, 96
    %v1587 = vpop.permute.xlu0 %1586
    %1588 = vrot.lane.b32.xlu0 %v381, 96
    %v1589 = vpop.permute.xlu0 %1588
    %1590 = vrot.lane.b32.xlu0 %v210, 96
    %v1591 = vpop.permute.xlu0 %1590
    %1592 = vrot.lane.b32.xlu0 %v414, 96
    %v1593 = vpop.permute.xlu0 %1592
    %1594 = vrot.lane.b32.xlu0 %v382, 96
    %v1595 = vpop.permute.xlu0 %1594
    %1596 = vrot.lane.b32.xlu0 %v213, 96
    %v1597 = vpop.permute.xlu0 %1596
    %1598 = vrot.lane.b32.xlu0 %v415, 96
    %v1599 = vpop.permute.xlu0 %1598
    %1600 = vrot.lane.b32.xlu0 %v428, 96
    %v1601 = vpop.permute.xlu0 %1600
    %1602 = vrot.lane.b32.xlu0 %v429, 96
    %v1603 = vpop.permute.xlu0 %1602
    %1604 = vrot.lane.b32.xlu0 %v397, 96
    %v1605 = vpop.permute.xlu0 %1604
    %1606 = vrot.lane.b32.xlu0 %v258, 96
    %v1607 = vpop.permute.xlu0 %1606
    %1608 = vrot.lane.b32.xlu0 %v430, 96
    %v1609 = vpop.permute.xlu0 %1608
    %1610 = vrot.lane.b32.xlu0 %v398, 96
    %v1611 = vpop.permute.xlu0 %1610
    %1612 = vrot.lane.b32.xlu0 %v261, 96
    %v1613 = vpop.permute.xlu0 %1612
    %1614 = vrot.lane.b32.xlu0 %v431, 96
    %v1615 = vpop.permute.xlu0 %1614
    %v1632 = vrot.slane %v381, 1
    %v1633 = vrot.slane %v210, 1
    %v1634 = vsel %vm451, %v1632, %v1633
    %v1635 = vrot.slane %v414, 1
    %v1636 = vsel %vm451, %v1633, %v1635
    %v1637 = vrot.slane %v382, 1
    %v1638 = vrot.slane %v213, 1
    %v1639 = vsel %vm451, %v1637, %v1638
    %v1640 = vrot.slane %v415, 1
    %v1641 = vsel %vm451, %v1638, %v1640
    %v1642 = vrot.slane %v397, 1
    %v1643 = vrot.slane %v258, 1
    %v1644 = vsel %vm451, %v1642, %v1643
    %v1645 = vrot.slane %v430, 1
    %v1646 = vsel %vm451, %v1643, %v1645
    %v1647 = vrot.slane %v398, 1
    %v1648 = vrot.slane %v261, 1
    %v1649 = vsel %vm451, %v1647, %v1648
    %v1650 = vrot.slane %v431, 1
    %v1651 = vsel %vm451, %v1648, %v1650
    %v1678 = vrot.slane %v383, 7
    %v1679 = vrot.slane %v216, 7
    %v1680 = vsel %vm178, %v1678, %v1679
    %v1681 = vrot.slane %v399, 7
    %v1682 = vrot.slane %v264, 7
    %v1683 = vsel %vm178, %v1681, %v1682
    %1684 = vrot.lane.b32.xlu0 %v1487, 32
    %v1685 = vpop.permute.xlu0 %1684
    %1686 = vrot.lane.b32.xlu0 %v1489, 32
    %v1687 = vpop.permute.xlu0 %1686
    %1688 = vrot.lane.b32.xlu0 %v1488, 32
    %v1689 = vpop.permute.xlu0 %1688
    %1690 = vrot.lane.b32.xlu0 %v1490, 32
    %v1691 = vpop.permute.xlu0 %1690
    %1692 = vrot.lane.b32.xlu0 %v1492, 32
    %v1693 = vpop.permute.xlu0 %1692
    %1694 = vrot.lane.b32.xlu0 %v1491, 32
    %v1695 = vpop.permute.xlu0 %1694
    %1696 = vrot.lane.b32.xlu0 %v1493, 32
    %v1697 = vpop.permute.xlu0 %1696
    %1698 = vrot.lane.b32.xlu0 %v1495, 32
    %v1699 = vpop.permute.xlu0 %1698
    %1700 = vrot.lane.b32.xlu0 %v1494, 32
    %v1701 = vpop.permute.xlu0 %1700
    %1702 = vrot.lane.b32.xlu0 %v1678, 32
    %v1703 = vpop.permute.xlu0 %1702
    %1704 = vrot.lane.b32.xlu0 %v1680, 32
    %v1705 = vpop.permute.xlu0 %1704
    %1706 = vrot.lane.b32.xlu0 %v1679, 32
    %v1707 = vpop.permute.xlu0 %1706
    %1708 = vrot.lane.b32.xlu0 %v1499, 32
    %v1709 = vpop.permute.xlu0 %1708
    %1710 = vrot.lane.b32.xlu0 %v1501, 32
    %v1711 = vpop.permute.xlu0 %1710
    %1712 = vrot.lane.b32.xlu0 %v1500, 32
    %v1713 = vpop.permute.xlu0 %1712
    %1714 = vrot.lane.b32.xlu0 %v1502, 32
    %v1715 = vpop.permute.xlu0 %1714
    %1716 = vrot.lane.b32.xlu0 %v1504, 32
    %v1717 = vpop.permute.xlu0 %1716
    %1718 = vrot.lane.b32.xlu0 %v1503, 32
    %v1719 = vpop.permute.xlu0 %1718
    %1720 = vrot.lane.b32.xlu0 %v1505, 32
    %v1721 = vpop.permute.xlu0 %1720
    %1722 = vrot.lane.b32.xlu0 %v1507, 32
    %v1723 = vpop.permute.xlu0 %1722
    %1724 = vrot.lane.b32.xlu0 %v1506, 32
    %v1725 = vpop.permute.xlu0 %1724
    %1726 = vrot.lane.b32.xlu0 %v1681, 32
    %v1727 = vpop.permute.xlu0 %1726
    %1728 = vrot.lane.b32.xlu0 %v1683, 32
    %v1729 = vpop.permute.xlu0 %1728
    %1730 = vrot.lane.b32.xlu0 %v1682, 32
    %v1731 = vpop.permute.xlu0 %1730
    %1758 = vrot.lane.b32.xlu0 %v380, 64
    %v1759 = vpop.permute.xlu0 %1758
    %1760 = vrot.lane.b32.xlu0 %v207, 64
    %v1761 = vpop.permute.xlu0 %1760
    %1762 = vrot.lane.b32.xlu0 %v413, 64
    %v1763 = vpop.permute.xlu0 %1762
    %1764 = vrot.lane.b32.xlu0 %v381, 64
    %v1765 = vpop.permute.xlu0 %1764
    %1766 = vrot.lane.b32.xlu0 %v210, 64
    %v1767 = vpop.permute.xlu0 %1766
    %1768 = vrot.lane.b32.xlu0 %v414, 64
    %v1769 = vpop.permute.xlu0 %1768
    %1770 = vrot.lane.b32.xlu0 %v382, 64
    %v1771 = vpop.permute.xlu0 %1770
    %1772 = vrot.lane.b32.xlu0 %v213, 64
    %v1773 = vpop.permute.xlu0 %1772
    %1774 = vrot.lane.b32.xlu0 %v415, 64
    %v1775 = vpop.permute.xlu0 %1774
    %1776 = vrot.lane.b32.xlu0 %v383, 64
    %v1777 = vpop.permute.xlu0 %1776
    %1778 = vrot.lane.b32.xlu0 %v216, 64
    %v1779 = vpop.permute.xlu0 %1778
    %1780 = vrot.lane.b32.xlu0 %v416, 64
    %v1781 = vpop.permute.xlu0 %1780
    %1782 = vrot.lane.b32.xlu0 %v396, 64
    %v1783 = vpop.permute.xlu0 %1782
    %1784 = vrot.lane.b32.xlu0 %v255, 64
    %v1785 = vpop.permute.xlu0 %1784
    %1786 = vrot.lane.b32.xlu0 %v429, 64
    %v1787 = vpop.permute.xlu0 %1786
    %1788 = vrot.lane.b32.xlu0 %v397, 64
    %v1789 = vpop.permute.xlu0 %1788
    %1790 = vrot.lane.b32.xlu0 %v258, 64
    %v1791 = vpop.permute.xlu0 %1790
    %1792 = vrot.lane.b32.xlu0 %v430, 64
    %v1793 = vpop.permute.xlu0 %1792
    %1794 = vrot.lane.b32.xlu0 %v398, 64
    %v1795 = vpop.permute.xlu0 %1794
    %1796 = vrot.lane.b32.xlu0 %v261, 64
    %v1797 = vpop.permute.xlu0 %1796
    %1798 = vrot.lane.b32.xlu0 %v431, 64
    %v1799 = vpop.permute.xlu0 %1798
    %1800 = vrot.lane.b32.xlu0 %v399, 64
    %v1801 = vpop.permute.xlu0 %1800
    %1802 = vrot.lane.b32.xlu0 %v264, 64
    %v1803 = vpop.permute.xlu0 %1802
    %1804 = vrot.lane.b32.xlu0 %v432, 64
    %v1805 = vpop.permute.xlu0 %1804
    %v1830 = vrot.slane %v383, 1
    %v1831 = vrot.slane %v216, 1
    %v1832 = vsel %vm451, %v1830, %v1831
    %v1833 = vrot.slane %v416, 1
    %v1834 = vsel %vm451, %v1831, %v1833
    %v1835 = vrot.slane %v399, 1
    %v1836 = vrot.slane %v264, 1
    %v1837 = vsel %vm451, %v1835, %v1836
    %v1838 = vrot.slane %v432, 1
    %v1839 = vsel %vm451, %v1836, %v1838
    %1840 = vrot.lane.b32.xlu0 %v1436, 96
    %v1841 = vpop.permute.xlu0 %1840
    %1842 = vrot.lane.b32.xlu0 %v1438, 96
    %v1843 = vpop.permute.xlu0 %1842
    %1844 = vrot.lane.b32.xlu0 %v1437, 96
    %v1845 = vpop.permute.xlu0 %1844
    %1846 = vrot.lane.b32.xlu0 %v1634, 96
    %v1847 = vpop.permute.xlu0 %1846
    %1848 = vrot.lane.b32.xlu0 %v1636, 96
    %v1849 = vpop.permute.xlu0 %1848
    %1850 = vrot.lane.b32.xlu0 %v1635, 96
    %v1851 = vpop.permute.xlu0 %1850
    %1852 = vrot.lane.b32.xlu0 %v1639, 96
    %v1853 = vpop.permute.xlu0 %1852
    %1854 = vrot.lane.b32.xlu0 %v1641, 96
    %v1855 = vpop.permute.xlu0 %1854
    %1856 = vrot.lane.b32.xlu0 %v1640, 96
    %v1857 = vpop.permute.xlu0 %1856
    %1858 = vrot.lane.b32.xlu0 %v1832, 96
    %v1859 = vpop.permute.xlu0 %1858
    %1860 = vrot.lane.b32.xlu0 %v1834, 96
    %v1861 = vpop.permute.xlu0 %1860
    %1862 = vrot.lane.b32.xlu0 %v1833, 96
    %v1863 = vpop.permute.xlu0 %1862
    %1864 = vrot.lane.b32.xlu0 %v1441, 96
    %v1865 = vpop.permute.xlu0 %1864
    %1866 = vrot.lane.b32.xlu0 %v1443, 96
    %v1867 = vpop.permute.xlu0 %1866
    %1868 = vrot.lane.b32.xlu0 %v1442, 96
    %v1869 = vpop.permute.xlu0 %1868
    %1870 = vrot.lane.b32.xlu0 %v1644, 96
    %v1871 = vpop.permute.xlu0 %1870
    %1872 = vrot.lane.b32.xlu0 %v1646, 96
    %v1873 = vpop.permute.xlu0 %1872
    %1874 = vrot.lane.b32.xlu0 %v1645, 96
    %v1875 = vpop.permute.xlu0 %1874
    %1876 = vrot.lane.b32.xlu0 %v1649, 96
    %v1877 = vpop.permute.xlu0 %1876
    %1878 = vrot.lane.b32.xlu0 %v1651, 96
    %v1879 = vpop.permute.xlu0 %1878
    %1880 = vrot.lane.b32.xlu0 %v1650, 96
    %v1881 = vpop.permute.xlu0 %1880
    %1882 = vrot.lane.b32.xlu0 %v1837, 96
    %v1883 = vpop.permute.xlu0 %1882
    %1884 = vrot.lane.b32.xlu0 %v1839, 96
    %v1885 = vpop.permute.xlu0 %1884
    %1886 = vrot.lane.b32.xlu0 %v1838, 96
    %v1887 = vpop.permute.xlu0 %1886
    %v1914 = vrot.slane %v384, 7
    %v1915 = vrot.slane %v219, 7
    %v1916 = vsel %vm178, %v1914, %v1915
    %v1917 = vrot.slane %v400, 7
    %v1918 = vrot.slane %v267, 7
    %v1919 = vsel %vm178, %v1917, %v1918
    %1946 = vrot.lane.b32.xlu0 %v381, 32
    %v1947 = vpop.permute.xlu0 %1946
    %1948 = vrot.lane.b32.xlu0 %v210, 32
    %v1949 = vpop.permute.xlu0 %1948
    %1950 = vrot.lane.b32.xlu0 %v414, 32
    %v1951 = vpop.permute.xlu0 %1950
    %1952 = vrot.lane.b32.xlu0 %v382, 32
    %v1953 = vpop.permute.xlu0 %1952
    %1954 = vrot.lane.b32.xlu0 %v213, 32
    %v1955 = vpop.permute.xlu0 %1954
    %1956 = vrot.lane.b32.xlu0 %v415, 32
    %v1957 = vpop.permute.xlu0 %1956
    %1958 = vrot.lane.b32.xlu0 %v383, 32
    %v1959 = vpop.permute.xlu0 %1958
    %1960 = vrot.lane.b32.xlu0 %v216, 32
    %v1961 = vpop.permute.xlu0 %1960
    %1962 = vrot.lane.b32.xlu0 %v416, 32
    %v1963 = vpop.permute.xlu0 %1962
    %1964 = vrot.lane.b32.xlu0 %v384, 32
    %v1965 = vpop.permute.xlu0 %1964
    %1966 = vrot.lane.b32.xlu0 %v219, 32
    %v1967 = vpop.permute.xlu0 %1966
    %1968 = vrot.lane.b32.xlu0 %v417, 32
    %v1969 = vpop.permute.xlu0 %1968
    %1970 = vrot.lane.b32.xlu0 %v397, 32
    %v1971 = vpop.permute.xlu0 %1970
    %1972 = vrot.lane.b32.xlu0 %v258, 32
    %v1973 = vpop.permute.xlu0 %1972
    %1974 = vrot.lane.b32.xlu0 %v430, 32
    %v1975 = vpop.permute.xlu0 %1974
    %1976 = vrot.lane.b32.xlu0 %v398, 32
    %v1977 = vpop.permute.xlu0 %1976
    %1978 = vrot.lane.b32.xlu0 %v261, 32
    %v1979 = vpop.permute.xlu0 %1978
    %1980 = vrot.lane.b32.xlu0 %v431, 32
    %v1981 = vpop.permute.xlu0 %1980
    %1982 = vrot.lane.b32.xlu0 %v399, 32
    %v1983 = vpop.permute.xlu0 %1982
    %1984 = vrot.lane.b32.xlu0 %v264, 32
    %v1985 = vpop.permute.xlu0 %1984
    %1986 = vrot.lane.b32.xlu0 %v432, 32
    %v1987 = vpop.permute.xlu0 %1986
    %1988 = vrot.lane.b32.xlu0 %v400, 32
    %v1989 = vpop.permute.xlu0 %1988
    %1990 = vrot.lane.b32.xlu0 %v267, 32
    %v1991 = vpop.permute.xlu0 %1990
    %1992 = vrot.lane.b32.xlu0 %v433, 32
    %v1993 = vpop.permute.xlu0 %1992
    %v2018 = vrot.slane %v384, 1
    %v2019 = vrot.slane %v219, 1
    %v2020 = vsel %vm451, %v2018, %v2019
    %v2021 = vrot.slane %v417, 1
    %v2022 = vsel %vm451, %v2019, %v2021
    %v2023 = vrot.slane %v400, 1
    %v2024 = vrot.slane %v267, 1
    %v2025 = vsel %vm451, %v2023, %v2024
    %v2026 = vrot.slane %v433, 1
    %v2027 = vsel %vm451, %v2024, %v2026
    %2028 = vrot.lane.b32.xlu0 %v1634, 64
    %v2029 = vpop.permute.xlu0 %2028
    %2030 = vrot.lane.b32.xlu0 %v1636, 64
    %v2031 = vpop.permute.xlu0 %2030
    %2032 = vrot.lane.b32.xlu0 %v1635, 64
    %v2033 = vpop.permute.xlu0 %2032
    %2034 = vrot.lane.b32.xlu0 %v1639, 64
    %v2035 = vpop.permute.xlu0 %2034
    %2036 = vrot.lane.b32.xlu0 %v1641, 64
    %v2037 = vpop.permute.xlu0 %2036
    %2038 = vrot.lane.b32.xlu0 %v1640, 64
    %v2039 = vpop.permute.xlu0 %2038
    %2040 = vrot.lane.b32.xlu0 %v1832, 64
    %v2041 = vpop.permute.xlu0 %2040
    %2042 = vrot.lane.b32.xlu0 %v1834, 64
    %v2043 = vpop.permute.xlu0 %2042
    %2044 = vrot.lane.b32.xlu0 %v1833, 64
    %v2045 = vpop.permute.xlu0 %2044
    %2046 = vrot.lane.b32.xlu0 %v2020, 64
    %v2047 = vpop.permute.xlu0 %2046
    %2048 = vrot.lane.b32.xlu0 %v2022, 64
    %v2049 = vpop.permute.xlu0 %2048
    %2050 = vrot.lane.b32.xlu0 %v2021, 64
    %v2051 = vpop.permute.xlu0 %2050
    %2052 = vrot.lane.b32.xlu0 %v1644, 64
    %v2053 = vpop.permute.xlu0 %2052
    %2054 = vrot.lane.b32.xlu0 %v1646, 64
    %v2055 = vpop.permute.xlu0 %2054
    %2056 = vrot.lane.b32.xlu0 %v1645, 64
    %v2057 = vpop.permute.xlu0 %2056
    %2058 = vrot.lane.b32.xlu0 %v1649, 64
    %v2059 = vpop.permute.xlu0 %2058
    %2060 = vrot.lane.b32.xlu0 %v1651, 64
    %v2061 = vpop.permute.xlu0 %2060
    %2062 = vrot.lane.b32.xlu0 %v1650, 64
    %v2063 = vpop.permute.xlu0 %2062
    %2064 = vrot.lane.b32.xlu0 %v1837, 64
    %v2065 = vpop.permute.xlu0 %2064
    %2066 = vrot.lane.b32.xlu0 %v1839, 64
    %v2067 = vpop.permute.xlu0 %2066
    %2068 = vrot.lane.b32.xlu0 %v1838, 64
    %v2069 = vpop.permute.xlu0 %2068
    %2070 = vrot.lane.b32.xlu0 %v2025, 64
    %v2071 = vpop.permute.xlu0 %2070
    %2072 = vrot.lane.b32.xlu0 %v2027, 64
    %v2073 = vpop.permute.xlu0 %2072
    %2074 = vrot.lane.b32.xlu0 %v2026, 64
    %v2075 = vpop.permute.xlu0 %2074
    %v2104 = vrot.slane %v385, 7
    %v2105 = vrot.slane %v222, 7
    %v2106 = vsel %vm178, %v2104, %v2105
    %v2107 = vrot.slane %v386, 7
    %v2108 = vrot.slane %v225, 7
    %v2109 = vsel %vm178, %v2107, %v2108
    %v2110 = vrot.slane %v401, 7
    %v2111 = vrot.slane %v270, 7
    %v2112 = vsel %vm178, %v2110, %v2111
    %v2113 = vrot.slane %v402, 7
    %v2114 = vrot.slane %v273, 7
    %v2115 = vsel %vm178, %v2113, %v2114
    %2116 = vrot.lane.b32.xlu0 %v1678, 96
    %v2117 = vpop.permute.xlu0 %2116
    %2118 = vrot.lane.b32.xlu0 %v1680, 96
    %v2119 = vpop.permute.xlu0 %2118
    %2120 = vrot.lane.b32.xlu0 %v1679, 96
    %v2121 = vpop.permute.xlu0 %2120
    %2122 = vrot.lane.b32.xlu0 %v1914, 96
    %v2123 = vpop.permute.xlu0 %2122
    %2124 = vrot.lane.b32.xlu0 %v1916, 96
    %v2125 = vpop.permute.xlu0 %2124
    %2126 = vrot.lane.b32.xlu0 %v1915, 96
    %v2127 = vpop.permute.xlu0 %2126
    %2128 = vrot.lane.b32.xlu0 %v2104, 96
    %v2129 = vpop.permute.xlu0 %2128
    %2130 = vrot.lane.b32.xlu0 %v2106, 96
    %v2131 = vpop.permute.xlu0 %2130
    %2132 = vrot.lane.b32.xlu0 %v2105, 96
    %v2133 = vpop.permute.xlu0 %2132
    %2134 = vrot.lane.b32.xlu0 %v2107, 96
    %v2135 = vpop.permute.xlu0 %2134
    %2136 = vrot.lane.b32.xlu0 %v2109, 96
    %v2137 = vpop.permute.xlu0 %2136
    %2138 = vrot.lane.b32.xlu0 %v2108, 96
    %v2139 = vpop.permute.xlu0 %2138
    %2140 = vrot.lane.b32.xlu0 %v1681, 96
    %v2141 = vpop.permute.xlu0 %2140
    %2142 = vrot.lane.b32.xlu0 %v1683, 96
    %v2143 = vpop.permute.xlu0 %2142
    %2144 = vrot.lane.b32.xlu0 %v1682, 96
    %v2145 = vpop.permute.xlu0 %2144
    %2146 = vrot.lane.b32.xlu0 %v1917, 96
    %v2147 = vpop.permute.xlu0 %2146
    %2148 = vrot.lane.b32.xlu0 %v1919, 96
    %v2149 = vpop.permute.xlu0 %2148
    %2150 = vrot.lane.b32.xlu0 %v1918, 96
    %v2151 = vpop.permute.xlu0 %2150
    %2152 = vrot.lane.b32.xlu0 %v2110, 96
    %v2153 = vpop.permute.xlu0 %2152
    %2154 = vrot.lane.b32.xlu0 %v2112, 96
    %v2155 = vpop.permute.xlu0 %2154
    %2156 = vrot.lane.b32.xlu0 %v2111, 96
    %v2157 = vpop.permute.xlu0 %2156
    %2158 = vrot.lane.b32.xlu0 %v2113, 96
    %v2159 = vpop.permute.xlu0 %2158
    %2160 = vrot.lane.b32.xlu0 %v2115, 96
    %v2161 = vpop.permute.xlu0 %2160
    %2162 = vrot.lane.b32.xlu0 %v2114, 96
    %v2163 = vpop.permute.xlu0 %2162
    %v2192 = vrot.slane %v385, 1
    %v2193 = vrot.slane %v222, 1
    %v2194 = vsel %vm451, %v2192, %v2193
    %v2195 = vrot.slane %v418, 1
    %v2196 = vsel %vm451, %v2193, %v2195
    %v2197 = vrot.slane %v386, 1
    %v2198 = vrot.slane %v225, 1
    %v2199 = vsel %vm451, %v2197, %v2198
    %v2200 = vrot.slane %v419, 1
    %v2201 = vsel %vm451, %v2198, %v2200
    %v2202 = vrot.slane %v401, 1
    %v2203 = vrot.slane %v270, 1
    %v2204 = vsel %vm451, %v2202, %v2203
    %v2205 = vrot.slane %v434, 1
    %v2206 = vsel %vm451, %v2203, %v2205
    %v2207 = vrot.slane %v402, 1
    %v2208 = vrot.slane %v273, 1
    %v2209 = vsel %vm451, %v2207, %v2208
    %v2210 = vrot.slane %v435, 1
    %v2211 = vsel %vm451, %v2208, %v2210
    %2212 = vrot.lane.b32.xlu0 %v1832, 32
    %v2213 = vpop.permute.xlu0 %2212
    %2214 = vrot.lane.b32.xlu0 %v1834, 32
    %v2215 = vpop.permute.xlu0 %2214
    %2216 = vrot.lane.b32.xlu0 %v1833, 32
    %v2217 = vpop.permute.xlu0 %2216
    %2218 = vrot.lane.b32.xlu0 %v2020, 32
    %v2219 = vpop.permute.xlu0 %2218
    %2220 = vrot.lane.b32.xlu0 %v2022, 32
    %v2221 = vpop.permute.xlu0 %2220
    %2222 = vrot.lane.b32.xlu0 %v2021, 32
    %v2223 = vpop.permute.xlu0 %2222
    %2224 = vrot.lane.b32.xlu0 %v2194, 32
    %v2225 = vpop.permute.xlu0 %2224
    %2226 = vrot.lane.b32.xlu0 %v2196, 32
    %v2227 = vpop.permute.xlu0 %2226
    %2228 = vrot.lane.b32.xlu0 %v2195, 32
    %v2229 = vpop.permute.xlu0 %2228
    %2230 = vrot.lane.b32.xlu0 %v2199, 32
    %v2231 = vpop.permute.xlu0 %2230
    %2232 = vrot.lane.b32.xlu0 %v2201, 32
    %v2233 = vpop.permute.xlu0 %2232
    %2234 = vrot.lane.b32.xlu0 %v2200, 32
    %v2235 = vpop.permute.xlu0 %2234
    %2236 = vrot.lane.b32.xlu0 %v1837, 32
    %v2237 = vpop.permute.xlu0 %2236
    %2238 = vrot.lane.b32.xlu0 %v1839, 32
    %v2239 = vpop.permute.xlu0 %2238
    %2240 = vrot.lane.b32.xlu0 %v1838, 32
    %v2241 = vpop.permute.xlu0 %2240
    %2242 = vrot.lane.b32.xlu0 %v2025, 32
    %v2243 = vpop.permute.xlu0 %2242
    %2244 = vrot.lane.b32.xlu0 %v2027, 32
    %v2245 = vpop.permute.xlu0 %2244
    %2246 = vrot.lane.b32.xlu0 %v2026, 32
    %v2247 = vpop.permute.xlu0 %2246
    %2248 = vrot.lane.b32.xlu0 %v2204, 32
    %v2249 = vpop.permute.xlu0 %2248
    %2250 = vrot.lane.b32.xlu0 %v2206, 32
    %v2251 = vpop.permute.xlu0 %2250
    %2252 = vrot.lane.b32.xlu0 %v2205, 32
    %v2253 = vpop.permute.xlu0 %2252
    %2254 = vrot.lane.b32.xlu0 %v2209, 32
    %v2255 = vpop.permute.xlu0 %2254
    %2256 = vrot.lane.b32.xlu0 %v2211, 32
    %v2257 = vpop.permute.xlu0 %2256
    %2258 = vrot.lane.b32.xlu0 %v2210, 32
    %v2259 = vpop.permute.xlu0 %2258
    %v2286 = vrot.slane %v387, 7
    %v2287 = vrot.slane %v228, 7
    %v2288 = vsel %vm178, %v2286, %v2287
    %v2289 = vrot.slane %v403, 7
    %v2290 = vrot.slane %v276, 7
    %v2291 = vsel %vm178, %v2289, %v2290
    %2292 = vrot.lane.b32.xlu0 %v1914, 64
    %v2293 = vpop.permute.xlu0 %2292
    %2294 = vrot.lane.b32.xlu0 %v1916, 64
    %v2295 = vpop.permute.xlu0 %2294
    %2296 = vrot.lane.b32.xlu0 %v1915, 64
    %v2297 = vpop.permute.xlu0 %2296
    %2298 = vrot.lane.b32.xlu0 %v2104, 64
    %v2299 = vpop.permute.xlu0 %2298
    %2300 = vrot.lane.b32.xlu0 %v2106, 64
    %v2301 = vpop.permute.xlu0 %2300
    %2302 = vrot.lane.b32.xlu0 %v2105, 64
    %v2303 = vpop.permute.xlu0 %2302
    %2304 = vrot.lane.b32.xlu0 %v2107, 64
    %v2305 = vpop.permute.xlu0 %2304
    %2306 = vrot.lane.b32.xlu0 %v2109, 64
    %v2307 = vpop.permute.xlu0 %2306
    %2308 = vrot.lane.b32.xlu0 %v2108, 64
    %v2309 = vpop.permute.xlu0 %2308
    %2310 = vrot.lane.b32.xlu0 %v2286, 64
    %v2311 = vpop.permute.xlu0 %2310
    %2312 = vrot.lane.b32.xlu0 %v2288, 64
    %v2313 = vpop.permute.xlu0 %2312
    %2314 = vrot.lane.b32.xlu0 %v2287, 64
    %v2315 = vpop.permute.xlu0 %2314
    %2316 = vrot.lane.b32.xlu0 %v1917, 64
    %v2317 = vpop.permute.xlu0 %2316
    %2318 = vrot.lane.b32.xlu0 %v1919, 64
    %v2319 = vpop.permute.xlu0 %2318
    %2320 = vrot.lane.b32.xlu0 %v1918, 64
    %v2321 = vpop.permute.xlu0 %2320
    %2322 = vrot.lane.b32.xlu0 %v2110, 64
    %v2323 = vpop.permute.xlu0 %2322
    %2324 = vrot.lane.b32.xlu0 %v2112, 64
    %v2325 = vpop.permute.xlu0 %2324
    %2326 = vrot.lane.b32.xlu0 %v2111, 64
    %v2327 = vpop.permute.xlu0 %2326
    %2328 = vrot.lane.b32.xlu0 %v2113, 64
    %v2329 = vpop.permute.xlu0 %2328
    %2330 = vrot.lane.b32.xlu0 %v2115, 64
    %v2331 = vpop.permute.xlu0 %2330
    %2332 = vrot.lane.b32.xlu0 %v2114, 64
    %v2333 = vpop.permute.xlu0 %2332
    %2334 = vrot.lane.b32.xlu0 %v2289, 64
    %v2335 = vpop.permute.xlu0 %2334
    %2336 = vrot.lane.b32.xlu0 %v2291, 64
    %v2337 = vpop.permute.xlu0 %2336
    %2338 = vrot.lane.b32.xlu0 %v2290, 64
    %v2339 = vpop.permute.xlu0 %2338
    %2366 = vrot.lane.b32.xlu0 %v384, 96
    %v2367 = vpop.permute.xlu0 %2366
    %2368 = vrot.lane.b32.xlu0 %v219, 96
    %v2369 = vpop.permute.xlu0 %2368
    %2370 = vrot.lane.b32.xlu0 %v417, 96
    %v2371 = vpop.permute.xlu0 %2370
    %2372 = vrot.lane.b32.xlu0 %v385, 96
    %v2373 = vpop.permute.xlu0 %2372
    %2374 = vrot.lane.b32.xlu0 %v222, 96
    %v2375 = vpop.permute.xlu0 %2374
    %2376 = vrot.lane.b32.xlu0 %v418, 96
    %v2377 = vpop.permute.xlu0 %2376
    %2378 = vrot.lane.b32.xlu0 %v386, 96
    %v2379 = vpop.permute.xlu0 %2378
    %2380 = vrot.lane.b32.xlu0 %v225, 96
    %v2381 = vpop.permute.xlu0 %2380
    %2382 = vrot.lane.b32.xlu0 %v419, 96
    %v2383 = vpop.permute.xlu0 %2382
    %2384 = vrot.lane.b32.xlu0 %v387, 96
    %v2385 = vpop.permute.xlu0 %2384
    %2386 = vrot.lane.b32.xlu0 %v228, 96
    %v2387 = vpop.permute.xlu0 %2386
    %2388 = vrot.lane.b32.xlu0 %v420, 96
    %v2389 = vpop.permute.xlu0 %2388
    %2390 = vrot.lane.b32.xlu0 %v400, 96
    %v2391 = vpop.permute.xlu0 %2390
    %2392 = vrot.lane.b32.xlu0 %v267, 96
    %v2393 = vpop.permute.xlu0 %2392
    %2394 = vrot.lane.b32.xlu0 %v433, 96
    %v2395 = vpop.permute.xlu0 %2394
    %2396 = vrot.lane.b32.xlu0 %v401, 96
    %v2397 = vpop.permute.xlu0 %2396
    %2398 = vrot.lane.b32.xlu0 %v270, 96
    %v2399 = vpop.permute.xlu0 %2398
    %2400 = vrot.lane.b32.xlu0 %v434, 96
    %v2401 = vpop.permute.xlu0 %2400
    %2402 = vrot.lane.b32.xlu0 %v402, 96
    %v2403 = vpop.permute.xlu0 %2402
    %2404 = vrot.lane.b32.xlu0 %v273, 96
    %v2405 = vpop.permute.xlu0 %2404
    %2406 = vrot.lane.b32.xlu0 %v435, 96
    %v2407 = vpop.permute.xlu0 %2406
    %2408 = vrot.lane.b32.xlu0 %v403, 96
    %v2409 = vpop.permute.xlu0 %2408
    %2410 = vrot.lane.b32.xlu0 %v276, 96
    %v2411 = vpop.permute.xlu0 %2410
    %2412 = vrot.lane.b32.xlu0 %v436, 96
    %v2413 = vpop.permute.xlu0 %2412
    %v2438 = vsel %vm1241, %v410, %v1445
    %v2439 = vsel %vm1241, %v411, %v1447
    %v2440 = vsel %vm1241, %v412, %v1449
    %v2441 = vsel %vm1241, %v380, %v1451
    %v2442 = vsel %vm1241, %v207, %v1453
    %v2443 = vsel %vm1241, %v413, %v1455
    %v2444 = vsel %vm1241, %v426, %v1457
    %v2445 = vsel %vm1241, %v427, %v1459
    %v2446 = vsel %vm1241, %v428, %v1461
    %v2447 = vsel %vm1241, %v396, %v1463
    %v2448 = vsel %vm1241, %v255, %v1465
    %v2449 = vsel %vm1241, %v429, %v1467
    %v2450 = vsel %vm1256, %v1386, %v1509
    %v2451 = vsel %vm1256, %v1387, %v1511
    %v2452 = vsel %vm1256, %v2438, %v1513
    %v2453 = vsel %vm1256, %v1388, %v1515
    %v2454 = vsel %vm1256, %v1389, %v1517
    %v2455 = vsel %vm1256, %v2439, %v1519
    %v2456 = vsel %vm1256, %v1390, %v1521
    %v2457 = vsel %vm1256, %v1391, %v1523
    %v2458 = vsel %vm1256, %v2440, %v1525
    %v2459 = vsel %vm1256, %v2441, %v1527
    %v2460 = vsel %vm1256, %v2442, %v1529
    %v2461 = vsel %vm1256, %v2443, %v1531
    %v2462 = vsel %vm1256, %v1394, %v1533
    %v2463 = vsel %vm1256, %v1395, %v1535
    %v2464 = vsel %vm1256, %v2444, %v1537
    %v2465 = vsel %vm1256, %v1396, %v1539
    %v2466 = vsel %vm1256, %v1397, %v1541
    %v2467 = vsel %vm1256, %v2445, %v1543
    %v2468 = vsel %vm1256, %v1398, %v1545
    %v2469 = vsel %vm1256, %v1399, %v1547
    %v2470 = vsel %vm1256, %v2446, %v1549
    %v2471 = vsel %vm1256, %v2447, %v1551
    %v2472 = vsel %vm1256, %v2448, %v1553
    %v2473 = vsel %vm1256, %v2449, %v1555
    %v2474 = vsel %vm1271, %v2450, %v1202
    %v2475 = vsel %vm1271, %v2451, %v1204
    %v2476 = vsel %vm1271, %v2452, %v1585
    %v2477 = vsel %vm1271, %v2453, %v1206
    %v2478 = vsel %vm1271, %v2454, %v1208
    %v2479 = vsel %vm1271, %v2455, %v1587
    %v2480 = vsel %vm1271, %v2456, %v1589
    %v2481 = vsel %vm1271, %v2457, %v1591
    %v2482 = vsel %vm1271, %v2458, %v1593
    %v2483 = vsel %vm1271, %v2459, %v1595
    %v2484 = vsel %vm1271, %v2460, %v1597
    %v2485 = vsel %vm1271, %v2461, %v1599
    %v2486 = vsel %vm1271, %v2462, %v1218
    %v2487 = vsel %vm1271, %v2463, %v1220
    %v2488 = vsel %vm1271, %v2464, %v1601
    %v2489 = vsel %vm1271, %v2465, %v1222
    %v2490 = vsel %vm1271, %v2466, %v1224
    %v2491 = vsel %vm1271, %v2467, %v1603
    %v2492 = vsel %vm1271, %v2468, %v1605
    %v2493 = vsel %vm1271, %v2469, %v1607
    %v2494 = vsel %vm1271, %v2470, %v1609
    %v2495 = vsel %vm1271, %v2471, %v1611
    %v2496 = vsel %vm1271, %v2472, %v1613
    %v2497 = vsel %vm1271, %v2473, %v1615
    %v2498 = vsel %vm1241, %v1077, %v1685
    %v2499 = vsel %vm1241, %v1079, %v1687
    %v2500 = vsel %vm1241, %v1078, %v1689
    %v2501 = vsel %vm1241, %v1436, %v1691
    %v2502 = vsel %vm1241, %v1438, %v1693
    %v2503 = vsel %vm1241, %v1437, %v1695
    %v2504 = vsel %vm1241, %v1634, %v1697
    %v2505 = vsel %vm1241, %v1636, %v1699
    %v2506 = vsel %vm1241, %v1635, %v1701
    %v2507 = vsel %vm1241, %v1639, %v1703
    %v2508 = vsel %vm1241, %v1641, %v1705
    %v2509 = vsel %vm1241, %v1640, %v1707
    %v2510 = vsel %vm1241, %v1082, %v1709
    %v2511 = vsel %vm1241, %v1084, %v1711
    %v2512 = vsel %vm1241, %v1083, %v1713
    %v2513 = vsel %vm1241, %v1441, %v1715
    %v2514 = vsel %vm1241, %v1443, %v1717
    %v2515 = vsel %vm1241, %v1442, %v1719
    %v2516 = vsel %vm1241, %v1644, %v1721
    %v2517 = vsel %vm1241, %v1646, %v1723
    %v2518 = vsel %vm1241, %v1645, %v1725
    %v2519 = vsel %vm1241, %v1649, %v1727
    %v2520 = vsel %vm1241, %v1651, %v1729
    %v2521 = vsel %vm1241, %v1650, %v1731
    %v2522 = vsel %vm1256, %v2498, %v1759
    %v2523 = vsel %vm1256, %v2499, %v1761
    %v2524 = vsel %vm1256, %v2500, %v1763
    %v2525 = vsel %vm1256, %v2501, %v1765
    %v2526 = vsel %vm1256, %v2502, %v1767
    %v2527 = vsel %vm1256, %v2503, %v1769
    %v2528 = vsel %vm1256, %v2504, %v1771
    %v2529 = vsel %vm1256, %v2505, %v1773
    %v2530 = vsel %vm1256, %v2506, %v1775
    %v2531 = vsel %vm1256, %v2507, %v1777
    %v2532 = vsel %vm1256, %v2508, %v1779
    %v2533 = vsel %vm1256, %v2509, %v1781
    %v2534 = vsel %vm1256, %v2510, %v1783
    %v2535 = vsel %vm1256, %v2511, %v1785
    %v2536 = vsel %vm1256, %v2512, %v1787
    %v2537 = vsel %vm1256, %v2513, %v1789
    %v2538 = vsel %vm1256, %v2514, %v1791
    %v2539 = vsel %vm1256, %v2515, %v1793
    %v2540 = vsel %vm1256, %v2516, %v1795
    %v2541 = vsel %vm1256, %v2517, %v1797
    %v2542 = vsel %vm1256, %v2518, %v1799
    %v2543 = vsel %vm1256, %v2519, %v1801
    %v2544 = vsel %vm1256, %v2520, %v1803
    %v2545 = vsel %vm1256, %v2521, %v1805
    %v2546 = vsel %vm1271, %v2522, %v1841
    %v2547 = vsel %vm1271, %v2523, %v1843
    %v2548 = vsel %vm1271, %v2524, %v1845
    %v2549 = vsel %vm1271, %v2525, %v1847
    %v2550 = vsel %vm1271, %v2526, %v1849
    %v2551 = vsel %vm1271, %v2527, %v1851
    %v2552 = vsel %vm1271, %v2528, %v1853
    %v2553 = vsel %vm1271, %v2529, %v1855
    %v2554 = vsel %vm1271, %v2530, %v1857
    %v2555 = vsel %vm1271, %v2531, %v1859
    %v2556 = vsel %vm1271, %v2532, %v1861
    %v2557 = vsel %vm1271, %v2533, %v1863
    %v2558 = vsel %vm1271, %v2534, %v1865
    %v2559 = vsel %vm1271, %v2535, %v1867
    %v2560 = vsel %vm1271, %v2536, %v1869
    %v2561 = vsel %vm1271, %v2537, %v1871
    %v2562 = vsel %vm1271, %v2538, %v1873
    %v2563 = vsel %vm1271, %v2539, %v1875
    %v2564 = vsel %vm1271, %v2540, %v1877
    %v2565 = vsel %vm1271, %v2541, %v1879
    %v2566 = vsel %vm1271, %v2542, %v1881
    %v2567 = vsel %vm1271, %v2543, %v1883
    %v2568 = vsel %vm1271, %v2544, %v1885
    %v2569 = vsel %vm1271, %v2545, %v1887
    %v2570 = vsel %vm1241, %v1490, %v1947
    %v2571 = vsel %vm1241, %v1492, %v1949
    %v2572 = vsel %vm1241, %v1491, %v1951
    %v2573 = vsel %vm1241, %v1493, %v1953
    %v2574 = vsel %vm1241, %v1495, %v1955
    %v2575 = vsel %vm1241, %v1494, %v1957
    %v2576 = vsel %vm1241, %v1678, %v1959
    %v2577 = vsel %vm1241, %v1680, %v1961
    %v2578 = vsel %vm1241, %v1679, %v1963
    %v2579 = vsel %vm1241, %v1914, %v1965
    %v2580 = vsel %vm1241, %v1916, %v1967
    %v2581 = vsel %vm1241, %v1915, %v1969
    %v2582 = vsel %vm1241, %v1502, %v1971
    %v2583 = vsel %vm1241, %v1504, %v1973
    %v2584 = vsel %vm1241, %v1503, %v1975
    %v2585 = vsel %vm1241, %v1505, %v1977
    %v2586 = vsel %vm1241, %v1507, %v1979
    %v2587 = vsel %vm1241, %v1506, %v1981
    %v2588 = vsel %vm1241, %v1681, %v1983
    %v2589 = vsel %vm1241, %v1683, %v1985
    %v2590 = vsel %vm1241, %v1682, %v1987
    %v2591 = vsel %vm1241, %v1917, %v1989
    %v2592 = vsel %vm1241, %v1919, %v1991
    %v2593 = vsel %vm1241, %v1918, %v1993
    %v2594 = vsel %vm1256, %v2570, %v2029
    %v2595 = vsel %vm1256, %v2571, %v2031
    %v2596 = vsel %vm1256, %v2572, %v2033
    %v2597 = vsel %vm1256, %v2573, %v2035
    %v2598 = vsel %vm1256, %v2574, %v2037
    %v2599 = vsel %vm1256, %v2575, %v2039
    %v2600 = vsel %vm1256, %v2576, %v2041
    %v2601 = vsel %vm1256, %v2577, %v2043
    %v2602 = vsel %vm1256, %v2578, %v2045
    %v2603 = vsel %vm1256, %v2579, %v2047
    %v2604 = vsel %vm1256, %v2580, %v2049
    %v2605 = vsel %vm1256, %v2581, %v2051
    %v2606 = vsel %vm1256, %v2582, %v2053
    %v2607 = vsel %vm1256, %v2583, %v2055
    %v2608 = vsel %vm1256, %v2584, %v2057
    %v2609 = vsel %vm1256, %v2585, %v2059
    %v2610 = vsel %vm1256, %v2586, %v2061
    %v2611 = vsel %vm1256, %v2587, %v2063
    %v2612 = vsel %vm1256, %v2588, %v2065
    %v2613 = vsel %vm1256, %v2589, %v2067
    %v2614 = vsel %vm1256, %v2590, %v2069
    %v2615 = vsel %vm1256, %v2591, %v2071
    %v2616 = vsel %vm1256, %v2592, %v2073
    %v2617 = vsel %vm1256, %v2593, %v2075
    %v2618 = vsel %vm1271, %v2594, %v2117
    %v2619 = vsel %vm1271, %v2595, %v2119
    %v2620 = vsel %vm1271, %v2596, %v2121
    %v2621 = vsel %vm1271, %v2597, %v2123
    %v2622 = vsel %vm1271, %v2598, %v2125
    %v2623 = vsel %vm1271, %v2599, %v2127
    %v2624 = vsel %vm1271, %v2600, %v2129
    %v2625 = vsel %vm1271, %v2601, %v2131
    %v2626 = vsel %vm1271, %v2602, %v2133
    %v2627 = vsel %vm1271, %v2603, %v2135
    %v2628 = vsel %vm1271, %v2604, %v2137
    %v2629 = vsel %vm1271, %v2605, %v2139
    %v2630 = vsel %vm1271, %v2606, %v2141
    %v2631 = vsel %vm1271, %v2607, %v2143
    %v2632 = vsel %vm1271, %v2608, %v2145
    %v2633 = vsel %vm1271, %v2609, %v2147
    %v2634 = vsel %vm1271, %v2610, %v2149
    %v2635 = vsel %vm1271, %v2611, %v2151
    %v2636 = vsel %vm1271, %v2612, %v2153
    %v2637 = vsel %vm1271, %v2613, %v2155
    %v2638 = vsel %vm1271, %v2614, %v2157
    %v2639 = vsel %vm1271, %v2615, %v2159
    %v2640 = vsel %vm1271, %v2616, %v2161
    %v2641 = vsel %vm1271, %v2617, %v2163
    %v2642 = vsel %vm1241, %v383, %v2213
    %v2643 = vsel %vm1241, %v216, %v2215
    %v2644 = vsel %vm1241, %v416, %v2217
    %v2645 = vsel %vm1241, %v384, %v2219
    %v2646 = vsel %vm1241, %v219, %v2221
    %v2647 = vsel %vm1241, %v417, %v2223
    %v2648 = vsel %vm1241, %v385, %v2225
    %v2649 = vsel %vm1241, %v222, %v2227
    %v2650 = vsel %vm1241, %v418, %v2229
    %v2651 = vsel %vm1241, %v386, %v2231
    %v2652 = vsel %vm1241, %v225, %v2233
    %v2653 = vsel %vm1241, %v419, %v2235
    %v2654 = vsel %vm1241, %v399, %v2237
    %v2655 = vsel %vm1241, %v264, %v2239
    %v2656 = vsel %vm1241, %v432, %v2241
    %v2657 = vsel %vm1241, %v400, %v2243
    %v2658 = vsel %vm1241, %v267, %v2245
    %v2659 = vsel %vm1241, %v433, %v2247
    %v2660 = vsel %vm1241, %v401, %v2249
    %v2661 = vsel %vm1241, %v270, %v2251
    %v2662 = vsel %vm1241, %v434, %v2253
    %v2663 = vsel %vm1241, %v402, %v2255
    %v2664 = vsel %vm1241, %v273, %v2257
    %v2665 = vsel %vm1241, %v435, %v2259
    %v2666 = vsel %vm1256, %v2642, %v2293
    %v2667 = vsel %vm1256, %v2643, %v2295
    %v2668 = vsel %vm1256, %v2644, %v2297
    %v2669 = vsel %vm1256, %v2645, %v2299
    %v2670 = vsel %vm1256, %v2646, %v2301
    %v2671 = vsel %vm1256, %v2647, %v2303
    %v2672 = vsel %vm1256, %v2648, %v2305
    %v2673 = vsel %vm1256, %v2649, %v2307
    %v2674 = vsel %vm1256, %v2650, %v2309
    %v2675 = vsel %vm1256, %v2651, %v2311
    %v2676 = vsel %vm1256, %v2652, %v2313
    %v2677 = vsel %vm1256, %v2653, %v2315
    %v2678 = vsel %vm1256, %v2654, %v2317
    %v2679 = vsel %vm1256, %v2655, %v2319
    %v2680 = vsel %vm1256, %v2656, %v2321
    %v2681 = vsel %vm1256, %v2657, %v2323
    %v2682 = vsel %vm1256, %v2658, %v2325
    %v2683 = vsel %vm1256, %v2659, %v2327
    %v2684 = vsel %vm1256, %v2660, %v2329
    %v2685 = vsel %vm1256, %v2661, %v2331
    %v2686 = vsel %vm1256, %v2662, %v2333
    %v2687 = vsel %vm1256, %v2663, %v2335
    %v2688 = vsel %vm1256, %v2664, %v2337
    %v2689 = vsel %vm1256, %v2665, %v2339
    %v2690 = vsel %vm1271, %v2666, %v2367
    %v2691 = vsel %vm1271, %v2667, %v2369
    %v2692 = vsel %vm1271, %v2668, %v2371
    %v2693 = vsel %vm1271, %v2669, %v2373
    %v2694 = vsel %vm1271, %v2670, %v2375
    %v2695 = vsel %vm1271, %v2671, %v2377
    %v2696 = vsel %vm1271, %v2672, %v2379
    %v2697 = vsel %vm1271, %v2673, %v2381
    %v2698 = vsel %vm1271, %v2674, %v2383
    %v2699 = vsel %vm1271, %v2675, %v2385
    %v2700 = vsel %vm1271, %v2676, %v2387
    %v2701 = vsel %vm1271, %v2677, %v2389
    %v2702 = vsel %vm1271, %v2678, %v2391
    %v2703 = vsel %vm1271, %v2679, %v2393
    %v2704 = vsel %vm1271, %v2680, %v2395
    %v2705 = vsel %vm1271, %v2681, %v2397
    %v2706 = vsel %vm1271, %v2682, %v2399
    %v2707 = vsel %vm1271, %v2683, %v2401
    %v2708 = vsel %vm1271, %v2684, %v2403
    %v2709 = vsel %vm1271, %v2685, %v2405
    %v2710 = vsel %vm1271, %v2686, %v2407
    %v2711 = vsel %vm1271, %v2687, %v2409
    %v2712 = vsel %vm1271, %v2688, %v2411
    %v2713 = vsel %vm1271, %v2689, %v2413
    %vm2714 = vcmask 1041408
    %v2715 = vrot.slane %v385, 6
    %v2716 = vrot.slane %v222, 6
    %v2717 = vsel %vm2714, %v2715, %v2716
    %v2718 = vrot.slane %v386, 6
    %v2719 = vrot.slane %v225, 6
    %v2720 = vsel %vm2714, %v2718, %v2719
    %v2721 = vrot.slane %v387, 6
    %v2722 = vrot.slane %v228, 6
    %v2723 = vsel %vm2714, %v2721, %v2722
    %v2724 = vrot.slane %v371, 6
    %v2725 = vrot.slane %v180, 6
    %v2726 = vsel %vm2714, %v2724, %v2725
    %v2727 = vrot.slane %v401, 6
    %v2728 = vrot.slane %v270, 6
    %v2729 = vsel %vm2714, %v2727, %v2728
    %v2730 = vrot.slane %v402, 6
    %v2731 = vrot.slane %v273, 6
    %v2732 = vsel %vm2714, %v2730, %v2731
    %v2733 = vrot.slane %v403, 6
    %v2734 = vrot.slane %v276, 6
    %v2735 = vsel %vm2714, %v2733, %v2734
    %2736 = vrot.lane.b32.xlu0 %v2715, 32
    %v2737 = vpop.permute.xlu0 %2736
    %2738 = vrot.lane.b32.xlu0 %v2717, 32
    %v2739 = vpop.permute.xlu0 %2738
    %2740 = vrot.lane.b32.xlu0 %v2716, 32
    %v2741 = vpop.permute.xlu0 %2740
    %2742 = vrot.lane.b32.xlu0 %v2718, 32
    %v2743 = vpop.permute.xlu0 %2742
    %2744 = vrot.lane.b32.xlu0 %v2720, 32
    %v2745 = vpop.permute.xlu0 %2744
    %2746 = vrot.lane.b32.xlu0 %v2719, 32
    %v2747 = vpop.permute.xlu0 %2746
    %2748 = vrot.lane.b32.xlu0 %v2721, 32
    %v2749 = vpop.permute.xlu0 %2748
    %2750 = vrot.lane.b32.xlu0 %v2723, 32
    %v2751 = vpop.permute.xlu0 %2750
    %2752 = vrot.lane.b32.xlu0 %v2722, 32
    %v2753 = vpop.permute.xlu0 %2752
    %2754 = vrot.lane.b32.xlu0 %v2724, 32
    %v2755 = vpop.permute.xlu0 %2754
    %2756 = vrot.lane.b32.xlu0 %v2726, 32
    %v2757 = vpop.permute.xlu0 %2756
    %2758 = vrot.lane.b32.xlu0 %v2725, 32
    %v2759 = vpop.permute.xlu0 %2758
    %2760 = vrot.lane.b32.xlu0 %v2727, 32
    %v2761 = vpop.permute.xlu0 %2760
    %2762 = vrot.lane.b32.xlu0 %v2729, 32
    %v2763 = vpop.permute.xlu0 %2762
    %2764 = vrot.lane.b32.xlu0 %v2728, 32
    %v2765 = vpop.permute.xlu0 %2764
    %2766 = vrot.lane.b32.xlu0 %v2730, 32
    %v2767 = vpop.permute.xlu0 %2766
    %2768 = vrot.lane.b32.xlu0 %v2732, 32
    %v2769 = vpop.permute.xlu0 %2768
    %2770 = vrot.lane.b32.xlu0 %v2731, 32
    %v2771 = vpop.permute.xlu0 %2770
    %2772 = vrot.lane.b32.xlu0 %v2733, 32
    %v2773 = vpop.permute.xlu0 %2772
    %2774 = vrot.lane.b32.xlu0 %v2735, 32
    %v2775 = vpop.permute.xlu0 %2774
    %2776 = vrot.lane.b32.xlu0 %v2734, 32
    %v2777 = vpop.permute.xlu0 %2776
    %v2799 = vrot.slane %v418, 7
    %v2800 = vsel %vm178, %v2105, %v2799
    %v2801 = vrot.slane %v419, 7
    %v2802 = vsel %vm178, %v2108, %v2801
    %v2803 = vrot.slane %v420, 7
    %v2804 = vsel %vm178, %v2287, %v2803
    %v2805 = vrot.slane %v371, 7
    %v2806 = vrot.slane %v180, 7
    %v2807 = vsel %vm178, %v2805, %v2806
    %v2808 = vrot.slane %v404, 7
    %v2809 = vsel %vm178, %v2806, %v2808
    %v2810 = vrot.slane %v434, 7
    %v2811 = vsel %vm178, %v2111, %v2810
    %v2812 = vrot.slane %v435, 7
    %v2813 = vsel %vm178, %v2114, %v2812
    %v2814 = vrot.slane %v436, 7
    %v2815 = vsel %vm178, %v2290, %v2814
    %2816 = vrot.lane.b32.xlu0 %v2800, 64
    %v2817 = vpop.permute.xlu0 %2816
    %2818 = vrot.lane.b32.xlu0 %v2802, 64
    %v2819 = vpop.permute.xlu0 %2818
    %2820 = vrot.lane.b32.xlu0 %v2804, 64
    %v2821 = vpop.permute.xlu0 %2820
    %2822 = vrot.lane.b32.xlu0 %v2805, 64
    %v2823 = vpop.permute.xlu0 %2822
    %2824 = vrot.lane.b32.xlu0 %v2807, 64
    %v2825 = vpop.permute.xlu0 %2824
    %2826 = vrot.lane.b32.xlu0 %v2809, 64
    %v2827 = vpop.permute.xlu0 %2826
    %2828 = vrot.lane.b32.xlu0 %v2811, 64
    %v2829 = vpop.permute.xlu0 %2828
    %2830 = vrot.lane.b32.xlu0 %v2813, 64
    %v2831 = vpop.permute.xlu0 %2830
    %2832 = vrot.lane.b32.xlu0 %v2815, 64
    %v2833 = vpop.permute.xlu0 %2832
    %2843 = vrot.lane.b32.xlu0 %v371, 96
    %v2844 = vpop.permute.xlu0 %2843
    %2845 = vrot.lane.b32.xlu0 %v180, 96
    %v2846 = vpop.permute.xlu0 %2845
    %2847 = vrot.lane.b32.xlu0 %v404, 96
    %v2848 = vpop.permute.xlu0 %2847
    %v2852 = vsel %vm1241, %v384, %v2737
    %v2853 = vsel %vm1241, %v219, %v2739
    %v2854 = vsel %vm1241, %v417, %v2741
    %v2855 = vsel %vm1241, %v385, %v2743
    %v2856 = vsel %vm1241, %v222, %v2745
    %v2857 = vsel %vm1241, %v418, %v2747
    %v2858 = vsel %vm1241, %v386, %v2749
    %v2859 = vsel %vm1241, %v225, %v2751
    %v2860 = vsel %vm1241, %v419, %v2753
    %v2861 = vsel %vm1241, %v387, %v2755
    %v2862 = vsel %vm1241, %v228, %v2757
    %v2863 = vsel %vm1241, %v420, %v2759
    %v2864 = vsel %vm1241, %v400, %v2761
    %v2865 = vsel %vm1241, %v267, %v2763
    %v2866 = vsel %vm1241, %v433, %v2765
    %v2867 = vsel %vm1241, %v401, %v2767
    %v2868 = vsel %vm1241, %v270, %v2769
    %v2869 = vsel %vm1241, %v434, %v2771
    %v2870 = vsel %vm1241, %v402, %v2773
    %v2871 = vsel %vm1241, %v273, %v2775
    %v2872 = vsel %vm1241, %v435, %v2777
    %v2873 = vsel %vm1241, %v403, %v2755
    %v2874 = vsel %vm1241, %v276, %v2757
    %v2875 = vsel %vm1241, %v436, %v2759
    %v2876 = vsel %vm1256, %v2852, %v2299
    %v2877 = vsel %vm1256, %v2853, %v2301
    %v2878 = vsel %vm1256, %v2854, %v2817
    %v2879 = vsel %vm1256, %v2855, %v2305
    %v2880 = vsel %vm1256, %v2856, %v2307
    %v2881 = vsel %vm1256, %v2857, %v2819
    %v2882 = vsel %vm1256, %v2858, %v2311
    %v2883 = vsel %vm1256, %v2859, %v2313
    %v2884 = vsel %vm1256, %v2860, %v2821
    %v2885 = vsel %vm1256, %v2861, %v2823
    %v2886 = vsel %vm1256, %v2862, %v2825
    %v2887 = vsel %vm1256, %v2863, %v2827
    %v2888 = vsel %vm1256, %v2864, %v2323
    %v2889 = vsel %vm1256, %v2865, %v2325
    %v2890 = vsel %vm1256, %v2866, %v2829
    %v2891 = vsel %vm1256, %v2867, %v2329
    %v2892 = vsel %vm1256, %v2868, %v2331
    %v2893 = vsel %vm1256, %v2869, %v2831
    %v2894 = vsel %vm1256, %v2870, %v2335
    %v2895 = vsel %vm1256, %v2871, %v2337
    %v2896 = vsel %vm1256, %v2872, %v2833
    %v2897 = vsel %vm1256, %v2873, %v2823
    %v2898 = vsel %vm1256, %v2874, %v2825
    %v2899 = vsel %vm1256, %v2875, %v2827
    %v2900 = vsel %vm1271, %v2876, %v2373
    %v2901 = vsel %vm1271, %v2877, %v2375
    %v2902 = vsel %vm1271, %v2878, %v2377
    %v2903 = vsel %vm1271, %v2879, %v2379
    %v2904 = vsel %vm1271, %v2880, %v2381
    %v2905 = vsel %vm1271, %v2881, %v2383
    %v2906 = vsel %vm1271, %v2882, %v2385
    %v2907 = vsel %vm1271, %v2883, %v2387
    %v2908 = vsel %vm1271, %v2884, %v2389
    %v2909 = vsel %vm1271, %v2885, %v2844
    %v2910 = vsel %vm1271, %v2886, %v2846
    %v2911 = vsel %vm1271, %v2887, %v2848
    %v2912 = vsel %vm1271, %v2888, %v2397
    %v2913 = vsel %vm1271, %v2889, %v2399
    %v2914 = vsel %vm1271, %v2890, %v2401
    %v2915 = vsel %vm1271, %v2891, %v2403
    %v2916 = vsel %vm1271, %v2892, %v2405
    %v2917 = vsel %vm1271, %v2893, %v2407
    %v2918 = vsel %vm1271, %v2894, %v2409
    %v2919 = vsel %vm1271, %v2895, %v2411
    %v2920 = vsel %vm1271, %v2896, %v2413
    %v2921 = vsel %vm1271, %v2897, %v2844
    %v2922 = vsel %vm1271, %v2898, %v2846
    %v2923 = vsel %vm1271, %v2899, %v2848
    %v3020 = vrot.slane %v2474, 1
    %v3021 = vrot.slane %v2475, 1
    %v3022 = vsel %vm451, %v3020, %v3021
    %v3023 = vrot.slane %v2546, 1
    %v3024 = vrot.slane %v2547, 1
    %v3025 = vsel %vm451, %v3023, %v3024
    %v3026 = vrot.slane %v2618, 1
    %v3027 = vrot.slane %v2619, 1
    %v3028 = vsel %vm451, %v3026, %v3027
    %v3029 = vrot.slane %v2690, 1
    %v3030 = vrot.slane %v2691, 1
    %v3031 = vsel %vm451, %v3029, %v3030
    %v3032 = vrot.slane %v2476, 1
    %v3033 = vsel %vm451, %v3021, %v3032
    %v3034 = vrot.slane %v2548, 1
    %v3035 = vsel %vm451, %v3024, %v3034
    %v3036 = vrot.slane %v2620, 1
    %v3037 = vsel %vm451, %v3027, %v3036
    %v3038 = vrot.slane %v2692, 1
    %v3039 = vsel %vm451, %v3030, %v3038
    %v3040 = vrot.slane %v2477, 1
    %v3041 = vrot.slane %v2478, 1
    %v3042 = vsel %vm451, %v3040, %v3041
    %v3043 = vrot.slane %v2549, 1
    %v3044 = vrot.slane %v2550, 1
    %v3045 = vsel %vm451, %v3043, %v3044
    %v3046 = vrot.slane %v2621, 1
    %v3047 = vrot.slane %v2622, 1
    %v3048 = vsel %vm451, %v3046, %v3047
    %v3049 = vrot.slane %v2693, 1
    %v3050 = vrot.slane %v2694, 1
    %v3051 = vsel %vm451, %v3049, %v3050
    %v3052 = vrot.slane %v2479, 1
    %v3053 = vsel %vm451, %v3041, %v3052
    %v3054 = vrot.slane %v2551, 1
    %v3055 = vsel %vm451, %v3044, %v3054
    %v3056 = vrot.slane %v2623, 1
    %v3057 = vsel %vm451, %v3047, %v3056
    %v3058 = vrot.slane %v2695, 1
    %v3059 = vsel %vm451, %v3050, %v3058
    %v3060 = vrot.slane %v2480, 1
    %v3061 = vrot.slane %v2481, 1
    %v3062 = vsel %vm451, %v3060, %v3061
    %v3063 = vrot.slane %v2552, 1
    %v3064 = vrot.slane %v2553, 1
    %v3065 = vsel %vm451, %v3063, %v3064
    %v3066 = vrot.slane %v2624, 1
    %v3067 = vrot.slane %v2625, 1
    %v3068 = vsel %vm451, %v3066, %v3067
    %v3069 = vrot.slane %v2696, 1
    %v3070 = vrot.slane %v2697, 1
    %v3071 = vsel %vm451, %v3069, %v3070
    %v3072 = vrot.slane %v2482, 1
    %v3073 = vsel %vm451, %v3061, %v3072
    %v3074 = vrot.slane %v2554, 1
    %v3075 = vsel %vm451, %v3064, %v3074
    %v3076 = vrot.slane %v2626, 1
    %v3077 = vsel %vm451, %v3067, %v3076
    %v3078 = vrot.slane %v2698, 1
    %v3079 = vsel %vm451, %v3070, %v3078
    %v3080 = vrot.slane %v2483, 1
    %v3081 = vrot.slane %v2484, 1
    %v3082 = vsel %vm451, %v3080, %v3081
    %v3083 = vrot.slane %v2555, 1
    %v3084 = vrot.slane %v2556, 1
    %v3085 = vsel %vm451, %v3083, %v3084
    %v3086 = vrot.slane %v2627, 1
    %v3087 = vrot.slane %v2628, 1
    %v3088 = vsel %vm451, %v3086, %v3087
    %v3089 = vrot.slane %v2699, 1
    %v3090 = vrot.slane %v2700, 1
    %v3091 = vsel %vm451, %v3089, %v3090
    %v3092 = vrot.slane %v2485, 1
    %v3093 = vsel %vm451, %v3081, %v3092
    %v3094 = vrot.slane %v2557, 1
    %v3095 = vsel %vm451, %v3084, %v3094
    %v3096 = vrot.slane %v2629, 1
    %v3097 = vsel %vm451, %v3087, %v3096
    %v3098 = vrot.slane %v2701, 1
    %v3099 = vsel %vm451, %v3090, %v3098
    %v3100 = vrot.slane %v2486, 1
    %v3101 = vrot.slane %v2487, 1
    %v3102 = vsel %vm451, %v3100, %v3101
    %v3103 = vrot.slane %v2558, 1
    %v3104 = vrot.slane %v2559, 1
    %v3105 = vsel %vm451, %v3103, %v3104
    %v3106 = vrot.slane %v2630, 1
    %v3107 = vrot.slane %v2631, 1
    %v3108 = vsel %vm451, %v3106, %v3107
    %v3109 = vrot.slane %v2702, 1
    %v3110 = vrot.slane %v2703, 1
    %v3111 = vsel %vm451, %v3109, %v3110
    %v3112 = vrot.slane %v2488, 1
    %v3113 = vsel %vm451, %v3101, %v3112
    %v3114 = vrot.slane %v2560, 1
    %v3115 = vsel %vm451, %v3104, %v3114
    %v3116 = vrot.slane %v2632, 1
    %v3117 = vsel %vm451, %v3107, %v3116
    %v3118 = vrot.slane %v2704, 1
    %v3119 = vsel %vm451, %v3110, %v3118
    %v3120 = vrot.slane %v2489, 1
    %v3121 = vrot.slane %v2490, 1
    %v3122 = vsel %vm451, %v3120, %v3121
    %v3123 = vrot.slane %v2561, 1
    %v3124 = vrot.slane %v2562, 1
    %v3125 = vsel %vm451, %v3123, %v3124
    %v3126 = vrot.slane %v2633, 1
    %v3127 = vrot.slane %v2634, 1
    %v3128 = vsel %vm451, %v3126, %v3127
    %v3129 = vrot.slane %v2705, 1
    %v3130 = vrot.slane %v2706, 1
    %v3131 = vsel %vm451, %v3129, %v3130
    %v3132 = vrot.slane %v2491, 1
    %v3133 = vsel %vm451, %v3121, %v3132
    %v3134 = vrot.slane %v2563, 1
    %v3135 = vsel %vm451, %v3124, %v3134
    %v3136 = vrot.slane %v2635, 1
    %v3137 = vsel %vm451, %v3127, %v3136
    %v3138 = vrot.slane %v2707, 1
    %v3139 = vsel %vm451, %v3130, %v3138
    %v3140 = vrot.slane %v2492, 1
    %v3141 = vrot.slane %v2493, 1
    %v3142 = vsel %vm451, %v3140, %v3141
    %v3143 = vrot.slane %v2564, 1
    %v3144 = vrot.slane %v2565, 1
    %v3145 = vsel %vm451, %v3143, %v3144
    %v3146 = vrot.slane %v2636, 1
    %v3147 = vrot.slane %v2637, 1
    %v3148 = vsel %vm451, %v3146, %v3147
    %v3149 = vrot.slane %v2708, 1
    %v3150 = vrot.slane %v2709, 1
    %v3151 = vsel %vm451, %v3149, %v3150
    %v3152 = vrot.slane %v2494, 1
    %v3153 = vsel %vm451, %v3141, %v3152
    %v3154 = vrot.slane %v2566, 1
    %v3155 = vsel %vm451, %v3144, %v3154
    %v3156 = vrot.slane %v2638, 1
    %v3157 = vsel %vm451, %v3147, %v3156
    %v3158 = vrot.slane %v2710, 1
    %v3159 = vsel %vm451, %v3150, %v3158
    %v3160 = vrot.slane %v2495, 1
    %v3161 = vrot.slane %v2496, 1
    %v3162 = vsel %vm451, %v3160, %v3161
    %v3163 = vrot.slane %v2567, 1
    %v3164 = vrot.slane %v2568, 1
    %v3165 = vsel %vm451, %v3163, %v3164
    %v3166 = vrot.slane %v2639, 1
    %v3167 = vrot.slane %v2640, 1
    %v3168 = vsel %vm451, %v3166, %v3167
    %v3169 = vrot.slane %v2711, 1
    %v3170 = vrot.slane %v2712, 1
    %v3171 = vsel %vm451, %v3169, %v3170
    %v3172 = vrot.slane %v2497, 1
    %v3173 = vsel %vm451, %v3161, %v3172
    %v3174 = vrot.slane %v2569, 1
    %v3175 = vsel %vm451, %v3164, %v3174
    %v3176 = vrot.slane %v2641, 1
    %v3177 = vsel %vm451, %v3167, %v3176
    %v3178 = vrot.slane %v2713, 1
    %v3179 = vsel %vm451, %v3170, %v3178
    %v3268 = vrot.slane %v2900, 2
    %v3269 = vrot.slane %v2901, 2
    %v3270 = vsel %vm529, %v3268, %v3269
    %v3271 = vrot.slane %v2902, 2
    %v3272 = vsel %vm529, %v3269, %v3271
    %v3273 = vrot.slane %v2903, 2
    %v3274 = vrot.slane %v2904, 2
    %v3275 = vsel %vm529, %v3273, %v3274
    %v3276 = vrot.slane %v2905, 2
    %v3277 = vsel %vm529, %v3274, %v3276
    %v3278 = vrot.slane %v2906, 2
    %v3279 = vrot.slane %v2907, 2
    %v3280 = vsel %vm529, %v3278, %v3279
    %v3281 = vrot.slane %v2908, 2
    %v3282 = vsel %vm529, %v3279, %v3281
    %v3283 = vrot.slane %v2909, 2
    %v3284 = vrot.slane %v2910, 2
    %v3285 = vsel %vm529, %v3283, %v3284
    %v3286 = vrot.slane %v2911, 2
    %v3287 = vsel %vm529, %v3284, %v3286
    %v3288 = vrot.slane %v2912, 2
    %v3289 = vrot.slane %v2913, 2
    %v3290 = vsel %vm529, %v3288, %v3289
    %v3291 = vrot.slane %v2914, 2
    %v3292 = vsel %vm529, %v3289, %v3291
    %v3293 = vrot.slane %v2915, 2
    %v3294 = vrot.slane %v2916, 2
    %v3295 = vsel %vm529, %v3293, %v3294
    %v3296 = vrot.slane %v2917, 2
    %v3297 = vsel %vm529, %v3294, %v3296
    %v3298 = vrot.slane %v2918, 2
    %v3299 = vrot.slane %v2919, 2
    %v3300 = vsel %vm529, %v3298, %v3299
    %v3301 = vrot.slane %v2920, 2
    %v3302 = vsel %vm529, %v3299, %v3301
    %v3303 = vrot.slane %v2921, 2
    %v3304 = vrot.slane %v2922, 2
    %v3305 = vsel %vm529, %v3303, %v3304
    %v3306 = vrot.slane %v2923, 2
    %v3307 = vsel %vm529, %v3304, %v3306
    %v3324 = vld [vmem:[#allocation5] sm:$0xff]
    %v3325 = vld [vmem:[#allocation5 + $0x8] sm:$0xff]
    %v3326 = vld [vmem:[#allocation5 + $0x10] sm:$0xff]
    %v3327 = vld [vmem:[#allocation5 + $0x18] sm:$0xff]
    %v3328 = vld [vmem:[#allocation5 + $0x20] sm:$0xff]
    %v3329 = vld [vmem:[#allocation5 + $0x28] sm:$0xff]
    %v3330 = vld [vmem:[#allocation5 + $0x30] sm:$0xff]
    %v3331 = vld [vmem:[#allocation5 + $0x38] sm:$0xff]
    %v3332 = vld [vmem:[#allocation5 + $0x40] sm:$0xff]
    %v3333 = vld [vmem:[#allocation5 + $0x48] sm:$0xff]
    %v3334 = vld [vmem:[#allocation5 + $0x50] sm:$0xff]
    %v3335 = vld [vmem:[#allocation5 + $0x58] sm:$0xff]
    %v3336 = vld [vmem:[#allocation5 + $0x60] sm:$0xff]
    %v3337 = vld [vmem:[#allocation5 + $0x68] sm:$0xff]
    %v3338 = vld [vmem:[#allocation5 + $0x70] sm:$0xff]
    %v3339 = vld [vmem:[#allocation5 + $0x78] sm:$0xff]
    %v3340 = vld [vmem:[#allocation5 + $0x80] sm:$0xff]
    %v3341 = vld [vmem:[#allocation5 + $0x88] sm:$0xff]
    %v3342 = vld [vmem:[#allocation5 + $0x90] sm:$0xff]
    %v3343 = vld [vmem:[#allocation5 + $0x98] sm:$0xff]
    %v3344 = vld [vmem:[#allocation5 + $0xa0] sm:$0xff]
    %v3345 = vld [vmem:[#allocation5 + $0xa8] sm:$0xff]
    %v3346 = vld [vmem:[#allocation5 + $0xb0] sm:$0xff]
    %v3347 = vld [vmem:[#allocation5 + $0xb8] sm:$0xff]
    %v3348 = vld [vmem:[#allocation5 + $0xc0] sm:$0xff]
    %v3349 = vld [vmem:[#allocation5 + $0xc8] sm:$0xff]
    %v3350 = vld [vmem:[#allocation5 + $0xd0] sm:$0xff]
    %v3351 = vld [vmem:[#allocation5 + $0xd8] sm:$0xff]
    %v3352 = vld [vmem:[#allocation5 + $0xe0] sm:$0xff]
    %v3353 = vld [vmem:[#allocation5 + $0xe8] sm:$0xff]
    %v3354 = vld [vmem:[#allocation5 + $0xf0] sm:$0xff]
    %v3355 = vld [vmem:[#allocation5 + $0xf8] sm:$0xff]
    %v3356 = vld [vmem:[#allocation5 + $0x100] sm:$0xff]
    %v3357 = vld [vmem:[#allocation5 + $0x108] sm:$0xff]
    %v3358 = vld [vmem:[#allocation5 + $0x110] sm:$0xff]
    %v3359 = vld [vmem:[#allocation5 + $0x118] sm:$0xff]
    %v3360 = vld [vmem:[#allocation5 + $0x120] sm:$0xff]
    %v3361 = vld [vmem:[#allocation5 + $0x128] sm:$0xff]
    %v3362 = vld [vmem:[#allocation5 + $0x130] sm:$0xff]
    %v3363 = vld [vmem:[#allocation5 + $0x138] sm:$0xff]
    %v3364 = vld [vmem:[#allocation5 + $0x140] sm:$0xff]
    %v3365 = vld [vmem:[#allocation5 + $0x148] sm:$0xff]
    %v3366 = vld [vmem:[#allocation5 + $0x150] sm:$0xff]
    %v3367 = vld [vmem:[#allocation5 + $0x158] sm:$0xff]
    %v3368 = vld [vmem:[#allocation5 + $0x160] sm:$0xff]
    %v3369 = vld [vmem:[#allocation5 + $0x168] sm:$0xff]
    %v3370 = vld [vmem:[#allocation5 + $0x170] sm:$0xff]
    %v3371 = vld [vmem:[#allocation5 + $0x178] sm:$0xff]
    %v3372 = vld [vmem:[#allocation5 + $0x180] sm:$0xff]
    %v3373 = vld [vmem:[#allocation5 + $0x188] sm:$0xff]
    %v3374 = vld [vmem:[#allocation5 + $0x190] sm:$0xff]
    %v3375 = vld [vmem:[#allocation5 + $0x198] sm:$0xff]
    %v3376 = vld [vmem:[#allocation5 + $0x1a0] sm:$0xff]
    %v3377 = vld [vmem:[#allocation5 + $0x1a8] sm:$0xff]
    %v3378 = vld [vmem:[#allocation5 + $0x1b0] sm:$0xff]
    %v3379 = vld [vmem:[#allocation5 + $0x1b8] sm:$0xff]
    %v3380 = vld [vmem:[#allocation5 + $0x1c0] sm:$0xff]
    %v3381 = vld [vmem:[#allocation5 + $0x1c8] sm:$0xff]
    %v3382 = vld [vmem:[#allocation5 + $0x1d0] sm:$0xff]
    %v3383 = vld [vmem:[#allocation5 + $0x1d8] sm:$0xff]
    %v3384 = vld [vmem:[#allocation5 + $0x1e0] sm:$0xff]
    %v3385 = vld [vmem:[#allocation5 + $0x1e8] sm:$0xff]
    %v3386 = vld [vmem:[#allocation5 + $0x1f0] sm:$0xff]
    %v3387 = vld [vmem:[#allocation5 + $0x1f8] sm:$0xff]
    %v3388 = vld [vmem:[#allocation5 + $0x200] sm:$0xff]
    %v3389 = vld [vmem:[#allocation5 + $0x208] sm:$0xff]
    %v3390 = vld [vmem:[#allocation5 + $0x210] sm:$0xff]
    %v3391 = vld [vmem:[#allocation5 + $0x218] sm:$0xff]
    %v3392 = vld [vmem:[#allocation5 + $0x220] sm:$0xff]
    %v3393 = vld [vmem:[#allocation5 + $0x228] sm:$0xff]
    %v3394 = vld [vmem:[#allocation5 + $0x230] sm:$0xff]
    %v3395 = vld [vmem:[#allocation5 + $0x238] sm:$0xff]
    %v3396 = vld [vmem:[#allocation5 + $0x240] sm:$0xff]
    %v3397 = vld [vmem:[#allocation5 + $0x248] sm:$0xff]
    %v3398 = vld [vmem:[#allocation5 + $0x250] sm:$0xff]
    %v3399 = vld [vmem:[#allocation5 + $0x258] sm:$0xff]
    %v3400 = vld [vmem:[#allocation5 + $0x260] sm:$0xff]
    %v3401 = vld [vmem:[#allocation5 + $0x268] sm:$0xff]
    %v3402 = vld [vmem:[#allocation5 + $0x270] sm:$0xff]
    %v3403 = vld [vmem:[#allocation5 + $0x278] sm:$0xff]
    %v3404 = vld [vmem:[#allocation5 + $0x280] sm:$0xff]
    %v3405 = vld [vmem:[#allocation5 + $0x288] sm:$0xff]
    %v3406 = vld [vmem:[#allocation5 + $0x290] sm:$0xff]
    %v3407 = vld [vmem:[#allocation5 + $0x298] sm:$0xff]
    %v3408 = vld [vmem:[#allocation5 + $0x2a0] sm:$0xff]
    %v3409 = vld [vmem:[#allocation5 + $0x2a8] sm:$0xff]
    %v3410 = vld [vmem:[#allocation5 + $0x2b0] sm:$0xff]
    %v3411 = vld [vmem:[#allocation5 + $0x2b8] sm:$0xff]
    %v3412 = vld [vmem:[#allocation5 + $0x2c0] sm:$0xff]
    %v3413 = vld [vmem:[#allocation5 + $0x2c8] sm:$0xff]
    %v3414 = vld [vmem:[#allocation5 + $0x2d0] sm:$0xff]
    %v3415 = vld [vmem:[#allocation5 + $0x2d8] sm:$0xff]
    %v3416 = vld [vmem:[#allocation5 + $0x2e0] sm:$0xff]
    %v3417 = vld [vmem:[#allocation5 + $0x2e8] sm:$0xff]
    %v3418 = vld [vmem:[#allocation5 + $0x2f0] sm:$0xff]
    %v3419 = vld [vmem:[#allocation5 + $0x2f8] sm:$0xff]
    %v3420 = vld [vmem:[#allocation5 + $0x300] sm:$0xff]
    %v3421 = vld [vmem:[#allocation5 + $0x308] sm:$0xff]
    %v3422 = vld [vmem:[#allocation5 + $0x310] sm:$0xff]
    %v3423 = vld [vmem:[#allocation5 + $0x318] sm:$0xff]
    %v3424 = vld [vmem:[#allocation5 + $0x320] sm:$0xff]
    %v3425 = vld [vmem:[#allocation5 + $0x328] sm:$0xff]
    %v3426 = vld [vmem:[#allocation5 + $0x330] sm:$0xff]
    %v3427 = vld [vmem:[#allocation5 + $0x338] sm:$0xff]
    %v3428 = vld [vmem:[#allocation5 + $0x340] sm:$0xff]
    %v3429 = vld [vmem:[#allocation5 + $0x348] sm:$0xff]
    %v3430 = vld [vmem:[#allocation5 + $0x350] sm:$0xff]
    %v3431 = vld [vmem:[#allocation5 + $0x358] sm:$0xff]
    %v3432 = vld [vmem:[#allocation5 + $0x360] sm:$0xff]
    %v3433 = vld [vmem:[#allocation5 + $0x368] sm:$0xff]
    %v3434 = vld [vmem:[#allocation5 + $0x370] sm:$0xff]
    %v3435 = vld [vmem:[#allocation5 + $0x378] sm:$0xff]
    %v3436 = vld [vmem:[#allocation5 + $0x380] sm:$0xff]
    %v3437 = vld [vmem:[#allocation5 + $0x388] sm:$0xff]
    %v3438 = vld [vmem:[#allocation5 + $0x390] sm:$0xff]
    %v3439 = vld [vmem:[#allocation5 + $0x398] sm:$0xff]
    %v3440 = vld [vmem:[#allocation5 + $0x3a0] sm:$0xff]
    %v3441 = vld [vmem:[#allocation5 + $0x3a8] sm:$0xff]
    %v3442 = vld [vmem:[#allocation5 + $0x3b0] sm:$0xff]
    %v3443 = vld [vmem:[#allocation5 + $0x3b8] sm:$0xff]
    %v3444 = vld [vmem:[#allocation5 + $0x3c0] sm:$0xff]
    %v3445 = vld [vmem:[#allocation5 + $0x3c8] sm:$0xff]
    %v3446 = vld [vmem:[#allocation5 + $0x3d0] sm:$0xff]
    %v3447 = vld [vmem:[#allocation5 + $0x3d8] sm:$0xff]
    %v3448 = vld [vmem:[#allocation5 + $0x3e0] sm:$0xff]
    %v3449 = vld [vmem:[#allocation5 + $0x3e8] sm:$0xff]
    %v3450 = vld [vmem:[#allocation5 + $0x3f0] sm:$0xff]
    %v3451 = vld [vmem:[#allocation5 + $0x3f8] sm:$0xff]
    %v3452 = vld [vmem:[#allocation5 + $0x400] sm:$0xff]
    %v3453 = vld [vmem:[#allocation5 + $0x408] sm:$0xff]
    %v3454 = vld [vmem:[#allocation5 + $0x410] sm:$0xff]
    %v3455 = vld [vmem:[#allocation5 + $0x418] sm:$0xff]
    %v3456 = vld [vmem:[#allocation5 + $0x420] sm:$0xff]
    %v3457 = vld [vmem:[#allocation5 + $0x428] sm:$0xff]
    %v3458 = vld [vmem:[#allocation5 + $0x430] sm:$0xff]
    %v3459 = vld [vmem:[#allocation5 + $0x438] sm:$0xff]
    %v3460 = vld [vmem:[#allocation5 + $0x440] sm:$0xff]
    %v3461 = vld [vmem:[#allocation5 + $0x448] sm:$0xff]
    %v3462 = vld [vmem:[#allocation5 + $0x450] sm:$0xff]
    %v3463 = vld [vmem:[#allocation5 + $0x458] sm:$0xff]
    %v3464 = vld [vmem:[#allocation5 + $0x460] sm:$0xff]
    %v3465 = vld [vmem:[#allocation5 + $0x468] sm:$0xff]
    %v3466 = vld [vmem:[#allocation5 + $0x470] sm:$0xff]
    %v3467 = vld [vmem:[#allocation5 + $0x478] sm:$0xff]
    %3468 = vmatprep.subr.mxu0 0.0
    %3469 = vmatpush1.msra.mxu0 %v3324
    %3470 = vmatprep.subr.mxu0 0.0
    %3471 = vmatpush1.msra.mxu0 %v3325
    %3472 = vmatprep.subr.mxu0 0.0
    %3473 = vmatpush1.msra.mxu0 %v3326
    %3474 = vmatprep.subr.mxu0 0.0
    %3475 = vmatpush1.msra.mxu0 %v3327
    %3476 = vmatprep.subr.mxu0 0.0
    %3477 = vmatpush1.msra.mxu0 %v3328
    %3478 = vmatprep.subr.mxu0 0.0
    %3479 = vmatpush1.msra.mxu0 %v3329
    %3480 = vmatprep.subr.mxu0 0.0
    %3481 = vmatpush1.msra.mxu0 %v3330
    %3482 = vmatprep.subr.mxu0 0.0
    %3483 = vmatpush1.msra.mxu0 %v3331
    %3484 = vmatprep.subr.mxu0 0.0
    %3485 = vmatpush1.msra.mxu0 %v3332
    %3486 = vmatprep.subr.mxu0 0.0
    %3487 = vmatpush1.msra.mxu0 %v3333
    %3488 = vmatprep.subr.mxu0 0.0
    %3489 = vmatpush1.msra.mxu0 %v3334
    %3490 = vmatprep.subr.mxu0 0.0
    %3491 = vmatpush1.msra.mxu0 %v3335
    %3492 = vmatprep.subr.mxu0 0.0
    %3493 = vmatpush1.msra.mxu0 %v3336
    %3494 = vmatprep.subr.mxu0 0.0
    %3495 = vmatpush1.msra.mxu0 %v3337
    %3496 = vmatprep.subr.mxu0 0.0
    %3497 = vmatpush1.msra.mxu0 %v3338
    %3498 = vmatprep.subr.mxu0 0.0
    %3499 = vmatpush1.msra.mxu0 %v3339
    %3500 = vmatprep.subr.mxu0 0.0
    %3501 = vmatpush1.msra.mxu0 %v3340
    %3502 = vmatprep.subr.mxu0 0.0
    %3503 = vmatpush1.msra.mxu0 %v3341
    %3504 = vmatprep.subr.mxu0 0.0
    %3505 = vmatpush1.msra.mxu0 %v3342
    %3506 = vmatprep.subr.mxu0 0.0
    %3507 = vmatpush1.msra.mxu0 %v3343
    %3508 = vmatprep.subr.mxu0 0.0
    %3509 = vmatpush1.msra.mxu0 %v3344
    %3510 = vmatprep.subr.mxu0 0.0
    %3511 = vmatpush1.msra.mxu0 %v3345
    %3512 = vmatprep.subr.mxu0 0.0
    %3513 = vmatpush1.msra.mxu0 %v3346
    %3514 = vmatprep.subr.mxu0 0.0
    %3515 = vmatpush1.msra.mxu0 %v3347
    %3516 = vmatprep.subr.mxu0 0.0
    %3517 = vmatpush1.msra.mxu0 %v3348
    %3518 = vmatprep.subr.mxu0 0.0
    %3519 = vmatpush1.msra.mxu0 %v3349
    %3520 = vmatprep.subr.mxu0 0.0
    %3521 = vmatpush1.msra.mxu0 %v3350
    %3522 = vmatprep.subr.mxu0 0.0
    %3523 = vmatpush1.msra.mxu0 %v3351
    %3524 = vmatprep.subr.mxu0 0.0
    %3525 = vmatpush1.msra.mxu0 %v3352
    %3526 = vmatprep.subr.mxu0 0.0
    %3527 = vmatpush1.msra.mxu0 %v3353
    %3528 = vmatprep.subr.mxu0 0.0
    %3529 = vmatpush1.msra.mxu0 %v3354
    %3530 = vmatprep.subr.mxu0 0.0
    %3531 = vmatpush1.msra.mxu0 %v3355
    %3532 = vmatprep.mubr.f32.mxu0 %v1320
    %3533 = vmatmul.mubr.f32.gmra.mrb[0].mxu0 %v1272
    %v3534 = vpop.f32.mrb[0].mxu0
    %v3535 = vadd.f32 0.0, %v3534
    %v3536 = vpop.f32.mrb[0].mxu0
    %3537 = vmatprep.mubr.f32.mxu0 %v1321
    %3538 = vmatmul.mubr.f32.gmra.mrb[0].mxu0 %v1273
    %v3539 = vpop.f32.mrb[0].mxu0
    %v3540 = vadd.f32 0.0, %v3539
    %v3541 = vpop.f32.mrb[0].mxu0
    %3542 = vmatprep.mubr.f32.mxu0 %v1322
    %3543 = vmatmul.mubr.f32.gmra.mrb[0].mxu0 %v1274
    %v3544 = vpop.f32.mrb[0].mxu0
    %v3545 = vadd.f32 0.0, %v3544
    %v3546 = vpop.f32.mrb[0].mxu0
    %3547 = vmatprep.mubr.f32.mxu0 %v1323
    %3548 = vmatmul.mubr.f32.gmra.mrb[0].mxu0 %v1275
    %v3549 = vpop.f32.mrb[0].mxu0
    %v3550 = vadd.f32 0.0, %v3549
    %v3551 = vpop.f32.mrb[0].mxu0
    %3552 = vmatprep.mubr.f32.mxu0 %v1324
    %3553 = vmatmul.mubr.f32.gmra.mrb[0].mxu0 %v1276
    %v3554 = vpop.f32.mrb[0].mxu0
    %v3555 = vadd.f32 0.0, %v3554
    %v3556 = vpop.f32.mrb[0].mxu0
    %3557 = vmatprep.mubr.f32.mxu0 %v1325
    %3558 = vmatmul.mubr.f32.gmra.mrb[0].mxu0 %v1277
    %v3559 = vpop.f32.mrb[0].mxu0
    %v3560 = vadd.f32 0.0, %v3559
    %v3561 = vpop.f32.mrb[0].mxu0
    %3562 = vmatprep.mubr.f32.mxu0 %v1326
    %3563 = vmatmul.mubr.f32.gmra.mrb[0].mxu0 %v1278
    %v3564 = vpop.f32.mrb[0].mxu0
    %v3565 = vadd.f32 0.0, %v3564
    %v3566 = vpop.f32.mrb[0].mxu0
    %3567 = vmatprep.mubr.f32.mxu0 %v1327
    %3568 = vmatmul.mubr.f32.gmra.mrb[0].mxu0 %v1279
    %v3569 = vpop.f32.mrb[0].mxu0
    %v3570 = vadd.f32 0.0, %v3569
    %v3571 = vpop.f32.mrb[0].mxu0
    %3572 = vmatprep.mubr.f32.mxu0 %v1328
    %3573 = vmatmul.mubr.f32.gmra.mrb[0].mxu0 %v1280
    %v3574 = vpop.f32.mrb[0].mxu0
    %v3575 = vadd.f32 0.0, %v3574
    %v3576 = vpop.f32.mrb[0].mxu0
    %3577 = vmatprep.mubr.f32.mxu0 %v1329
    %3578 = vmatmul.mubr.f32.gmra.mrb[0].mxu0 %v1281
    %v3579 = vpop.f32.mrb[0].mxu0
    %v3580 = vadd.f32 0.0, %v3579
    %v3581 = vpop.f32.mrb[0].mxu0
    %3582 = vmatprep.mubr.f32.mxu0 %v1330
    %3583 = vmatmul.mubr.f32.gmra.mrb[0].mxu0 %v1282
    %v3584 = vpop.f32.mrb[0].mxu0
    %v3585 = vadd.f32 0.0, %v3584
    %v3586 = vpop.f32.mrb[0].mxu0
    %3587 = vmatprep.mubr.f32.mxu0 %v1331
    %3588 = vmatmul.mubr.f32.gmra.mrb[0].mxu0 %v1283
    %v3589 = vpop.f32.mrb[0].mxu0
    %v3590 = vadd.f32 0.0, %v3589
    %v3591 = vpop.f32.mrb[0].mxu0
    %3592 = vmatprep.mubr.f32.mxu0 %v1332
    %3593 = vmatmul.mubr.f32.gmra.mrb[0].mxu0 %v1284
    %v3594 = vpop.f32.mrb[0].mxu0
    %v3595 = vadd.f32 0.0, %v3594
    %v3596 = vpop.f32.mrb[0].mxu0
    %3597 = vmatprep.mubr.f32.mxu0 %v1333
    %3598 = vmatmul.mubr.f32.gmra.mrb[0].mxu0 %v1285
    %v3599 = vpop.f32.mrb[0].mxu0
    %v3600 = vadd.f32 0.0, %v3599
    %v3601 = vpop.f32.mrb[0].mxu0
    %3602 = vmatprep.mubr.f32.mxu0 %v1334
    %3603 = vmatmul.mubr.f32.gmra.mrb[0].mxu0 %v1286
    %v3604 = vpop.f32.mrb[0].mxu0
    %v3605 = vadd.f32 0.0, %v3604
    %v3606 = vpop.f32.mrb[0].mxu0
    %3607 = vmatprep.mubr.f32.mxu0 %v1335
    %3608 = vmatmul.mubr.f32.gmra.mrb[0].mxu0 %v1287
    %v3609 = vpop.f32.mrb[0].mxu0
    %v3610 = vadd.f32 0.0, %v3609
    %v3611 = vpop.f32.mrb[0].mxu0
    %3612 = vdwg.mxu0
    %3613 = vmatprep.subr.mxu0 0.0
    %3614 = vmatpush1.msra.mxu0 %v3356
    %3615 = vmatprep.subr.mxu0 0.0
    %3616 = vmatpush1.msra.mxu0 %v3357
    %3617 = vmatprep.subr.mxu0 0.0
    %3618 = vmatpush1.msra.mxu0 %v3358
    %3619 = vmatprep.subr.mxu0 0.0
    %3620 = vmatpush1.msra.mxu0 %v3359
    %3621 = vmatprep.subr.mxu0 0.0
    %3622 = vmatpush1.msra.mxu0 %v3360
    %3623 = vmatprep.subr.mxu0 0.0
    %3624 = vmatpush1.msra.mxu0 %v3361
    %3625 = vmatprep.subr.mxu0 0.0
    %3626 = vmatpush1.msra.mxu0 %v3362
    %3627 = vmatprep.subr.mxu0 0.0
    %3628 = vmatpush1.msra.mxu0 %v3363
    %3629 = vmatprep.subr.mxu0 0.0
    %3630 = vmatpush1.msra.mxu0 %v3364
    %3631 = vmatprep.subr.mxu0 0.0
    %3632 = vmatpush1.msra.mxu0 %v3365
    %3633 = vmatprep.subr.mxu0 0.0
    %3634 = vmatpush1.msra.mxu0 %v3366
    %3635 = vmatprep.subr.mxu0 0.0
    %3636 = vmatpush1.msra.mxu0 %v3367
    %3637 = vmatprep.subr.mxu0 0.0
    %3638 = vmatpush1.msra.mxu0 %v3368
    %3639 = vmatprep.subr.mxu0 0.0
    %3640 = vmatpush1.msra.mxu0 %v3369
    %3641 = vmatprep.subr.mxu0 0.0
    %3642 = vmatpush1.msra.mxu0 %v3370
    %3643 = vmatprep.subr.mxu0 0.0
    %3644 = vmatpush1.msra.mxu0 %v3371
    %3645 = vmatprep.subr.mxu0 0.0
    %3646 = vmatpush1.msra.mxu0 %v3372
    %3647 = vmatprep.subr.mxu0 0.0
    %3648 = vmatpush1.msra.mxu0 %v3373
    %3649 = vmatprep.subr.mxu0 0.0
    %3650 = vmatpush1.msra.mxu0 %v3374
    %3651 = vmatprep.subr.mxu0 0.0
    %3652 = vmatpush1.msra.mxu0 %v3375
    %3653 = vmatprep.subr.mxu0 0.0
    %3654 = vmatpush1.msra.mxu0 %v3376
    %3655 = vmatprep.subr.mxu0 0.0
    %3656 = vmatpush1.msra.mxu0 %v3377
    %3657 = vmatprep.subr.mxu0 0.0
    %3658 = vmatpush1.msra.mxu0 %v3378
    %3659 = vmatprep.subr.mxu0 0.0
    %3660 = vmatpush1.msra.mxu0 %v3379
    %3661 = vmatprep.subr.mxu0 0.0
    %3662 = vmatpush1.msra.mxu0 %v3380
    %3663 = vmatprep.subr.mxu0 0.0
    %3664 = vmatpush1.msra.mxu0 %v3381
    %3665 = vmatprep.subr.mxu0 0.0
    %3666 = vmatpush1.msra.mxu0 %v3382
    %3667 = vmatprep.subr.mxu0 0.0
    %3668 = vmatpush1.msra.mxu0 %v3383
    %3669 = vmatprep.subr.mxu0 0.0
    %3670 = vmatpush1.msra.mxu0 %v3384
    %3671 = vmatprep.subr.mxu0 0.0
    %3672 = vmatpush1.msra.mxu0 %v3385
    %3673 = vmatprep.subr.mxu0 0.0
    %3674 = vmatpush1.msra.mxu0 %v3386
    %3675 = vmatprep.subr.mxu0 0.0
    %3676 = vmatpush1.msra.mxu0 %v3387
    %3677 = vmatprep.mubr.f32.mxu0 %v1416
    %3678 = vmatmul.mubr.f32.gmra.mrb[0].mxu0 %v1368
    %v3679 = vpop.f32.mrb[0].mxu0
    %v3680 = vadd.f32 %v3535, %v3679
    %v3681 = vpop.f32.mrb[0].mxu0
    %3682 = vmatprep.mubr.f32.mxu0 %v1417
    %3683 = vmatmul.mubr.f32.gmra.mrb[0].mxu0 %v1369
    %v3684 = vpop.f32.mrb[0].mxu0
    %v3685 = vadd.f32 %v3540, %v3684
    %v3686 = vpop.f32.mrb[0].mxu0
    %3687 = vmatprep.mubr.f32.mxu0 %v1418
    %3688 = vmatmul.mubr.f32.gmra.mrb[0].mxu0 %v1370
    %v3689 = vpop.f32.mrb[0].mxu0
    %v3690 = vadd.f32 %v3545, %v3689
    %v3691 = vpop.f32.mrb[0].mxu0
    %3692 = vmatprep.mubr.f32.mxu0 %v1419
    %3693 = vmatmul.mubr.f32.gmra.mrb[0].mxu0 %v1371
    %v3694 = vpop.f32.mrb[0].mxu0
    %v3695 = vadd.f32 %v3550, %v3694
    %v3696 = vpop.f32.mrb[0].mxu0
    %3697 = vmatprep.mubr.f32.mxu0 %v1420
    %3698 = vmatmul.mubr.f32.gmra.mrb[0].mxu0 %v1372
    %v3699 = vpop.f32.mrb[0].mxu0
    %v3700 = vadd.f32 %v3555, %v3699
    %v3701 = vpop.f32.mrb[0].mxu0
    %3702 = vmatprep.mubr.f32.mxu0 %v1421
    %3703 = vmatmul.mubr.f32.gmra.mrb[0].mxu0 %v1373
    %v3704 = vpop.f32.mrb[0].mxu0
    %v3705 = vadd.f32 %v3560, %v3704
    %v3706 = vpop.f32.mrb[0].mxu0
    %3707 = vmatprep.mubr.f32.mxu0 %v1422
    %3708 = vmatmul.mubr.f32.gmra.mrb[0].mxu0 %v1374
    %v3709 = vpop.f32.mrb[0].mxu0
    %v3710 = vadd.f32 %v3565, %v3709
    %v3711 = vpop.f32.mrb[0].mxu0
    %3712 = vmatprep.mubr.f32.mxu0 %v1423
    %3713 = vmatmul.mubr.f32.gmra.mrb[0].mxu0 %v1375
    %v3714 = vpop.f32.mrb[0].mxu0
    %v3715 = vadd.f32 %v3570, %v3714
    %v3716 = vpop.f32.mrb[0].mxu0
    %3717 = vmatprep.mubr.f32.mxu0 %v1424
    %3718 = vmatmul.mubr.f32.gmra.mrb[0].mxu0 %v1376
    %v3719 = vpop.f32.mrb[0].mxu0
    %v3720 = vadd.f32 %v3575, %v3719
    %v3721 = vpop.f32.mrb[0].mxu0
    %3722 = vmatprep.mubr.f32.mxu0 %v1425
    %3723 = vmatmul.mubr.f32.gmra.mrb[0].mxu0 %v1377
    %v3724 = vpop.f32.mrb[0].mxu0
    %v3725 = vadd.f32 %v3580, %v3724
    %v3726 = vpop.f32.mrb[0].mxu0
    %3727 = vmatprep.mubr.f32.mxu0 %v1426
    %3728 = vmatmul.mubr.f32.gmra.mrb[0].mxu0 %v1378
    %v3729 = vpop.f32.mrb[0].mxu0
    %v3730 = vadd.f32 %v3585, %v3729
    %v3731 = vpop.f32.mrb[0].mxu0
    %3732 = vmatprep.mubr.f32.mxu0 %v1427
    %3733 = vmatmul.mubr.f32.gmra.mrb[0].mxu0 %v1379
    %v3734 = vpop.f32.mrb[0].mxu0
    %v3735 = vadd.f32 %v3590, %v3734
    %v3736 = vpop.f32.mrb[0].mxu0
    %3737 = vmatprep.mubr.f32.mxu0 %v1428
    %3738 = vmatmul.mubr.f32.gmra.mrb[0].mxu0 %v1380
    %v3739 = vpop.f32.mrb[0].mxu0
    %v3740 = vadd.f32 %v3595, %v3739
    %v3741 = vpop.f32.mrb[0].mxu0
    %3742 = vmatprep.mubr.f32.mxu0 %v1429
    %3743 = vmatmul.mubr.f32.gmra.mrb[0].mxu0 %v1381
    %v3744 = vpop.f32.mrb[0].mxu0
    %v3745 = vadd.f32 %v3600, %v3744
    %v3746 = vpop.f32.mrb[0].mxu0
    %3747 = vmatprep.mubr.f32.mxu0 %v1430
    %3748 = vmatmul.mubr.f32.gmra.mrb[0].mxu0 %v1382
    %v3749 = vpop.f32.mrb[0].mxu0
    %v3750 = vadd.f32 %v3605, %v3749
    %v3751 = vpop.f32.mrb[0].mxu0
    %3752 = vmatprep.mubr.f32.mxu0 %v1431
    %3753 = vmatmul.mubr.f32.gmra.mrb[0].mxu0 %v1383
    %v3754 = vpop.f32.mrb[0].mxu0
    %v3755 = vadd.f32 %v3610, %v3754
    %v3756 = vpop.f32.mrb[0].mxu0
    %3757 = vdwg.mxu0
    %3758 = vmatprep.subr.mxu0 0.0
    %3759 = vmatpush1.msra.mxu0 %v3388
    %3760 = vmatprep.subr.mxu0 0.0
    %3761 = vmatpush1.msra.mxu0 %v3389
    %3762 = vmatprep.subr.mxu0 0.0
    %3763 = vmatpush1.msra.mxu0 %v3390
    %3764 = vmatprep.subr.mxu0 0.0
    %3765 = vmatpush1.msra.mxu0 %v3391
    %3766 = vmatprep.subr.mxu0 0.0
    %3767 = vmatpush1.msra.mxu0 %v3392
    %3768 = vmatprep.subr.mxu0 0.0
    %3769 = vmatpush1.msra.mxu0 %v3393
    %3770 = vmatprep.subr.mxu0 0.0
    %3771 = vmatpush1.msra.mxu0 %v3394
    %3772 = vmatprep.subr.mxu0 0.0
    %3773 = vmatpush1.msra.mxu0 %v3395
    %3774 = vmatprep.subr.mxu0 0.0
    %3775 = vmatpush1.msra.mxu0 %v3396
    %3776 = vmatprep.subr.mxu0 0.0
    %3777 = vmatpush1.msra.mxu0 %v3397
    %3778 = vmatprep.subr.mxu0 0.0
    %3779 = vmatpush1.msra.mxu0 %v3398
    %3780 = vmatprep.subr.mxu0 0.0
    %3781 = vmatpush1.msra.mxu0 %v3399
    %3782 = vmatprep.subr.mxu0 0.0
    %3783 = vmatpush1.msra.mxu0 %v3400
    %3784 = vmatprep.subr.mxu0 0.0
    %3785 = vmatpush1.msra.mxu0 %v3401
    %3786 = vmatprep.subr.mxu0 0.0
    %3787 = vmatpush1.msra.mxu0 %v3402
    %3788 = vmatprep.subr.mxu0 0.0
    %3789 = vmatpush1.msra.mxu0 %v3403
    %3790 = vmatprep.subr.mxu0 0.0
    %3791 = vmatpush1.msra.mxu0 %v3404
    %3792 = vmatprep.subr.mxu0 0.0
    %3793 = vmatpush1.msra.mxu0 %v3405
    %3794 = vmatprep.subr.mxu0 0.0
    %3795 = vmatpush1.msra.mxu0 %v3406
    %3796 = vmatprep.subr.mxu0 0.0
    %3797 = vmatpush1.msra.mxu0 %v3407
    %3798 = vmatprep.subr.mxu0 0.0
    %3799 = vmatpush1.msra.mxu0 %v3408
    %3800 = vmatprep.subr.mxu0 0.0
    %3801 = vmatpush1.msra.mxu0 %v3409
    %3802 = vmatprep.subr.mxu0 0.0
    %3803 = vmatpush1.msra.mxu0 %v3410
    %3804 = vmatprep.subr.mxu0 0.0
    %3805 = vmatpush1.msra.mxu0 %v3411
    %3806 = vmatprep.subr.mxu0 0.0
    %3807 = vmatpush1.msra.mxu0 %v3412
    %3808 = vmatprep.subr.mxu0 0.0
    %3809 = vmatpush1.msra.mxu0 %v3413
    %3810 = vmatprep.subr.mxu0 0.0
    %3811 = vmatpush1.msra.mxu0 %v3414
    %3812 = vmatprep.subr.mxu0 0.0
    %3813 = vmatpush1.msra.mxu0 %v3415
    %3814 = vmatprep.subr.mxu0 0.0
    %3815 = vmatpush1.msra.mxu0 %v3416
    %3816 = vmatprep.subr.mxu0 0.0
    %3817 = vmatpush1.msra.mxu0 %v3417
    %3818 = vmatprep.subr.mxu0 0.0
    %3819 = vmatpush1.msra.mxu0 %v3418
    %3820 = vmatprep.subr.mxu0 0.0
    %3821 = vmatpush1.msra.mxu0 %v3419
    %3822 = vmatprep.mubr.f32.mxu0 %v3025
    %3823 = vmatmul.mubr.f32.gmra.mrb[0].mxu0 %v3022
    %v3824 = vpop.f32.mrb[0].mxu0
    %v3825 = vadd.f32 %v3680, %v3824
    %v3826 = vpop.f32.mrb[0].mxu0
    %3827 = vmatprep.mubr.f32.mxu0 %v3035
    %3828 = vmatmul.mubr.f32.gmra.mrb[0].mxu0 %v3033
    %v3829 = vpop.f32.mrb[0].mxu0
    %v3830 = vadd.f32 %v3685, %v3829
    %v3831 = vpop.f32.mrb[0].mxu0
    %3832 = vmatprep.mubr.f32.mxu0 %v3045
    %3833 = vmatmul.mubr.f32.gmra.mrb[0].mxu0 %v3042
    %v3834 = vpop.f32.mrb[0].mxu0
    %v3835 = vadd.f32 %v3690, %v3834
    %v3836 = vpop.f32.mrb[0].mxu0
    %3837 = vmatprep.mubr.f32.mxu0 %v3055
    %3838 = vmatmul.mubr.f32.gmra.mrb[0].mxu0 %v3053
    %v3839 = vpop.f32.mrb[0].mxu0
    %v3840 = vadd.f32 %v3695, %v3839
    %v3841 = vpop.f32.mrb[0].mxu0
    %3842 = vmatprep.mubr.f32.mxu0 %v3065
    %3843 = vmatmul.mubr.f32.gmra.mrb[0].mxu0 %v3062
    %v3844 = vpop.f32.mrb[0].mxu0
    %v3845 = vadd.f32 %v3700, %v3844
    %v3846 = vpop.f32.mrb[0].mxu0
    %3847 = vmatprep.mubr.f32.mxu0 %v3075
    %3848 = vmatmul.mubr.f32.gmra.mrb[0].mxu0 %v3073
    %v3849 = vpop.f32.mrb[0].mxu0
    %v3850 = vadd.f32 %v3705, %v3849
    %v3851 = vpop.f32.mrb[0].mxu0
    %3852 = vmatprep.mubr.f32.mxu0 %v3085
    %3853 = vmatmul.mubr.f32.gmra.mrb[0].mxu0 %v3082
    %v3854 = vpop.f32.mrb[0].mxu0
    %v3855 = vadd.f32 %v3710, %v3854
    %v3856 = vpop.f32.mrb[0].mxu0
    %3857 = vmatprep.mubr.f32.mxu0 %v3095
    %3858 = vmatmul.mubr.f32.gmra.mrb[0].mxu0 %v3093
    %v3859 = vpop.f32.mrb[0].mxu0
    %v3860 = vadd.f32 %v3715, %v3859
    %v3861 = vpop.f32.mrb[0].mxu0
    %3862 = vmatprep.mubr.f32.mxu0 %v3105
    %3863 = vmatmul.mubr.f32.gmra.mrb[0].mxu0 %v3102
    %v3864 = vpop.f32.mrb[0].mxu0
    %v3865 = vadd.f32 %v3720, %v3864
    %v3866 = vpop.f32.mrb[0].mxu0
    %3867 = vmatprep.mubr.f32.mxu0 %v3115
    %3868 = vmatmul.mubr.f32.gmra.mrb[0].mxu0 %v3113
    %v3869 = vpop.f32.mrb[0].mxu0
    %v3870 = vadd.f32 %v3725, %v3869
    %v3871 = vpop.f32.mrb[0].mxu0
    %3872 = vmatprep.mubr.f32.mxu0 %v3125
    %3873 = vmatmul.mubr.f32.gmra.mrb[0].mxu0 %v3122
    %v3874 = vpop.f32.mrb[0].mxu0
    %v3875 = vadd.f32 %v3730, %v3874
    %v3876 = vpop.f32.mrb[0].mxu0
    %3877 = vmatprep.mubr.f32.mxu0 %v3135
    %3878 = vmatmul.mubr.f32.gmra.mrb[0].mxu0 %v3133
    %v3879 = vpop.f32.mrb[0].mxu0
    %v3880 = vadd.f32 %v3735, %v3879
    %v3881 = vpop.f32.mrb[0].mxu0
    %3882 = vmatprep.mubr.f32.mxu0 %v3145
    %3883 = vmatmul.mubr.f32.gmra.mrb[0].mxu0 %v3142
    %v3884 = vpop.f32.mrb[0].mxu0
    %v3885 = vadd.f32 %v3740, %v3884
    %v3886 = vpop.f32.mrb[0].mxu0
    %3887 = vmatprep.mubr.f32.mxu0 %v3155
    %3888 = vmatmul.mubr.f32.gmra.mrb[0].mxu0 %v3153
    %v3889 = vpop.f32.mrb[0].mxu0
    %v3890 = vadd.f32 %v3745, %v3889
    %v3891 = vpop.f32.mrb[0].mxu0
    %3892 = vmatprep.mubr.f32.mxu0 %v3165
    %3893 = vmatmul.mubr.f32.gmra.mrb[0].mxu0 %v3162
    %v3894 = vpop.f32.mrb[0].mxu0
    %v3895 = vadd.f32 %v3750, %v3894
    %v3896 = vpop.f32.mrb[0].mxu0
    %3897 = vmatprep.mubr.f32.mxu0 %v3175
    %3898 = vmatmul.mubr.f32.gmra.mrb[0].mxu0 %v3173
    %v3899 = vpop.f32.mrb[0].mxu0
    %v3900 = vadd.f32 %v3755, %v3899
    %v3901 = vpop.f32.mrb[0].mxu0
    %3902 = vdwg.mxu0
    %3903 = vmatprep.subr.mxu0 0.0
    %3904 = vmatpush1.msra.mxu0 %v3420
    %3905 = vmatprep.subr.mxu0 0.0
    %3906 = vmatpush1.msra.mxu0 %v3421
    %3907 = vmatprep.subr.mxu0 0.0
    %3908 = vmatpush1.msra.mxu0 %v3422
    %3909 = vmatprep.subr.mxu0 0.0
    %3910 = vmatpush1.msra.mxu0 %v3423
    %3911 = vmatprep.subr.mxu0 0.0
    %3912 = vmatpush1.msra.mxu0 %v3424
    %3913 = vmatprep.subr.mxu0 0.0
    %3914 = vmatpush1.msra.mxu0 %v3425
    %3915 = vmatprep.subr.mxu0 0.0
    %3916 = vmatpush1.msra.mxu0 %v3426
    %3917 = vmatprep.subr.mxu0 0.0
    %3918 = vmatpush1.msra.mxu0 %v3427
    %3919 = vmatprep.subr.mxu0 0.0
    %3920 = vmatpush1.msra.mxu0 %v3428
    %3921 = vmatprep.subr.mxu0 0.0
    %3922 = vmatpush1.msra.mxu0 %v3429
    %3923 = vmatprep.subr.mxu0 0.0
    %3924 = vmatpush1.msra.mxu0 %v3430
    %3925 = vmatprep.subr.mxu0 0.0
    %3926 = vmatpush1.msra.mxu0 %v3431
    %3927 = vmatprep.subr.mxu0 0.0
    %3928 = vmatpush1.msra.mxu0 %v3432
    %3929 = vmatprep.subr.mxu0 0.0
    %3930 = vmatpush1.msra.mxu0 %v3433
    %3931 = vmatprep.subr.mxu0 0.0
    %3932 = vmatpush1.msra.mxu0 %v3434
    %3933 = vmatprep.subr.mxu0 0.0
    %3934 = vmatpush1.msra.mxu0 %v3435
    %3935 = vmatprep.subr.mxu0 0.0
    %3936 = vmatpush1.msra.mxu0 %v3436
    %3937 = vmatprep.subr.mxu0 0.0
    %3938 = vmatpush1.msra.mxu0 %v3437
    %3939 = vmatprep.subr.mxu0 0.0
    %3940 = vmatpush1.msra.mxu0 %v3438
    %3941 = vmatprep.subr.mxu0 0.0
    %3942 = vmatpush1.msra.mxu0 %v3439
    %3943 = vmatprep.subr.mxu0 0.0
    %3944 = vmatpush1.msra.mxu0 %v3440
    %3945 = vmatprep.subr.mxu0 0.0
    %3946 = vmatpush1.msra.mxu0 %v3441
    %3947 = vmatprep.subr.mxu0 0.0
    %3948 = vmatpush1.msra.mxu0 %v3442
    %3949 = vmatprep.subr.mxu0 0.0
    %3950 = vmatpush1.msra.mxu0 %v3443
    %3951 = vmatprep.subr.mxu0 0.0
    %3952 = vmatpush1.msra.mxu0 %v3444
    %3953 = vmatprep.subr.mxu0 0.0
    %3954 = vmatpush1.msra.mxu0 %v3445
    %3955 = vmatprep.subr.mxu0 0.0
    %3956 = vmatpush1.msra.mxu0 %v3446
    %3957 = vmatprep.subr.mxu0 0.0
    %3958 = vmatpush1.msra.mxu0 %v3447
    %3959 = vmatprep.subr.mxu0 0.0
    %3960 = vmatpush1.msra.mxu0 %v3448
    %3961 = vmatprep.subr.mxu0 0.0
    %3962 = vmatpush1.msra.mxu0 %v3449
    %3963 = vmatprep.subr.mxu0 0.0
    %3964 = vmatpush1.msra.mxu0 %v3450
    %3965 = vmatprep.subr.mxu0 0.0
    %3966 = vmatpush1.msra.mxu0 %v3451
    %3967 = vmatprep.mubr.f32.mxu0 %v3031
    %3968 = vmatmul.mubr.f32.gmra.mrb[0].mxu0 %v3028
    %v3969 = vpop.f32.mrb[0].mxu0
    %v3970 = vadd.f32 %v3825, %v3969
    %v3971 = vpop.f32.mrb[0].mxu0
    %3972 = vmatprep.mubr.f32.mxu0 %v3039
    %3973 = vmatmul.mubr.f32.gmra.mrb[0].mxu0 %v3037
    %v3974 = vpop.f32.mrb[0].mxu0
    %v3975 = vadd.f32 %v3830, %v3974
    %v3976 = vpop.f32.mrb[0].mxu0
    %3977 = vmatprep.mubr.f32.mxu0 %v3051
    %3978 = vmatmul.mubr.f32.gmra.mrb[0].mxu0 %v3048
    %v3979 = vpop.f32.mrb[0].mxu0
    %v3980 = vadd.f32 %v3835, %v3979
    %v3981 = vpop.f32.mrb[0].mxu0
    %3982 = vmatprep.mubr.f32.mxu0 %v3059
    %3983 = vmatmul.mubr.f32.gmra.mrb[0].mxu0 %v3057
    %v3984 = vpop.f32.mrb[0].mxu0
    %v3985 = vadd.f32 %v3840, %v3984
    %v3986 = vpop.f32.mrb[0].mxu0
    %3987 = vmatprep.mubr.f32.mxu0 %v3071
    %3988 = vmatmul.mubr.f32.gmra.mrb[0].mxu0 %v3068
    %v3989 = vpop.f32.mrb[0].mxu0
    %v3990 = vadd.f32 %v3845, %v3989
    %v3991 = vpop.f32.mrb[0].mxu0
    %3992 = vmatprep.mubr.f32.mxu0 %v3079
    %3993 = vmatmul.mubr.f32.gmra.mrb[0].mxu0 %v3077
    %v3994 = vpop.f32.mrb[0].mxu0
    %v3995 = vadd.f32 %v3850, %v3994
    %v3996 = vpop.f32.mrb[0].mxu0
    %3997 = vmatprep.mubr.f32.mxu0 %v3091
    %3998 = vmatmul.mubr.f32.gmra.mrb[0].mxu0 %v3088
    %v3999 = vpop.f32.mrb[0].mxu0
    %v4000 = vadd.f32 %v3855, %v3999
    %v4001 = vpop.f32.mrb[0].mxu0
    %4002 = vmatprep.mubr.f32.mxu0 %v3099
    %4003 = vmatmul.mubr.f32.gmra.mrb[0].mxu0 %v3097
    %v4004 = vpop.f32.mrb[0].mxu0
    %v4005 = vadd.f32 %v3860, %v4004
    %v4006 = vpop.f32.mrb[0].mxu0
    %4007 = vmatprep.mubr.f32.mxu0 %v3111
    %4008 = vmatmul.mubr.f32.gmra.mrb[0].mxu0 %v3108
    %v4009 = vpop.f32.mrb[0].mxu0
    %v4010 = vadd.f32 %v3865, %v4009
    %v4011 = vpop.f32.mrb[0].mxu0
    %4012 = vmatprep.mubr.f32.mxu0 %v3119
    %4013 = vmatmul.mubr.f32.gmra.mrb[0].mxu0 %v3117
    %v4014 = vpop.f32.mrb[0].mxu0
    %v4015 = vadd.f32 %v3870, %v4014
    %v4016 = vpop.f32.mrb[0].mxu0
    %4017 = vmatprep.mubr.f32.mxu0 %v3131
    %4018 = vmatmul.mubr.f32.gmra.mrb[0].mxu0 %v3128
    %v4019 = vpop.f32.mrb[0].mxu0
    %v4020 = vadd.f32 %v3875, %v4019
    %v4021 = vpop.f32.mrb[0].mxu0
    %4022 = vmatprep.mubr.f32.mxu0 %v3139
    %4023 = vmatmul.mubr.f32.gmra.mrb[0].mxu0 %v3137
    %v4024 = vpop.f32.mrb[0].mxu0
    %v4025 = vadd.f32 %v3880, %v4024
    %v4026 = vpop.f32.mrb[0].mxu0
    %4027 = vmatprep.mubr.f32.mxu0 %v3151
    %4028 = vmatmul.mubr.f32.gmra.mrb[0].mxu0 %v3148
    %v4029 = vpop.f32.mrb[0].mxu0
    %v4030 = vadd.f32 %v3885, %v4029
    %v4031 = vpop.f32.mrb[0].mxu0
    %4032 = vmatprep.mubr.f32.mxu0 %v3159
    %4033 = vmatmul.mubr.f32.gmra.mrb[0].mxu0 %v3157
    %v4034 = vpop.f32.mrb[0].mxu0
    %v4035 = vadd.f32 %v3890, %v4034
    %v4036 = vpop.f32.mrb[0].mxu0
    %4037 = vmatprep.mubr.f32.mxu0 %v3171
    %4038 = vmatmul.mubr.f32.gmra.mrb[0].mxu0 %v3168
    %v4039 = vpop.f32.mrb[0].mxu0
    %v4040 = vadd.f32 %v3895, %v4039
    %v4041 = vpop.f32.mrb[0].mxu0
    %4042 = vmatprep.mubr.f32.mxu0 %v3179
    %4043 = vmatmul.mubr.f32.gmra.mrb[0].mxu0 %v3177
    %v4044 = vpop.f32.mrb[0].mxu0
    %v4045 = vadd.f32 %v3900, %v4044
    %v4046 = vpop.f32.mrb[0].mxu0
    %4047 = vdwg.mxu0
    %4048 = vmatprep.subr.mxu0 0.0
    %4049 = vmatpush1.msra.mxu0 %v3452
    %4050 = vmatprep.subr.mxu0 0.0
    %4051 = vmatpush1.msra.mxu0 %v3453
    %4052 = vmatprep.subr.mxu0 0.0
    %4053 = vmatpush1.msra.mxu0 %v3454
    %4054 = vmatprep.subr.mxu0 0.0
    %4055 = vmatpush1.msra.mxu0 %v3455
    %4056 = vmatprep.subr.mxu0 0.0
    %4057 = vmatpush1.msra.mxu0 %v3456
    %4058 = vmatprep.subr.mxu0 0.0
    %4059 = vmatpush1.msra.mxu0 %v3457
    %4060 = vmatprep.subr.mxu0 0.0
    %4061 = vmatpush1.msra.mxu0 %v3458
    %4062 = vmatprep.subr.mxu0 0.0
    %4063 = vmatpush1.msra.mxu0 %v3459
    %4064 = vmatprep.subr.mxu0 0.0
    %4065 = vmatpush1.msra.mxu0 %v3460
    %4066 = vmatprep.subr.mxu0 0.0
    %4067 = vmatpush1.msra.mxu0 %v3461
    %4068 = vmatprep.subr.mxu0 0.0
    %4069 = vmatpush1.msra.mxu0 %v3462
    %4070 = vmatprep.subr.mxu0 0.0
    %4071 = vmatpush1.msra.mxu0 %v3463
    %4072 = vmatprep.subr.mxu0 0.0
    %4073 = vmatpush1.msra.mxu0 %v3464
    %4074 = vmatprep.subr.mxu0 0.0
    %4075 = vmatpush1.msra.mxu0 %v3465
    %4076 = vmatprep.subr.mxu0 0.0
    %4077 = vmatpush1.msra.mxu0 %v3466
    %4078 = vmatprep.subr.mxu0 0.0
    %4079 = vmatpush1.msra.mxu0 %v3467
    %4080 = vmatprep.subr.mxu0 0.0
    %4081 = vmatpush1.msra.mxu0 0.0
    %4082 = vmatprep.subr.mxu0 0.0
    %4083 = vmatpush1.msra.mxu0 0.0
    %4084 = vmatprep.subr.mxu0 0.0
    %4085 = vmatpush1.msra.mxu0 0.0
    %4086 = vmatprep.subr.mxu0 0.0
    %4087 = vmatpush1.msra.mxu0 0.0
    %4088 = vmatprep.subr.mxu0 0.0
    %4089 = vmatpush1.msra.mxu0 0.0
    %4090 = vmatprep.subr.mxu0 0.0
    %4091 = vmatpush1.msra.mxu0 0.0
    %4092 = vmatprep.subr.mxu0 0.0
    %4093 = vmatpush1.msra.mxu0 0.0
    %4094 = vmatprep.subr.mxu0 0.0
    %4095 = vmatpush1.msra.mxu0 0.0
    %4096 = vmatprep.subr.mxu0 0.0
    %4097 = vmatpush1.msra.mxu0 0.0
    %4098 = vmatprep.subr.mxu0 0.0
    %4099 = vmatpush1.msra.mxu0 0.0
    %4100 = vmatprep.subr.mxu0 0.0
    %4101 = vmatpush1.msra.mxu0 0.0
    %4102 = vmatprep.subr.mxu0 0.0
    %4103 = vmatpush1.msra.mxu0 0.0
    %4104 = vmatprep.subr.mxu0 0.0
    %4105 = vmatpush1.msra.mxu0 0.0
    %4106 = vmatprep.subr.mxu0 0.0
    %4107 = vmatpush1.msra.mxu0 0.0
    %4108 = vmatprep.subr.mxu0 0.0
    %4109 = vmatpush1.msra.mxu0 0.0
    %4110 = vmatprep.subr.mxu0 0.0
    %4111 = vmatpush1.msra.mxu0 0.0
    %4112 = vmatprep.mubr.f32.mxu0 0.0
    %4113 = vmatmul.mubr.f32.gmra.mrb[0].mxu0 %v3270
    %v4114 = vpop.f32.mrb[0].mxu0
    %v4115 = vadd.f32 %v3970, %v4114
    %v4116 = vpop.f32.mrb[0].mxu0
    %4117 = vmatprep.mubr.f32.mxu0 0.0
    %4118 = vmatmul.mubr.f32.gmra.mrb[0].mxu0 %v3272
    %v4119 = vpop.f32.mrb[0].mxu0
    %v4120 = vadd.f32 %v3975, %v4119
    %v4121 = vpop.f32.mrb[0].mxu0
    %4122 = vmatprep.mubr.f32.mxu0 0.0
    %4123 = vmatmul.mubr.f32.gmra.mrb[0].mxu0 %v3275
    %v4124 = vpop.f32.mrb[0].mxu0
    %v4125 = vadd.f32 %v3980, %v4124
    %v4126 = vpop.f32.mrb[0].mxu0
    %4127 = vmatprep.mubr.f32.mxu0 0.0
    %4128 = vmatmul.mubr.f32.gmra.mrb[0].mxu0 %v3277
    %v4129 = vpop.f32.mrb[0].mxu0
    %v4130 = vadd.f32 %v3985, %v4129
    %v4131 = vpop.f32.mrb[0].mxu0
    %4132 = vmatprep.mubr.f32.mxu0 0.0
    %4133 = vmatmul.mubr.f32.gmra.mrb[0].mxu0 %v3280
    %v4134 = vpop.f32.mrb[0].mxu0
    %v4135 = vadd.f32 %v3990, %v4134
    %v4136 = vpop.f32.mrb[0].mxu0
    %4137 = vmatprep.mubr.f32.mxu0 0.0
    %4138 = vmatmul.mubr.f32.gmra.mrb[0].mxu0 %v3282
    %v4139 = vpop.f32.mrb[0].mxu0
    %v4140 = vadd.f32 %v3995, %v4139
    %v4141 = vpop.f32.mrb[0].mxu0
    %4142 = vmatprep.mubr.f32.mxu0 0.0
    %4143 = vmatmul.mubr.f32.gmra.mrb[0].mxu0 %v3285
    %v4144 = vpop.f32.mrb[0].mxu0
    %v4145 = vadd.f32 %v4000, %v4144
    %v4146 = vpop.f32.mrb[0].mxu0
    %4147 = vmatprep.mubr.f32.mxu0 0.0
    %4148 = vmatmul.mubr.f32.gmra.mrb[0].mxu0 %v3287
    %v4149 = vpop.f32.mrb[0].mxu0
    %v4150 = vadd.f32 %v4005, %v4149
    %v4151 = vpop.f32.mrb[0].mxu0
    %4152 = vmatprep.mubr.f32.mxu0 0.0
    %4153 = vmatmul.mubr.f32.gmra.mrb[0].mxu0 %v3290
    %v4154 = vpop.f32.mrb[0].mxu0
    %v4155 = vadd.f32 %v4010, %v4154
    %v4156 = vpop.f32.mrb[0].mxu0
    %4157 = vmatprep.mubr.f32.mxu0 0.0
    %4158 = vmatmul.mubr.f32.gmra.mrb[0].mxu0 %v3292
    %v4159 = vpop.f32.mrb[0].mxu0
    %v4160 = vadd.f32 %v4015, %v4159
    %v4161 = vpop.f32.mrb[0].mxu0
    %4162 = vmatprep.mubr.f32.mxu0 0.0
    %4163 = vmatmul.mubr.f32.gmra.mrb[0].mxu0 %v3295
    %v4164 = vpop.f32.mrb[0].mxu0
    %v4165 = vadd.f32 %v4020, %v4164
    %v4166 = vpop.f32.mrb[0].mxu0
    %4167 = vmatprep.mubr.f32.mxu0 0.0
    %4168 = vmatmul.mubr.f32.gmra.mrb[0].mxu0 %v3297
    %v4169 = vpop.f32.mrb[0].mxu0
    %v4170 = vadd.f32 %v4025, %v4169
    %v4171 = vpop.f32.mrb[0].mxu0
    %4172 = vmatprep.mubr.f32.mxu0 0.0
    %4173 = vmatmul.mubr.f32.gmra.mrb[0].mxu0 %v3300
    %v4174 = vpop.f32.mrb[0].mxu0
    %v4175 = vadd.f32 %v4030, %v4174
    %v4176 = vpop.f32.mrb[0].mxu0
    %4177 = vmatprep.mubr.f32.mxu0 0.0
    %4178 = vmatmul.mubr.f32.gmra.mrb[0].mxu0 %v3302
    %v4179 = vpop.f32.mrb[0].mxu0
    %v4180 = vadd.f32 %v4035, %v4179
    %v4181 = vpop.f32.mrb[0].mxu0
    %4182 = vmatprep.mubr.f32.mxu0 0.0
    %4183 = vmatmul.mubr.f32.gmra.mrb[0].mxu0 %v3305
    %v4184 = vpop.f32.mrb[0].mxu0
    %v4185 = vadd.f32 %v4040, %v4184
    %v4186 = vpop.f32.mrb[0].mxu0
    %4187 = vmatprep.mubr.f32.mxu0 0.0
    %4188 = vmatmul.mubr.f32.gmra.mrb[0].mxu0 %v3307
    %v4189 = vpop.f32.mrb[0].mxu0
    %v4190 = vadd.f32 %v4045, %v4189
    %v4191 = vpop.f32.mrb[0].mxu0
    %4192 = vdwg.mxu0
    %4193 = vrot.lane.b32.xlu0 %v409, 32
    %v4194 = vpop.permute.xlu0 %4193
    %4195 = vrot.lane.b32.xlu0 %v410, 32
    %v4196 = vpop.permute.xlu0 %4195
    %4197 = vrot.lane.b32.xlu0 %v411, 32
    %v4198 = vpop.permute.xlu0 %4197
    %4199 = vrot.lane.b32.xlu0 %v379, 32
    %v4200 = vpop.permute.xlu0 %4199
    %4201 = vrot.lane.b32.xlu0 %v204, 32
    %v4202 = vpop.permute.xlu0 %4201
    %4203 = vrot.lane.b32.xlu0 %v412, 32
    %v4204 = vpop.permute.xlu0 %4203
    %4205 = vrot.lane.b32.xlu0 %v425, 32
    %v4206 = vpop.permute.xlu0 %4205
    %4207 = vrot.lane.b32.xlu0 %v426, 32
    %v4208 = vpop.permute.xlu0 %4207
    %4209 = vrot.lane.b32.xlu0 %v427, 32
    %v4210 = vpop.permute.xlu0 %4209
    %4211 = vrot.lane.b32.xlu0 %v395, 32
    %v4212 = vpop.permute.xlu0 %4211
    %4213 = vrot.lane.b32.xlu0 %v252, 32
    %v4214 = vpop.permute.xlu0 %4213
    %4215 = vrot.lane.b32.xlu0 %v428, 32
    %v4216 = vpop.permute.xlu0 %4215
    %v4229 = vsel %vm1241, %v372, %v888
    %v4230 = vsel %vm1241, %v183, %v890
    %v4231 = vsel %vm1241, %v405, %v4194
    %v4232 = vsel %vm1241, %v373, %v892
    %v4233 = vsel %vm1241, %v186, %v894
    %v4234 = vsel %vm1241, %v406, %v4196
    %v4235 = vsel %vm1241, %v374, %v896
    %v4236 = vsel %vm1241, %v189, %v898
    %v4237 = vsel %vm1241, %v407, %v4198
    %v4238 = vsel %vm1241, %v375, %v4200
    %v4239 = vsel %vm1241, %v192, %v4202
    %v4240 = vsel %vm1241, %v408, %v4204
    %v4241 = vsel %vm1241, %v388, %v904
    %v4242 = vsel %vm1241, %v231, %v906
    %v4243 = vsel %vm1241, %v421, %v4206
    %v4244 = vsel %vm1241, %v389, %v908
    %v4245 = vsel %vm1241, %v234, %v910
    %v4246 = vsel %vm1241, %v422, %v4208
    %v4247 = vsel %vm1241, %v390, %v912
    %v4248 = vsel %vm1241, %v237, %v914
    %v4249 = vsel %vm1241, %v423, %v4210
    %v4250 = vsel %vm1241, %v391, %v4212
    %v4251 = vsel %vm1241, %v240, %v4214
    %v4252 = vsel %vm1241, %v424, %v4216
    %v4253 = vsel %vm1256, %v4229, %v1759
    %v4254 = vsel %vm1256, %v4230, %v1761
    %v4255 = vsel %vm1256, %v4231, %v1763
    %v4256 = vsel %vm1256, %v4232, %v1765
    %v4257 = vsel %vm1256, %v4233, %v1767
    %v4258 = vsel %vm1256, %v4234, %v1769
    %v4259 = vsel %vm1256, %v4235, %v1771
    %v4260 = vsel %vm1256, %v4236, %v1773
    %v4261 = vsel %vm1256, %v4237, %v1775
    %v4262 = vsel %vm1256, %v4238, %v1777
    %v4263 = vsel %vm1256, %v4239, %v1779
    %v4264 = vsel %vm1256, %v4240, %v1781
    %v4265 = vsel %vm1256, %v4241, %v1783
    %v4266 = vsel %vm1256, %v4242, %v1785
    %v4267 = vsel %vm1256, %v4243, %v1787
    %v4268 = vsel %vm1256, %v4244, %v1789
    %v4269 = vsel %vm1256, %v4245, %v1791
    %v4270 = vsel %vm1256, %v4246, %v1793
    %v4271 = vsel %vm1256, %v4247, %v1795
    %v4272 = vsel %vm1256, %v4248, %v1797
    %v4273 = vsel %vm1256, %v4249, %v1799
    %v4274 = vsel %vm1256, %v4250, %v1801
    %v4275 = vsel %vm1256, %v4251, %v1803
    %v4276 = vsel %vm1256, %v4252, %v1805
    %v4277 = vsel %vm1271, %v4253, %v2367
    %v4278 = vsel %vm1271, %v4254, %v2369
    %v4279 = vsel %vm1271, %v4255, %v2371
    %v4280 = vsel %vm1271, %v4256, %v2373
    %v4281 = vsel %vm1271, %v4257, %v2375
    %v4282 = vsel %vm1271, %v4258, %v2377
    %v4283 = vsel %vm1271, %v4259, %v2379
    %v4284 = vsel %vm1271, %v4260, %v2381
    %v4285 = vsel %vm1271, %v4261, %v2383
    %v4286 = vsel %vm1271, %v4262, %v2385
    %v4287 = vsel %vm1271, %v4263, %v2387
    %v4288 = vsel %vm1271, %v4264, %v2389
    %v4289 = vsel %vm1271, %v4265, %v2391
    %v4290 = vsel %vm1271, %v4266, %v2393
    %v4291 = vsel %vm1271, %v4267, %v2395
    %v4292 = vsel %vm1271, %v4268, %v2397
    %v4293 = vsel %vm1271, %v4269, %v2399
    %v4294 = vsel %vm1271, %v4270, %v2401
    %v4295 = vsel %vm1271, %v4271, %v2403
    %v4296 = vsel %vm1271, %v4272, %v2405
    %v4297 = vsel %vm1271, %v4273, %v2407
    %v4298 = vsel %vm1271, %v4274, %v2409
    %v4299 = vsel %vm1271, %v4275, %v2411
    %v4300 = vsel %vm1271, %v4276, %v2413
    %v4325 = vrot.slane %v4277, 1
    %v4326 = vrot.slane %v4278, 1
    %v4327 = vsel %vm451, %v4325, %v4326
    %v4328 = vrot.slane %v4279, 1
    %v4329 = vsel %vm451, %v4326, %v4328
    %v4330 = vrot.slane %v4280, 1
    %v4331 = vrot.slane %v4281, 1
    %v4332 = vsel %vm451, %v4330, %v4331
    %v4333 = vrot.slane %v4282, 1
    %v4334 = vsel %vm451, %v4331, %v4333
    %v4335 = vrot.slane %v4283, 1
    %v4336 = vrot.slane %v4284, 1
    %v4337 = vsel %vm451, %v4335, %v4336
    %v4338 = vrot.slane %v4285, 1
    %v4339 = vsel %vm451, %v4336, %v4338
    %v4340 = vrot.slane %v4286, 1
    %v4341 = vrot.slane %v4287, 1
    %v4342 = vsel %vm451, %v4340, %v4341
    %v4343 = vrot.slane %v4288, 1
    %v4344 = vsel %vm451, %v4341, %v4343
    %v4345 = vrot.slane %v4289, 1
    %v4346 = vrot.slane %v4290, 1
    %v4347 = vsel %vm451, %v4345, %v4346
    %v4348 = vrot.slane %v4291, 1
    %v4349 = vsel %vm451, %v4346, %v4348
    %v4350 = vrot.slane %v4292, 1
    %v4351 = vrot.slane %v4293, 1
    %v4352 = vsel %vm451, %v4350, %v4351
    %v4353 = vrot.slane %v4294, 1
    %v4354 = vsel %vm451, %v4351, %v4353
    %v4355 = vrot.slane %v4295, 1
    %v4356 = vrot.slane %v4296, 1
    %v4357 = vsel %vm451, %v4355, %v4356
    %v4358 = vrot.slane %v4297, 1
    %v4359 = vsel %vm451, %v4356, %v4358
    %v4360 = vrot.slane %v4298, 1
    %v4361 = vrot.slane %v4299, 1
    %v4362 = vsel %vm451, %v4360, %v4361
    %v4363 = vrot.slane %v4300, 1
    %v4364 = vsel %vm451, %v4361, %v4363
    %v4381 = vld [vmem:[%s2] sm:$0x1]
    %v4382 = vld [vmem:[%s2 + $0x1] sm:$0x1]
    %v4383 = vld [vmem:[%s2 + $0x2] sm:$0x1]
    %v4384 = vld [vmem:[%s3] sm:$0xff]
    %v4385 = vld [vmem:[%s3 + $0x8] sm:$0xff]
    %v4386 = vld [vmem:[%s3 + $0x10] sm:$0xff]
    %v4387 = vld [vmem:[%s3 + $0x18] sm:$0xff]
    %v4388 = vld [vmem:[%s3 + $0x20] sm:$0xff]
    %v4389 = vld [vmem:[%s3 + $0x28] sm:$0xff]
    %v4390 = vld [vmem:[%s3 + $0x30] sm:$0xff]
    %v4391 = vld [vmem:[%s3 + $0x38] sm:$0xff]
    %v4392 = vld [vmem:[%s3 + $0x40] sm:$0xff]
    %v4393 = vld [vmem:[%s3 + $0x48] sm:$0xff]
    %v4394 = vld [vmem:[%s3 + $0x50] sm:$0xff]
    %v4395 = vld [vmem:[%s3 + $0x58] sm:$0xff]
    %v4396 = vld [vmem:[%s3 + $0x60] sm:$0xff]
    %v4397 = vld [vmem:[%s3 + $0x68] sm:$0xff]
    %v4398 = vld [vmem:[%s3 + $0x70] sm:$0xff]
    %v4399 = vld [vmem:[%s3 + $0x78] sm:$0xff]
    %v4400 = vld [vmem:[%s4] sm:$0xff]
    %v4401 = vlaneseq
    %v4402 = vshrl.u32 %v4401, 7
    %v4403 = vsub.s32 0, %v4402
    %v4404 = vrot.slane %v4381, %v4403
    %v4405 = vadd.f32 %v4115, %v4404
    %v4406 = vadd.f32 %v4120, %v4404
    %v4407 = vadd.f32 %v4125, %v4404
    %v4408 = vadd.f32 %v4130, %v4404
    %v4409 = vadd.f32 %v4135, %v4404
    %v4410 = vadd.f32 %v4140, %v4404
    %v4411 = vadd.f32 %v4145, %v4404
    %v4412 = vadd.f32 %v4150, %v4404
    %v4413 = vadd.f32 %v4155, %v4404
    %v4414 = vadd.f32 %v4160, %v4404
    %v4415 = vadd.f32 %v4165, %v4404
    %v4416 = vadd.f32 %v4170, %v4404
    %v4417 = vadd.f32 %v4175, %v4404
    %v4418 = vadd.f32 %v4180, %v4404
    %v4419 = vadd.f32 %v4185, %v4404
    %v4420 = vadd.f32 %v4190, %v4404
    %v4421 = vadd.f32 %v4405, %v4406
    %v4422 = vadd.f32 %v4421, %v4407
    %v4423 = vadd.f32 %v4422, %v4408
    %v4424 = vadd.f32 %v4423, %v4409
    %v4425 = vadd.f32 %v4424, %v4410
    %v4426 = vadd.f32 %v4425, %v4411
    %v4427 = vadd.f32 %v4426, %v4412
    %v4428 = vrot.slane %v4427, 4
    %v4429 = vadd.f32 %v4427, %v4428
    %v4430 = vrot.slane %v4429, 2
    %v4431 = vadd.f32 %v4429, %v4430
    %v4432 = vrot.slane %v4431, 1
    %v4433 = vadd.f32 %v4431, %v4432
    %v4434 = vadd.f32 %v4413, %v4414
    %v4435 = vadd.f32 %v4434, %v4415
    %v4436 = vadd.f32 %v4435, %v4416
    %v4437 = vadd.f32 %v4436, %v4417
    %v4438 = vadd.f32 %v4437, %v4418
    %v4439 = vadd.f32 %v4438, %v4419
    %v4440 = vadd.f32 %v4439, %v4420
    %v4441 = vrot.slane %v4440, 4
    %v4442 = vadd.f32 %v4440, %v4441
    %v4443 = vrot.slane %v4442, 2
    %v4444 = vadd.f32 %v4442, %v4443
    %v4445 = vrot.slane %v4444, 1
    %v4446 = vadd.f32 %v4444, %v4445
    %vm4449 = vcmask 1041409
    %v4450 = vsel %vm4449, %v4446, %v4433
    %4452 = vmatprep.subr.mxu0 0.0
    %4453 = vmatpush1.msra.mxu0 %v4384
    %4454 = vmatprep.subr.mxu0 0.0
    %4455 = vmatpush1.msra.mxu0 %v4385
    %4456 = vmatprep.subr.mxu0 0.0
    %4457 = vmatpush1.msra.mxu0 %v4386
    %4458 = vmatprep.subr.mxu0 0.0
    %4459 = vmatpush1.msra.mxu0 %v4387
    %4460 = vmatprep.subr.mxu0 0.0
    %4461 = vmatpush1.msra.mxu0 %v4388
    %4462 = vmatprep.subr.mxu0 0.0
    %4463 = vmatpush1.msra.mxu0 %v4389
    %4464 = vmatprep.subr.mxu0 0.0
    %4465 = vmatpush1.msra.mxu0 %v4390
    %4466 = vmatprep.subr.mxu0 0.0
    %4467 = vmatpush1.msra.mxu0 %v4391
    %4468 = vmatprep.subr.mxu0 0.0
    %4469 = vmatpush1.msra.mxu0 %v4392
    %4470 = vmatprep.subr.mxu0 0.0
    %4471 = vmatpush1.msra.mxu0 %v4393
    %4472 = vmatprep.subr.mxu0 0.0
    %4473 = vmatpush1.msra.mxu0 %v4394
    %4474 = vmatprep.subr.mxu0 0.0
    %4475 = vmatpush1.msra.mxu0 %v4395
    %4476 = vmatprep.subr.mxu0 0.0
    %4477 = vmatpush1.msra.mxu0 %v4396
    %4478 = vmatprep.subr.mxu0 0.0
    %4479 = vmatpush1.msra.mxu0 %v4397
    %4480 = vmatprep.subr.mxu0 0.0
    %4481 = vmatpush1.msra.mxu0 %v4398
    %4482 = vmatprep.subr.mxu0 0.0
    %4483 = vmatpush1.msra.mxu0 %v4399
    %4484 = vmatprep.subr.mxu0 0.0
    %4485 = vmatpush1.msra.mxu0 0.0
    %4486 = vmatprep.subr.mxu0 0.0
    %4487 = vmatpush1.msra.mxu0 0.0
    %4488 = vmatprep.subr.mxu0 0.0
    %4489 = vmatpush1.msra.mxu0 0.0
    %4490 = vmatprep.subr.mxu0 0.0
    %4491 = vmatpush1.msra.mxu0 0.0
    %4492 = vmatprep.subr.mxu0 0.0
    %4493 = vmatpush1.msra.mxu0 0.0
    %4494 = vmatprep.subr.mxu0 0.0
    %4495 = vmatpush1.msra.mxu0 0.0
    %4496 = vmatprep.subr.mxu0 0.0
    %4497 = vmatpush1.msra.mxu0 0.0
    %4498 = vmatprep.subr.mxu0 0.0
    %4499 = vmatpush1.msra.mxu0 0.0
    %4500 = vmatprep.subr.mxu0 0.0
    %4501 = vmatpush1.msra.mxu0 0.0
    %4502 = vmatprep.subr.mxu0 0.0
    %4503 = vmatpush1.msra.mxu0 0.0
    %4504 = vmatprep.subr.mxu0 0.0
    %4505 = vmatpush1.msra.mxu0 0.0
    %4506 = vmatprep.subr.mxu0 0.0
    %4507 = vmatpush1.msra.mxu0 0.0
    %4508 = vmatprep.subr.mxu0 0.0
    %4509 = vmatpush1.msra.mxu0 0.0
    %4510 = vmatprep.subr.mxu0 0.0
    %4511 = vmatpush1.msra.mxu0 0.0
    %4512 = vmatprep.subr.mxu0 0.0
    %4513 = vmatpush1.msra.mxu0 0.0
    %4514 = vmatprep.subr.mxu0 0.0
    %4515 = vmatpush1.msra.mxu0 0.0
    %4516 = vmatprep.mubr.f32.mxu0 0.0
    %4517 = vmatmul.mubr.f32.gmra.mrb[0].mxu0 %v4450
    %v4518 = vpop.f32.mrb[0].mxu0
    %v4519 = vadd.f32 0.0, %v4518
    %v4520 = vpop.f32.mrb[0].mxu0
    %4521 = vdwg.mxu0
    %v4522 = vmul.f32 %v4519, 0.0009765625
    %vm4523 = vcmask 64512
    %v4525 = vsel %vm4523, %v4522, 0
    %4527 = vmatprep.subr.mxu0 0.0
    %4528 = vmatpush1.msra.mxu0 %v4400
    %4529 = vmatprep.subr.mxu0 0.0
    %4530 = vmatpush1.msra.mxu0 0.0
    %4531 = vmatprep.subr.mxu0 0.0
    %4532 = vmatpush1.msra.mxu0 0.0
    %4533 = vmatprep.subr.mxu0 0.0
    %4534 = vmatpush1.msra.mxu0 0.0
    %4535 = vmatprep.subr.mxu0 0.0
    %4536 = vmatpush1.msra.mxu0 0.0
    %4537 = vmatprep.subr.mxu0 0.0
    %4538 = vmatpush1.msra.mxu0 0.0
    %4539 = vmatprep.subr.mxu0 0.0
    %4540 = vmatpush1.msra.mxu0 0.0
    %4541 = vmatprep.subr.mxu0 0.0
    %4542 = vmatpush1.msra.mxu0 0.0
    %4543 = vmatprep.subr.mxu0 0.0
    %4544 = vmatpush1.msra.mxu0 0.0
    %4545 = vmatprep.subr.mxu0 0.0
    %4546 = vmatpush1.msra.mxu0 0.0
    %4547 = vmatprep.subr.mxu0 0.0
    %4548 = vmatpush1.msra.mxu0 0.0
    %4549 = vmatprep.subr.mxu0 0.0
    %4550 = vmatpush1.msra.mxu0 0.0
    %4551 = vmatprep.subr.mxu0 0.0
    %4552 = vmatpush1.msra.mxu0 0.0
    %4553 = vmatprep.subr.mxu0 0.0
    %4554 = vmatpush1.msra.mxu0 0.0
    %4555 = vmatprep.subr.mxu0 0.0
    %4556 = vmatpush1.msra.mxu0 0.0
    %4557 = vmatprep.subr.mxu0 0.0
    %4558 = vmatpush1.msra.mxu0 0.0
    %4559 = vmatprep.subr.mxu0 0.0
    %4560 = vmatpush1.msra.mxu0 0.0
    %4561 = vmatprep.subr.mxu0 0.0
    %4562 = vmatpush1.msra.mxu0 0.0
    %4563 = vmatprep.subr.mxu0 0.0
    %4564 = vmatpush1.msra.mxu0 0.0
    %4565 = vmatprep.subr.mxu0 0.0
    %4566 = vmatpush1.msra.mxu0 0.0
    %4567 = vmatprep.subr.mxu0 0.0
    %4568 = vmatpush1.msra.mxu0 0.0
    %4569 = vmatprep.subr.mxu0 0.0
    %4570 = vmatpush1.msra.mxu0 0.0
    %4571 = vmatprep.subr.mxu0 0.0
    %4572 = vmatpush1.msra.mxu0 0.0
    %4573 = vmatprep.subr.mxu0 0.0
    %4574 = vmatpush1.msra.mxu0 0.0
    %4575 = vmatprep.subr.mxu0 0.0
    %4576 = vmatpush1.msra.mxu0 0.0
    %4577 = vmatprep.subr.mxu0 0.0
    %4578 = vmatpush1.msra.mxu0 0.0
    %4579 = vmatprep.subr.mxu0 0.0
    %4580 = vmatpush1.msra.mxu0 0.0
    %4581 = vmatprep.subr.mxu0 0.0
    %4582 = vmatpush1.msra.mxu0 0.0
    %4583 = vmatprep.subr.mxu0 0.0
    %4584 = vmatpush1.msra.mxu0 0.0
    %4585 = vmatprep.subr.mxu0 0.0
    %4586 = vmatpush1.msra.mxu0 0.0
    %4587 = vmatprep.subr.mxu0 0.0
    %4588 = vmatpush1.msra.mxu0 0.0
    %4589 = vmatprep.subr.mxu0 0.0
    %4590 = vmatpush1.msra.mxu0 0.0
    %4591 = vmatprep.mubr.f32.mxu0 0.0
    %4592 = vmatmul.mubr.f32.gmra.mrb[0].mxu0 %v4525
    %v4593 = vpop.f32.mrb[0].mxu0
    %v4594 = vadd.f32 0.0, %v4593
    %v4595 = vpop.f32.mrb[0].mxu0
    %4596 = vdwg.mxu0
    %v4599 = vunpack.c.l.s4 1966171168
    %v4600 = vunpack.c.0.s8 %v4599
    %v4601 = vlaneseq
    %v4602 = vshrl.u32 %v4601, 7
    %v4603 = vsub.s32 %v4600, %v4602
    %v4604 = vrot.slane %v4594, %v4603
    %v4605 = vcombine.high %v4604, %v4604
    %v4607 = vunpack.c.l.s4 1966171168
    %v4608 = vunpack.c.0.s8 %v4607
    %v4609 = vlaneseq
    %v4610 = vshrl.u32 %v4609, 7
    %v4611 = vsub.s32 %v4608, %v4610
    %v4612 = vrot.slane %v4604, %v4611
    %v4614 = vunpack.c.l.s4 1966171168
    %v4615 = vunpack.c.0.s8 %v4614
    %v4616 = vlaneseq
    %v4617 = vshrl.u32 %v4616, 7
    %v4618 = vsub.s32 %v4615, %v4617
    %v4619 = vrot.slane %v4605, %v4618
    %v4620 = vlaneseq
    %v4621 = vshrl.u32 %v4620, 7
    %v4622 = vsub.s32 0, %v4621
    %v4623 = vrot.slane %v4612, %v4622
    %v4624 = vlaneseq
    %v4625 = vshrl.u32 %v4624, 7
    %v4626 = vsub.s32 0, %v4625
    %v4627 = vrot.slane %v4619, %v4626
    %v4630 = vsub.f32 %v4405, %v4623
    %v4631 = vsub.f32 %v4406, %v4623
    %v4632 = vsub.f32 %v4407, %v4623
    %v4633 = vsub.f32 %v4408, %v4623
    %v4634 = vsub.f32 %v4409, %v4623
    %v4635 = vsub.f32 %v4410, %v4623
    %v4636 = vsub.f32 %v4411, %v4623
    %v4637 = vsub.f32 %v4412, %v4623
    %v4638 = vsub.f32 %v4413, %v4627
    %v4639 = vsub.f32 %v4414, %v4627
    %v4640 = vsub.f32 %v4415, %v4627
    %v4641 = vsub.f32 %v4416, %v4627
    %v4642 = vsub.f32 %v4417, %v4627
    %v4643 = vsub.f32 %v4418, %v4627
    %v4644 = vsub.f32 %v4419, %v4627
    %v4645 = vsub.f32 %v4420, %v4627
    %v4646 = vmul.f32 %v4630, %v4630
    %v4647 = vmul.f32 %v4631, %v4631
    %v4648 = vmul.f32 %v4632, %v4632
    %v4649 = vmul.f32 %v4633, %v4633
    %v4650 = vmul.f32 %v4634, %v4634
    %v4651 = vmul.f32 %v4635, %v4635
    %v4652 = vmul.f32 %v4636, %v4636
    %v4653 = vmul.f32 %v4637, %v4637
    %v4654 = vmul.f32 %v4638, %v4638
    %v4655 = vmul.f32 %v4639, %v4639
    %v4656 = vmul.f32 %v4640, %v4640
    %v4657 = vmul.f32 %v4641, %v4641
    %v4658 = vmul.f32 %v4642, %v4642
    %v4659 = vmul.f32 %v4643, %v4643
    %v4660 = vmul.f32 %v4644, %v4644
    %v4661 = vmul.f32 %v4645, %v4645
    %v4662 = vadd.f32 %v4646, %v4647
    %v4663 = vadd.f32 %v4662, %v4648
    %v4664 = vadd.f32 %v4663, %v4649
    %v4665 = vadd.f32 %v4664, %v4650
    %v4666 = vadd.f32 %v4665, %v4651
    %v4667 = vadd.f32 %v4666, %v4652
    %v4668 = vadd.f32 %v4667, %v4653
    %v4669 = vrot.slane %v4668, 4
    %v4670 = vadd.f32 %v4668, %v4669
    %v4671 = vrot.slane %v4670, 2
    %v4672 = vadd.f32 %v4670, %v4671
    %v4673 = vrot.slane %v4672, 1
    %v4674 = vadd.f32 %v4672, %v4673
    %v4675 = vadd.f32 %v4654, %v4655
    %v4676 = vadd.f32 %v4675, %v4656
    %v4677 = vadd.f32 %v4676, %v4657
    %v4678 = vadd.f32 %v4677, %v4658
    %v4679 = vadd.f32 %v4678, %v4659
    %v4680 = vadd.f32 %v4679, %v4660
    %v4681 = vadd.f32 %v4680, %v4661
    %v4682 = vrot.slane %v4681, 4
    %v4683 = vadd.f32 %v4681, %v4682
    %v4684 = vrot.slane %v4683, 2
    %v4685 = vadd.f32 %v4683, %v4684
    %v4686 = vrot.slane %v4685, 1
    %v4687 = vadd.f32 %v4685, %v4686
    %v4690 = vsel %vm4449, %v4687, %v4674
    %4692 = vmatprep.subr.mxu0 0.0
    %4693 = vmatpush1.msra.mxu0 %v4384
    %4694 = vmatprep.subr.mxu0 0.0
    %4695 = vmatpush1.msra.mxu0 %v4385
    %4696 = vmatprep.subr.mxu0 0.0
    %4697 = vmatpush1.msra.mxu0 %v4386
    %4698 = vmatprep.subr.mxu0 0.0
    %4699 = vmatpush1.msra.mxu0 %v4387
    %4700 = vmatprep.subr.mxu0 0.0
    %4701 = vmatpush1.msra.mxu0 %v4388
    %4702 = vmatprep.subr.mxu0 0.0
    %4703 = vmatpush1.msra.mxu0 %v4389
    %4704 = vmatprep.subr.mxu0 0.0
    %4705 = vmatpush1.msra.mxu0 %v4390
    %4706 = vmatprep.subr.mxu0 0.0
    %4707 = vmatpush1.msra.mxu0 %v4391
    %4708 = vmatprep.subr.mxu0 0.0
    %4709 = vmatpush1.msra.mxu0 %v4392
    %4710 = vmatprep.subr.mxu0 0.0
    %4711 = vmatpush1.msra.mxu0 %v4393
    %4712 = vmatprep.subr.mxu0 0.0
    %4713 = vmatpush1.msra.mxu0 %v4394
    %4714 = vmatprep.subr.mxu0 0.0
    %4715 = vmatpush1.msra.mxu0 %v4395
    %4716 = vmatprep.subr.mxu0 0.0
    %4717 = vmatpush1.msra.mxu0 %v4396
    %4718 = vmatprep.subr.mxu0 0.0
    %4719 = vmatpush1.msra.mxu0 %v4397
    %4720 = vmatprep.subr.mxu0 0.0
    %4721 = vmatpush1.msra.mxu0 %v4398
    %4722 = vmatprep.subr.mxu0 0.0
    %4723 = vmatpush1.msra.mxu0 %v4399
    %4724 = vmatprep.subr.mxu0 0.0
    %4725 = vmatpush1.msra.mxu0 0.0
    %4726 = vmatprep.subr.mxu0 0.0
    %4727 = vmatpush1.msra.mxu0 0.0
    %4728 = vmatprep.subr.mxu0 0.0
    %4729 = vmatpush1.msra.mxu0 0.0
    %4730 = vmatprep.subr.mxu0 0.0
    %4731 = vmatpush1.msra.mxu0 0.0
    %4732 = vmatprep.subr.mxu0 0.0
    %4733 = vmatpush1.msra.mxu0 0.0
    %4734 = vmatprep.subr.mxu0 0.0
    %4735 = vmatpush1.msra.mxu0 0.0
    %4736 = vmatprep.subr.mxu0 0.0
    %4737 = vmatpush1.msra.mxu0 0.0
    %4738 = vmatprep.subr.mxu0 0.0
    %4739 = vmatpush1.msra.mxu0 0.0
    %4740 = vmatprep.subr.mxu0 0.0
    %4741 = vmatpush1.msra.mxu0 0.0
    %4742 = vmatprep.subr.mxu0 0.0
    %4743 = vmatpush1.msra.mxu0 0.0
    %4744 = vmatprep.subr.mxu0 0.0
    %4745 = vmatpush1.msra.mxu0 0.0
    %4746 = vmatprep.subr.mxu0 0.0
    %4747 = vmatpush1.msra.mxu0 0.0
    %4748 = vmatprep.subr.mxu0 0.0
    %4749 = vmatpush1.msra.mxu0 0.0
    %4750 = vmatprep.subr.mxu0 0.0
    %4751 = vmatpush1.msra.mxu0 0.0
    %4752 = vmatprep.subr.mxu0 0.0
    %4753 = vmatpush1.msra.mxu0 0.0
    %4754 = vmatprep.subr.mxu0 0.0
    %4755 = vmatpush1.msra.mxu0 0.0
    %4756 = vmatprep.mubr.f32.mxu0 0.0
    %4757 = vmatmul.mubr.f32.gmra.mrb[0].mxu0 %v4690
    %v4758 = vpop.f32.mrb[0].mxu0
    %v4759 = vadd.f32 0.0, %v4758
    %v4760 = vpop.f32.mrb[0].mxu0
    %4761 = vdwg.mxu0
    %v4762 = vmul.f32 %v4759, 0.0009765625
    %v4763 = vadd.f32 %v4762, 1e-05
    %v4764 = vrsqrt.pop %v4763
    %v4766 = vsel %vm4523, %v4764, 0
    %4768 = vmatprep.subr.mxu0 0.0
    %4769 = vmatpush1.msra.mxu0 %v4400
    %4770 = vmatprep.subr.mxu0 0.0
    %4771 = vmatpush1.msra.mxu0 0.0
    %4772 = vmatprep.subr.mxu0 0.0
    %4773 = vmatpush1.msra.mxu0 0.0
    %4774 = vmatprep.subr.mxu0 0.0
    %4775 = vmatpush1.msra.mxu0 0.0
    %4776 = vmatprep.subr.mxu0 0.0
    %4777 = vmatpush1.msra.mxu0 0.0
    %4778 = vmatprep.subr.mxu0 0.0
    %4779 = vmatpush1.msra.mxu0 0.0
    %4780 = vmatprep.subr.mxu0 0.0
    %4781 = vmatpush1.msra.mxu0 0.0
    %4782 = vmatprep.subr.mxu0 0.0
    %4783 = vmatpush1.msra.mxu0 0.0
    %4784 = vmatprep.subr.mxu0 0.0
    %4785 = vmatpush1.msra.mxu0 0.0
    %4786 = vmatprep.subr.mxu0 0.0
    %4787 = vmatpush1.msra.mxu0 0.0
    %4788 = vmatprep.subr.mxu0 0.0
    %4789 = vmatpush1.msra.mxu0 0.0
    %4790 = vmatprep.subr.mxu0 0.0
    %4791 = vmatpush1.msra.mxu0 0.0
    %4792 = vmatprep.subr.mxu0 0.0
    %4793 = vmatpush1.msra.mxu0 0.0
    %4794 = vmatprep.subr.mxu0 0.0
    %4795 = vmatpush1.msra.mxu0 0.0
    %4796 = vmatprep.subr.mxu0 0.0
    %4797 = vmatpush1.msra.mxu0 0.0
    %4798 = vmatprep.subr.mxu0 0.0
    %4799 = vmatpush1.msra.mxu0 0.0
    %4800 = vmatprep.subr.mxu0 0.0
    %4801 = vmatpush1.msra.mxu0 0.0
    %4802 = vmatprep.subr.mxu0 0.0
    %4803 = vmatpush1.msra.mxu0 0.0
    %4804 = vmatprep.subr.mxu0 0.0
    %4805 = vmatpush1.msra.mxu0 0.0
    %4806 = vmatprep.subr.mxu0 0.0
    %4807 = vmatpush1.msra.mxu0 0.0
    %4808 = vmatprep.subr.mxu0 0.0
    %4809 = vmatpush1.msra.mxu0 0.0
    %4810 = vmatprep.subr.mxu0 0.0
    %4811 = vmatpush1.msra.mxu0 0.0
    %4812 = vmatprep.subr.mxu0 0.0
    %4813 = vmatpush1.msra.mxu0 0.0
    %4814 = vmatprep.subr.mxu0 0.0
    %4815 = vmatpush1.msra.mxu0 0.0
    %4816 = vmatprep.subr.mxu0 0.0
    %4817 = vmatpush1.msra.mxu0 0.0
    %4818 = vmatprep.subr.mxu0 0.0
    %4819 = vmatpush1.msra.mxu0 0.0
    %4820 = vmatprep.subr.mxu0 0.0
    %4821 = vmatpush1.msra.mxu0 0.0
    %4822 = vmatprep.subr.mxu0 0.0
    %4823 = vmatpush1.msra.mxu0 0.0
    %4824 = vmatprep.subr.mxu0 0.0
    %4825 = vmatpush1.msra.mxu0 0.0
    %4826 = vmatprep.subr.mxu0 0.0
    %4827 = vmatpush1.msra.mxu0 0.0
    %4828 = vmatprep.subr.mxu0 0.0
    %4829 = vmatpush1.msra.mxu0 0.0
    %4830 = vmatprep.subr.mxu0 0.0
    %4831 = vmatpush1.msra.mxu0 0.0
    %4832 = vmatprep.mubr.f32.mxu0 0.0
    %4833 = vmatmul.mubr.f32.gmra.mrb[0].mxu0 %v4766
    %v4834 = vpop.f32.mrb[0].mxu0
    %v4835 = vadd.f32 0.0, %v4834
    %v4836 = vpop.f32.mrb[0].mxu0
    %4837 = vdwg.mxu0
    %v4840 = vunpack.c.l.s4 1966171168
    %v4841 = vunpack.c.0.s8 %v4840
    %v4842 = vlaneseq
    %v4843 = vshrl.u32 %v4842, 7
    %v4844 = vsub.s32 %v4841, %v4843
    %v4845 = vrot.slane %v4835, %v4844
    %v4846 = vcombine.high %v4845, %v4845
    %v4848 = vunpack.c.l.s4 1966171168
    %v4849 = vunpack.c.0.s8 %v4848
    %v4850 = vlaneseq
    %v4851 = vshrl.u32 %v4850, 7
    %v4852 = vsub.s32 %v4849, %v4851
    %v4853 = vrot.slane %v4845, %v4852
    %v4855 = vunpack.c.l.s4 1966171168
    %v4856 = vunpack.c.0.s8 %v4855
    %v4857 = vlaneseq
    %v4858 = vshrl.u32 %v4857, 7
    %v4859 = vsub.s32 %v4856, %v4858
    %v4860 = vrot.slane %v4846, %v4859
    %v4863 = vmul.f32 %v4853, %v4382
    %v4864 = vmul.f32 %v4860, %v4382
    %v4867 = vlaneseq
    %v4868 = vshrl.u32 %v4867, 7
    %v4869 = vsub.s32 0, %v4868
    %v4870 = vrot.slane %v4863, %v4869
    %v4871 = vlaneseq
    %v4872 = vshrl.u32 %v4871, 7
    %v4873 = vsub.s32 0, %v4872
    %v4874 = vrot.slane %v4864, %v4873
    %v4877 = vmul.f32 %v4630, %v4870
    %v4878 = vmul.f32 %v4631, %v4870
    %v4879 = vmul.f32 %v4632, %v4870
    %v4880 = vmul.f32 %v4633, %v4870
    %v4881 = vmul.f32 %v4634, %v4870
    %v4882 = vmul.f32 %v4635, %v4870
    %v4883 = vmul.f32 %v4636, %v4870
    %v4884 = vmul.f32 %v4637, %v4870
    %v4885 = vmul.f32 %v4638, %v4874
    %v4886 = vmul.f32 %v4639, %v4874
    %v4887 = vmul.f32 %v4640, %v4874
    %v4888 = vmul.f32 %v4641, %v4874
    %v4889 = vmul.f32 %v4642, %v4874
    %v4890 = vmul.f32 %v4643, %v4874
    %v4891 = vmul.f32 %v4644, %v4874
    %v4892 = vmul.f32 %v4645, %v4874
    %v4893 = vlaneseq
    %v4894 = vshrl.u32 %v4893, 7
    %v4895 = vsub.s32 0, %v4894
    %v4896 = vrot.slane %v4383, %v4895
    %v4897 = vadd.f32 %v4877, %v4896
    %v4898 = vadd.f32 %v4878, %v4896
    %v4899 = vadd.f32 %v4879, %v4896
    %v4900 = vadd.f32 %v4880, %v4896
    %v4901 = vadd.f32 %v4881, %v4896
    %v4902 = vadd.f32 %v4882, %v4896
    %v4903 = vadd.f32 %v4883, %v4896
    %v4904 = vadd.f32 %v4884, %v4896
    %v4905 = vadd.f32 %v4885, %v4896
    %v4906 = vadd.f32 %v4886, %v4896
    %v4907 = vadd.f32 %v4887, %v4896
    %v4908 = vadd.f32 %v4888, %v4896
    %v4909 = vadd.f32 %v4889, %v4896
    %v4910 = vadd.f32 %v4890, %v4896
    %v4911 = vadd.f32 %v4891, %v4896
    %v4912 = vadd.f32 %v4892, %v4896
    %v4913 = vadd.f32 %v4897, %v4327
    %v4914 = vadd.f32 %v4898, %v4329
    %v4915 = vadd.f32 %v4899, %v4332
    %v4916 = vadd.f32 %v4900, %v4334
    %v4917 = vadd.f32 %v4901, %v4337
    %v4918 = vadd.f32 %v4902, %v4339
    %v4919 = vadd.f32 %v4903, %v4342
    %v4920 = vadd.f32 %v4904, %v4344
    %v4921 = vadd.f32 %v4905, %v4347
    %v4922 = vadd.f32 %v4906, %v4349
    %v4923 = vadd.f32 %v4907, %v4352
    %v4924 = vadd.f32 %v4908, %v4354
    %v4925 = vadd.f32 %v4909, %v4357
    %v4926 = vadd.f32 %v4910, %v4359
    %v4927 = vadd.f32 %v4911, %v4362
    %v4928 = vadd.f32 %v4912, %v4364
    %vm4929 = vcmp.ge.f32.partialorder %v4913, 0.0
    %vm4930 = vcmp.ge.f32.partialorder %v4914, 0.0
    %vm4931 = vcmp.ge.f32.partialorder %v4915, 0.0
    %vm4932 = vcmp.ge.f32.partialorder %v4916, 0.0
    %vm4933 = vcmp.ge.f32.partialorder %v4917, 0.0
    %vm4934 = vcmp.ge.f32.partialorder %v4918, 0.0
    %vm4935 = vcmp.ge.f32.partialorder %v4919, 0.0
    %vm4936 = vcmp.ge.f32.partialorder %v4920, 0.0
    %vm4937 = vcmp.ge.f32.partialorder %v4921, 0.0
    %vm4938 = vcmp.ge.f32.partialorder %v4922, 0.0
    %vm4939 = vcmp.ge.f32.partialorder %v4923, 0.0
    %vm4940 = vcmp.ge.f32.partialorder %v4924, 0.0
    %vm4941 = vcmp.ge.f32.partialorder %v4925, 0.0
    %vm4942 = vcmp.ge.f32.partialorder %v4926, 0.0
    %vm4943 = vcmp.ge.f32.partialorder %v4927, 0.0
    %vm4944 = vcmp.ge.f32.partialorder %v4928, 0.0
    %v4945 = vmul.f32 %v4913, 0.2
    %v4946 = vmul.f32 %v4914, 0.2
    %v4947 = vmul.f32 %v4915, 0.2
    %v4948 = vmul.f32 %v4916, 0.2
    %v4949 = vmul.f32 %v4917, 0.2
    %v4950 = vmul.f32 %v4918, 0.2
    %v4951 = vmul.f32 %v4919, 0.2
    %v4952 = vmul.f32 %v4920, 0.2
    %v4953 = vmul.f32 %v4921, 0.2
    %v4954 = vmul.f32 %v4922, 0.2
    %v4955 = vmul.f32 %v4923, 0.2
    %v4956 = vmul.f32 %v4924, 0.2
    %v4957 = vmul.f32 %v4925, 0.2
    %v4958 = vmul.f32 %v4926, 0.2
    %v4959 = vmul.f32 %v4927, 0.2
    %v4960 = vmul.f32 %v4928, 0.2
    %v4961 = vsel %vm4929, %v4913, %v4945
    %v4962 = vsel %vm4930, %v4914, %v4946
    %v4963 = vsel %vm4931, %v4915, %v4947
    %v4964 = vsel %vm4932, %v4916, %v4948
    %v4965 = vsel %vm4933, %v4917, %v4949
    %v4966 = vsel %vm4934, %v4918, %v4950
    %v4967 = vsel %vm4935, %v4919, %v4951
    %v4968 = vsel %vm4936, %v4920, %v4952
    %v4969 = vsel %vm4937, %v4921, %v4953
    %v4970 = vsel %vm4938, %v4922, %v4954
    %v4971 = vsel %vm4939, %v4923, %v4955
    %v4972 = vsel %vm4940, %v4924, %v4956
    %v4973 = vsel %vm4941, %v4925, %v4957
    %v4974 = vsel %vm4942, %v4926, %v4958
    %v4975 = vsel %vm4943, %v4927, %v4959
    %v4976 = vsel %vm4944, %v4928, %v4960
    %4977 = vst [vmem:[#allocation7] sm:$0xff] %v4961
    %4978 = vst [vmem:[#allocation7 + $0x8] sm:$0xff] %v4962
    %4979 = vst [vmem:[#allocation7 + $0x10] sm:$0xff] %v4963
    %4980 = vst [vmem:[#allocation7 + $0x18] sm:$0xff] %v4964
    %4981 = vst [vmem:[#allocation7 + $0x20] sm:$0xff] %v4965
    %4982 = vst [vmem:[#allocation7 + $0x28] sm:$0xff] %v4966
    %4983 = vst [vmem:[#allocation7 + $0x30] sm:$0xff] %v4967
    %4984 = vst [vmem:[#allocation7 + $0x38] sm:$0xff] %v4968
    %4985 = vst [vmem:[#allocation7 + $0x40] sm:$0xff] %v4969
    %4986 = vst [vmem:[#allocation7 + $0x48] sm:$0xff] %v4970
    %4987 = vst [vmem:[#allocation7 + $0x50] sm:$0xff] %v4971
    %4988 = vst [vmem:[#allocation7 + $0x58] sm:$0xff] %v4972
    %4989 = vst [vmem:[#allocation7 + $0x60] sm:$0xff] %v4973
    %4990 = vst [vmem:[#allocation7 + $0x68] sm:$0xff] %v4974
    %4991 = vst [vmem:[#allocation7 + $0x70] sm:$0xff] %v4975
    %4992 = vst [vmem:[#allocation7 + $0x78] sm:$0xff] %v4976
    // Predicated region
    $region30: #{tpu_custom_call.1} parent=1 // pred_check
      _
    $region31: #{tpu_custom_call.1} parent=1 // pred_check_branch
      %4994 = sbr.rel (0) target = $region33
    $region32: #{tpu_custom_call.1} parent=1 // pred_region
      %s4996 = ssub.s32 2048, 2048
      %4997 = vsyncadd [#allocation4], %s4996
      %s4998 = sshll.u32 [#allocation7], 4
      %s4999 = int_to_ptr.vmem [resolvable:$true] %s4998
      %5004 = dma.vmem_to_hbm [thread:$0]  %s4999, 2048, %s5, [#allocation4], 128, 128, 8
    $region33: #{tpu_custom_call.1} parent=1 // pred_fallthru
      _
    // Predicated region
    $region34: #{tpu_custom_call.1} parent=1 // pred_check
      _
    $region35: #{tpu_custom_call.1} parent=1 // pred_check_branch
      %5006 = sbr.rel (0) target = $region37
    $region36: #{tpu_custom_call.1} parent=1 // pred_region
      %5007 = dma.done [#allocation4], 2048
    $region37: #{tpu_custom_call.1} parent=1 // pred_fallthru
      _
    %5008 = vsyncpa [#allocation3], 1
    %5009 = vsyncpa [#allocation6], 1
    %5010 = vsyncpa [#allocation4], 1

</llo_original>
